<compile_context>
chip_gen: v5e
topology: v5e:2x2
jax: 0.10.0
libtpu: 0.0.40
codegen_flags: <defaults>
</compile_context>

<pallas_src>
import jax
import jax.numpy as jnp
from jax.experimental import pallas as pl
from jax.experimental.pallas import tpu as pltpu

MIN_VAL = 0.0   # `self.min` in the PyTorch module (module-level `min = 0`)
K = 3           # conv1 kernel size


def conv_chain_kernel(w1_ref, b1_ref, w2_ref, b2_ref, xp_ref, out_ref):
    # w1_ref : SMEM f32[Cout*Cin*3*3]   flattened 3x3 conv weights (OIHW order)
    # b1_ref : SMEM f32[Cout]
    # w2_ref : SMEM f32[Cout*Cin]       flattened 1x1 conv weights
    # b2_ref : SMEM f32[Cout]
    # xp_ref : VMEM f32[1, Cin, H+2, W+2]  halo-padded input image (one batch)
    # out_ref: VMEM f32[1, Cout, H, W]     true-shape output (no crop needed)
    _, cout, H, W = out_ref.shape
    cin = xp_ref.shape[1]

    # ---- conv1 (3x3, pad=1): stream the 27 shifted taps ----------------
    # Each tap is loaded once and folded into all `cout` accumulators right
    # away, so only (cout accumulators + current tap) stay live -> no spills.
    acc1 = [jnp.zeros((H, W), jnp.float32) for _ in range(cout)]
    for ci in range(cin):
        for kh in range(K):
            for kw in range(K):
                tap = xp_ref[0, ci, pl.ds(kh, H), pl.ds(kw, W)]
                for co in range(cout):
                    widx = ((co * cin + ci) * K + kh) * K + kw
                    acc1[co] = acc1[co] + w1_ref[widx] * tap

    # ---- clamp_min + conv2 (1x1), fused ---------------------------------
    # Each clamped channel v2[ci] is consumed immediately by all conv2
    # accumulators, so it never has to stay live past its ci iteration.
    acc2 = [None] * cout
    for ci in range(cin):
        v2 = jnp.maximum(acc1[ci] + b1_ref[ci], MIN_VAL)
        for co in range(cout):
            term = w2_ref[co * cin + ci] * v2
            acc2[co] = term if acc2[co] is None else acc2[co] + term

    for co in range(cout):
        out_ref[0, co, :, :] = acc2[co] + b2_ref[co]


def model_forward(x_nchw, w1, b1, w2, b2):
    """x_nchw: (N, C, H, W) f32; w1: (C, C, 3, 3); w2: (C, C, 1, 1)."""
    N, C, H, W = x_nchw.shape

    # Tiny halo pad for conv1's padding=1.  allow_input_fusion lets XLA fuse
    # this pad into the pallas_call input instead of a separate HBM round trip.
    xp = jnp.pad(x_nchw, ((0, 0), (0, 0), (1, 1), (1, 1)))

    return pl.pallas_call(
        conv_chain_kernel,
        out_shape=jax.ShapeDtypeStruct((N, C, H, W), jnp.float32),
        grid=(N,),
        in_specs=[
            pl.BlockSpec(memory_space=pltpu.MemorySpace.SMEM),   # w1 (flat)
            pl.BlockSpec(memory_space=pltpu.MemorySpace.SMEM),   # b1
            pl.BlockSpec(memory_space=pltpu.MemorySpace.SMEM),   # w2 (flat)
            pl.BlockSpec(memory_space=pltpu.MemorySpace.SMEM),   # b2
            pl.BlockSpec((1, C, H + 2, W + 2), lambda n: (n, 0, 0, 0)),
        ],
        out_specs=pl.BlockSpec((1, C, H, W), lambda n: (n, 0, 0, 0)),
        compiler_params=pltpu.CompilerParams(
            dimension_semantics=("parallel",),
            allow_input_fusion=[False, False, False, False, True],
        ),
    )(w1.reshape(-1), b1, w2.reshape(-1), b2, xp)


def reference_forward(x, w1, b1, w2, b2):
    """Pure-JAX reference (NCHW conv) for correctness check."""
    dn = jax.lax.conv_dimension_numbers(x.shape, w1.shape,
                                        ("NCHW", "OIHW", "NCHW"))
    v1 = jax.lax.conv_general_dilated(x, w1, (1, 1), ((1, 1), (1, 1)),
                                      dimension_numbers=dn)
    v1 = v1 + b1.reshape(1, -1, 1, 1)
    v2 = jnp.maximum(v1, MIN_VAL)
    v3 = jax.lax.conv_general_dilated(v2, w2, (1, 1), ((0, 0), (0, 0)),
                                      dimension_numbers=dn)
    return v3 + b2.reshape(1, -1, 1, 1)


if __name__ == "__main__":
    key = jax.random.PRNGKey(0)
    kx, k1, kb1, k2, kb2 = jax.random.split(key, 5)

    # Input shape matches the PyTorch script: (1, 3, 64, 64)
    x = jax.random.normal(kx, (1, 3, 64, 64), dtype=jnp.float32)

    # Deterministic parameter init (shapes from nn.Conv2d definitions).
    fan1 = 3 * 3 * 3
    w1 = jax.random.uniform(k1, (3, 3, 3, 3), jnp.float32,
                            -1.0 / jnp.sqrt(fan1), 1.0 / jnp.sqrt(fan1))
    b1 = jax.random.uniform(kb1, (3,), jnp.float32,
                            -1.0 / jnp.sqrt(fan1), 1.0 / jnp.sqrt(fan1))
    fan2 = 3 * 1 * 1
    w2 = jax.random.uniform(k2, (3, 3, 1, 1), jnp.float32,
                            -1.0 / jnp.sqrt(fan2), 1.0 / jnp.sqrt(fan2))
    b2 = jax.random.uniform(kb2, (3,), jnp.float32,
                            -1.0 / jnp.sqrt(fan2), 1.0 / jnp.sqrt(fan2))

    out = model_forward(x, w1, b1, w2, b2)
    out = jax.block_until_ready(out)

    ref = reference_forward(x, w1, b1, w2, b2)
    assert out.shape == ref.shape == (1, 3, 64, 64)
    assert jnp.allclose(out, ref, atol=1e-5, rtol=1e-5)

    print("KERNEL_OK")
</pallas_src>

<mosaic_0001>
module attributes {stable_mosaic.version = 11 : i64} {
  func.func @conv_chain_kernel(%arg0: i32, %arg1: memref<81xf32, #tpu.memory_space<smem>>, %arg2: memref<3xf32, #tpu.memory_space<smem>>, %arg3: memref<9xf32, #tpu.memory_space<smem>>, %arg4: memref<3xf32, #tpu.memory_space<smem>>, %arg5: memref<1x3x66x66xf32, #tpu.memory_space<vmem>>, %arg6: memref<1x3x64x64xf32, #tpu.memory_space<vmem>>) attributes {dimension_semantics = [#tpu.dimension_semantics<parallel>], iteration_bounds = array<i64: 1>, scalar_prefetch = 0 : i64, scratch_operands = 0 : i64, tpu.core_type = #tpu.core_type<tc>, window_params = [{transform_indices = @transform_0, window_bounds = array<i64: 81>}, {transform_indices = @transform_1, window_bounds = array<i64: 3>}, {transform_indices = @transform_2, window_bounds = array<i64: 9>}, {transform_indices = @transform_3, window_bounds = array<i64: 3>}, {transform_indices = @transform_4, window_bounds = array<i64: 1, 3, 66, 66>}, {transform_indices = @transform_5, window_bounds = array<i64: 1, 3, 64, 64>}]} {
    %cst = arith.constant 0.000000e+00 : f32
    %0 = vector.broadcast %cst : f32 to vector<64x64xf32>
    %cst_0 = arith.constant 0.000000e+00 : f32
    %1 = vector.broadcast %cst_0 : f32 to vector<64x64xf32>
    %cst_1 = arith.constant 0.000000e+00 : f32
    %2 = vector.broadcast %cst_1 : f32 to vector<64x64xf32>
    %c0 = arith.constant 0 : index
    %c0_2 = arith.constant 0 : index
    %c0_3 = arith.constant 0 : index
    %c0_4 = arith.constant 0 : index
    %3 = vector.load %arg5[%c0, %c0_2, %c0_3, %c0_4] : memref<1x3x66x66xf32, #tpu.memory_space<vmem>>, vector<1x1x64x64xf32>
    %4 = vector.shape_cast %3 : vector<1x1x64x64xf32> to vector<64x64xf32>
    %c0_5 = arith.constant 0 : index
    %5 = memref.load %arg1[%c0_5] : memref<81xf32, #tpu.memory_space<smem>>
    %6 = vector.broadcast %5 : f32 to vector<64x64xf32>
    %7 = arith.mulf %6, %4 : vector<64x64xf32>
    %8 = arith.addf %0, %7 : vector<64x64xf32>
    %c27 = arith.constant 27 : index
    %9 = memref.load %arg1[%c27] : memref<81xf32, #tpu.memory_space<smem>>
    %10 = vector.broadcast %9 : f32 to vector<64x64xf32>
    %11 = arith.mulf %10, %4 : vector<64x64xf32>
    %12 = arith.addf %1, %11 : vector<64x64xf32>
    %c54 = arith.constant 54 : index
    %13 = memref.load %arg1[%c54] : memref<81xf32, #tpu.memory_space<smem>>
    %14 = vector.broadcast %13 : f32 to vector<64x64xf32>
    %15 = arith.mulf %14, %4 : vector<64x64xf32>
    %16 = arith.addf %2, %15 : vector<64x64xf32>
    %c0_6 = arith.constant 0 : index
    %c0_7 = arith.constant 0 : index
    %c0_8 = arith.constant 0 : index
    %c1 = arith.constant 1 : index
    %17 = vector.load %arg5[%c0_6, %c0_7, %c0_8, %c1] : memref<1x3x66x66xf32, #tpu.memory_space<vmem>>, vector<1x1x64x64xf32>
    %18 = vector.shape_cast %17 : vector<1x1x64x64xf32> to vector<64x64xf32>
    %c1_9 = arith.constant 1 : index
    %19 = memref.load %arg1[%c1_9] : memref<81xf32, #tpu.memory_space<smem>>
    %20 = vector.broadcast %19 : f32 to vector<64x64xf32>
    %21 = arith.mulf %20, %18 : vector<64x64xf32>
    %22 = arith.addf %8, %21 : vector<64x64xf32>
    %c28 = arith.constant 28 : index
    %23 = memref.load %arg1[%c28] : memref<81xf32, #tpu.memory_space<smem>>
    %24 = vector.broadcast %23 : f32 to vector<64x64xf32>
    %25 = arith.mulf %24, %18 : vector<64x64xf32>
    %26 = arith.addf %12, %25 : vector<64x64xf32>
    %c55 = arith.constant 55 : index
    %27 = memref.load %arg1[%c55] : memref<81xf32, #tpu.memory_space<smem>>
    %28 = vector.broadcast %27 : f32 to vector<64x64xf32>
    %29 = arith.mulf %28, %18 : vector<64x64xf32>
    %30 = arith.addf %16, %29 : vector<64x64xf32>
    %c0_10 = arith.constant 0 : index
    %c0_11 = arith.constant 0 : index
    %c0_12 = arith.constant 0 : index
    %c2 = arith.constant 2 : index
    %31 = vector.load %arg5[%c0_10, %c0_11, %c0_12, %c2] : memref<1x3x66x66xf32, #tpu.memory_space<vmem>>, vector<1x1x64x64xf32>
    %32 = vector.shape_cast %31 : vector<1x1x64x64xf32> to vector<64x64xf32>
    %c2_13 = arith.constant 2 : index
    %33 = memref.load %arg1[%c2_13] : memref<81xf32, #tpu.memory_space<smem>>
    %34 = vector.broadcast %33 : f32 to vector<64x64xf32>
    %35 = arith.mulf %34, %32 : vector<64x64xf32>
    %36 = arith.addf %22, %35 : vector<64x64xf32>
    %c29 = arith.constant 29 : index
    %37 = memref.load %arg1[%c29] : memref<81xf32, #tpu.memory_space<smem>>
    %38 = vector.broadcast %37 : f32 to vector<64x64xf32>
    %39 = arith.mulf %38, %32 : vector<64x64xf32>
    %40 = arith.addf %26, %39 : vector<64x64xf32>
    %c56 = arith.constant 56 : index
    %41 = memref.load %arg1[%c56] : memref<81xf32, #tpu.memory_space<smem>>
    %42 = vector.broadcast %41 : f32 to vector<64x64xf32>
    %43 = arith.mulf %42, %32 : vector<64x64xf32>
    %44 = arith.addf %30, %43 : vector<64x64xf32>
    %c0_14 = arith.constant 0 : index
    %c0_15 = arith.constant 0 : index
    %c1_16 = arith.constant 1 : index
    %c0_17 = arith.constant 0 : index
    %45 = vector.load %arg5[%c0_14, %c0_15, %c1_16, %c0_17] : memref<1x3x66x66xf32, #tpu.memory_space<vmem>>, vector<1x1x64x64xf32>
    %46 = vector.shape_cast %45 : vector<1x1x64x64xf32> to vector<64x64xf32>
    %c3 = arith.constant 3 : index
    %47 = memref.load %arg1[%c3] : memref<81xf32, #tpu.memory_space<smem>>
    %48 = vector.broadcast %47 : f32 to vector<64x64xf32>
    %49 = arith.mulf %48, %46 : vector<64x64xf32>
    %50 = arith.addf %36, %49 : vector<64x64xf32>
    %c30 = arith.constant 30 : index
    %51 = memref.load %arg1[%c30] : memref<81xf32, #tpu.memory_space<smem>>
    %52 = vector.broadcast %51 : f32 to vector<64x64xf32>
    %53 = arith.mulf %52, %46 : vector<64x64xf32>
    %54 = arith.addf %40, %53 : vector<64x64xf32>
    %c57 = arith.constant 57 : index
    %55 = memref.load %arg1[%c57] : memref<81xf32, #tpu.memory_space<smem>>
    %56 = vector.broadcast %55 : f32 to vector<64x64xf32>
    %57 = arith.mulf %56, %46 : vector<64x64xf32>
    %58 = arith.addf %44, %57 : vector<64x64xf32>
    %c0_18 = arith.constant 0 : index
    %c0_19 = arith.constant 0 : index
    %c1_20 = arith.constant 1 : index
    %c1_21 = arith.constant 1 : index
    %59 = vector.load %arg5[%c0_18, %c0_19, %c1_20, %c1_21] : memref<1x3x66x66xf32, #tpu.memory_space<vmem>>, vector<1x1x64x64xf32>
    %60 = vector.shape_cast %59 : vector<1x1x64x64xf32> to vector<64x64xf32>
    %c4 = arith.constant 4 : index
    %61 = memref.load %arg1[%c4] : memref<81xf32, #tpu.memory_space<smem>>
    %62 = vector.broadcast %61 : f32 to vector<64x64xf32>
    %63 = arith.mulf %62, %60 : vector<64x64xf32>
    %64 = arith.addf %50, %63 : vector<64x64xf32>
    %c31 = arith.constant 31 : index
    %65 = memref.load %arg1[%c31] : memref<81xf32, #tpu.memory_space<smem>>
    %66 = vector.broadcast %65 : f32 to vector<64x64xf32>
    %67 = arith.mulf %66, %60 : vector<64x64xf32>
    %68 = arith.addf %54, %67 : vector<64x64xf32>
    %c58 = arith.constant 58 : index
    %69 = memref.load %arg1[%c58] : memref<81xf32, #tpu.memory_space<smem>>
    %70 = vector.broadcast %69 : f32 to vector<64x64xf32>
    %71 = arith.mulf %70, %60 : vector<64x64xf32>
    %72 = arith.addf %58, %71 : vector<64x64xf32>
    %c0_22 = arith.constant 0 : index
    %c0_23 = arith.constant 0 : index
    %c1_24 = arith.constant 1 : index
    %c2_25 = arith.constant 2 : index
    %73 = vector.load %arg5[%c0_22, %c0_23, %c1_24, %c2_25] : memref<1x3x66x66xf32, #tpu.memory_space<vmem>>, vector<1x1x64x64xf32>
    %74 = vector.shape_cast %73 : vector<1x1x64x64xf32> to vector<64x64xf32>
    %c5 = arith.constant 5 : index
    %75 = memref.load %arg1[%c5] : memref<81xf32, #tpu.memory_space<smem>>
    %76 = vector.broadcast %75 : f32 to vector<64x64xf32>
    %77 = arith.mulf %76, %74 : vector<64x64xf32>
    %78 = arith.addf %64, %77 : vector<64x64xf32>
    %c32 = arith.constant 32 : index
    %79 = memref.load %arg1[%c32] : memref<81xf32, #tpu.memory_space<smem>>
    %80 = vector.broadcast %79 : f32 to vector<64x64xf32>
    %81 = arith.mulf %80, %74 : vector<64x64xf32>
    %82 = arith.addf %68, %81 : vector<64x64xf32>
    %c59 = arith.constant 59 : index
    %83 = memref.load %arg1[%c59] : memref<81xf32, #tpu.memory_space<smem>>
    %84 = vector.broadcast %83 : f32 to vector<64x64xf32>
    %85 = arith.mulf %84, %74 : vector<64x64xf32>
    %86 = arith.addf %72, %85 : vector<64x64xf32>
    %c0_26 = arith.constant 0 : index
    %c0_27 = arith.constant 0 : index
    %c2_28 = arith.constant 2 : index
    %c0_29 = arith.constant 0 : index
    %87 = vector.load %arg5[%c0_26, %c0_27, %c2_28, %c0_29] : memref<1x3x66x66xf32, #tpu.memory_space<vmem>>, vector<1x1x64x64xf32>
    %88 = vector.shape_cast %87 : vector<1x1x64x64xf32> to vector<64x64xf32>
    %c6 = arith.constant 6 : index
    %89 = memref.load %arg1[%c6] : memref<81xf32, #tpu.memory_space<smem>>
    %90 = vector.broadcast %89 : f32 to vector<64x64xf32>
    %91 = arith.mulf %90, %88 : vector<64x64xf32>
    %92 = arith.addf %78, %91 : vector<64x64xf32>
    %c33 = arith.constant 33 : index
    %93 = memref.load %arg1[%c33] : memref<81xf32, #tpu.memory_space<smem>>
    %94 = vector.broadcast %93 : f32 to vector<64x64xf32>
    %95 = arith.mulf %94, %88 : vector<64x64xf32>
    %96 = arith.addf %82, %95 : vector<64x64xf32>
    %c60 = arith.constant 60 : index
    %97 = memref.load %arg1[%c60] : memref<81xf32, #tpu.memory_space<smem>>
    %98 = vector.broadcast %97 : f32 to vector<64x64xf32>
    %99 = arith.mulf %98, %88 : vector<64x64xf32>
    %100 = arith.addf %86, %99 : vector<64x64xf32>
    %c0_30 = arith.constant 0 : index
    %c0_31 = arith.constant 0 : index
    %c2_32 = arith.constant 2 : index
    %c1_33 = arith.constant 1 : index
    %101 = vector.load %arg5[%c0_30, %c0_31, %c2_32, %c1_33] : memref<1x3x66x66xf32, #tpu.memory_space<vmem>>, vector<1x1x64x64xf32>
    %102 = vector.shape_cast %101 : vector<1x1x64x64xf32> to vector<64x64xf32>
    %c7 = arith.constant 7 : index
    %103 = memref.load %arg1[%c7] : memref<81xf32, #tpu.memory_space<smem>>
    %104 = vector.broadcast %103 : f32 to vector<64x64xf32>
    %105 = arith.mulf %104, %102 : vector<64x64xf32>
    %106 = arith.addf %92, %105 : vector<64x64xf32>
    %c34 = arith.constant 34 : index
    %107 = memref.load %arg1[%c34] : memref<81xf32, #tpu.memory_space<smem>>
    %108 = vector.broadcast %107 : f32 to vector<64x64xf32>
    %109 = arith.mulf %108, %102 : vector<64x64xf32>
    %110 = arith.addf %96, %109 : vector<64x64xf32>
    %c61 = arith.constant 61 : index
    %111 = memref.load %arg1[%c61] : memref<81xf32, #tpu.memory_space<smem>>
    %112 = vector.broadcast %111 : f32 to vector<64x64xf32>
    %113 = arith.mulf %112, %102 : vector<64x64xf32>
    %114 = arith.addf %100, %113 : vector<64x64xf32>
    %c0_34 = arith.constant 0 : index
    %c0_35 = arith.constant 0 : index
    %c2_36 = arith.constant 2 : index
    %c2_37 = arith.constant 2 : index
    %115 = vector.load %arg5[%c0_34, %c0_35, %c2_36, %c2_37] : memref<1x3x66x66xf32, #tpu.memory_space<vmem>>, vector<1x1x64x64xf32>
    %116 = vector.shape_cast %115 : vector<1x1x64x64xf32> to vector<64x64xf32>
    %c8 = arith.constant 8 : index
    %117 = memref.load %arg1[%c8] : memref<81xf32, #tpu.memory_space<smem>>
    %118 = vector.broadcast %117 : f32 to vector<64x64xf32>
    %119 = arith.mulf %118, %116 : vector<64x64xf32>
    %120 = arith.addf %106, %119 : vector<64x64xf32>
    %c35 = arith.constant 35 : index
    %121 = memref.load %arg1[%c35] : memref<81xf32, #tpu.memory_space<smem>>
    %122 = vector.broadcast %121 : f32 to vector<64x64xf32>
    %123 = arith.mulf %122, %116 : vector<64x64xf32>
    %124 = arith.addf %110, %123 : vector<64x64xf32>
    %c62 = arith.constant 62 : index
    %125 = memref.load %arg1[%c62] : memref<81xf32, #tpu.memory_space<smem>>
    %126 = vector.broadcast %125 : f32 to vector<64x64xf32>
    %127 = arith.mulf %126, %116 : vector<64x64xf32>
    %128 = arith.addf %114, %127 : vector<64x64xf32>
    %c0_38 = arith.constant 0 : index
    %c1_39 = arith.constant 1 : index
    %c0_40 = arith.constant 0 : index
    %c0_41 = arith.constant 0 : index
    %129 = vector.load %arg5[%c0_38, %c1_39, %c0_40, %c0_41] : memref<1x3x66x66xf32, #tpu.memory_space<vmem>>, vector<1x1x64x64xf32>
    %130 = vector.shape_cast %129 : vector<1x1x64x64xf32> to vector<64x64xf32>
    %c9 = arith.constant 9 : index
    %131 = memref.load %arg1[%c9] : memref<81xf32, #tpu.memory_space<smem>>
    %132 = vector.broadcast %131 : f32 to vector<64x64xf32>
    %133 = arith.mulf %132, %130 : vector<64x64xf32>
    %134 = arith.addf %120, %133 : vector<64x64xf32>
    %c36 = arith.constant 36 : index
    %135 = memref.load %arg1[%c36] : memref<81xf32, #tpu.memory_space<smem>>
    %136 = vector.broadcast %135 : f32 to vector<64x64xf32>
    %137 = arith.mulf %136, %130 : vector<64x64xf32>
    %138 = arith.addf %124, %137 : vector<64x64xf32>
    %c63 = arith.constant 63 : index
    %139 = memref.load %arg1[%c63] : memref<81xf32, #tpu.memory_space<smem>>
    %140 = vector.broadcast %139 : f32 to vector<64x64xf32>
    %141 = arith.mulf %140, %130 : vector<64x64xf32>
    %142 = arith.addf %128, %141 : vector<64x64xf32>
    %c0_42 = arith.constant 0 : index
    %c1_43 = arith.constant 1 : index
    %c0_44 = arith.constant 0 : index
    %c1_45 = arith.constant 1 : index
    %143 = vector.load %arg5[%c0_42, %c1_43, %c0_44, %c1_45] : memref<1x3x66x66xf32, #tpu.memory_space<vmem>>, vector<1x1x64x64xf32>
    %144 = vector.shape_cast %143 : vector<1x1x64x64xf32> to vector<64x64xf32>
    %c10 = arith.constant 10 : index
    %145 = memref.load %arg1[%c10] : memref<81xf32, #tpu.memory_space<smem>>
    %146 = vector.broadcast %145 : f32 to vector<64x64xf32>
    %147 = arith.mulf %146, %144 : vector<64x64xf32>
    %148 = arith.addf %134, %147 : vector<64x64xf32>
    %c37 = arith.constant 37 : index
    %149 = memref.load %arg1[%c37] : memref<81xf32, #tpu.memory_space<smem>>
    %150 = vector.broadcast %149 : f32 to vector<64x64xf32>
    %151 = arith.mulf %150, %144 : vector<64x64xf32>
    %152 = arith.addf %138, %151 : vector<64x64xf32>
    %c64 = arith.constant 64 : index
    %153 = memref.load %arg1[%c64] : memref<81xf32, #tpu.memory_space<smem>>
    %154 = vector.broadcast %153 : f32 to vector<64x64xf32>
    %155 = arith.mulf %154, %144 : vector<64x64xf32>
    %156 = arith.addf %142, %155 : vector<64x64xf32>
    %c0_46 = arith.constant 0 : index
    %c1_47 = arith.constant 1 : index
    %c0_48 = arith.constant 0 : index
    %c2_49 = arith.constant 2 : index
    %157 = vector.load %arg5[%c0_46, %c1_47, %c0_48, %c2_49] : memref<1x3x66x66xf32, #tpu.memory_space<vmem>>, vector<1x1x64x64xf32>
    %158 = vector.shape_cast %157 : vector<1x1x64x64xf32> to vector<64x64xf32>
    %c11 = arith.constant 11 : index
    %159 = memref.load %arg1[%c11] : memref<81xf32, #tpu.memory_space<smem>>
    %160 = vector.broadcast %159 : f32 to vector<64x64xf32>
    %161 = arith.mulf %160, %158 : vector<64x64xf32>
    %162 = arith.addf %148, %161 : vector<64x64xf32>
    %c38 = arith.constant 38 : index
    %163 = memref.load %arg1[%c38] : memref<81xf32, #tpu.memory_space<smem>>
    %164 = vector.broadcast %163 : f32 to vector<64x64xf32>
    %165 = arith.mulf %164, %158 : vector<64x64xf32>
    %166 = arith.addf %152, %165 : vector<64x64xf32>
    %c65 = arith.constant 65 : index
    %167 = memref.load %arg1[%c65] : memref<81xf32, #tpu.memory_space<smem>>
    %168 = vector.broadcast %167 : f32 to vector<64x64xf32>
    %169 = arith.mulf %168, %158 : vector<64x64xf32>
    %170 = arith.addf %156, %169 : vector<64x64xf32>
    %c0_50 = arith.constant 0 : index
    %c1_51 = arith.constant 1 : index
    %c1_52 = arith.constant 1 : index
    %c0_53 = arith.constant 0 : index
    %171 = vector.load %arg5[%c0_50, %c1_51, %c1_52, %c0_53] : memref<1x3x66x66xf32, #tpu.memory_space<vmem>>, vector<1x1x64x64xf32>
    %172 = vector.shape_cast %171 : vector<1x1x64x64xf32> to vector<64x64xf32>
    %c12 = arith.constant 12 : index
    %173 = memref.load %arg1[%c12] : memref<81xf32, #tpu.memory_space<smem>>
    %174 = vector.broadcast %173 : f32 to vector<64x64xf32>
    %175 = arith.mulf %174, %172 : vector<64x64xf32>
    %176 = arith.addf %162, %175 : vector<64x64xf32>
    %c39 = arith.constant 39 : index
    %177 = memref.load %arg1[%c39] : memref<81xf32, #tpu.memory_space<smem>>
    %178 = vector.broadcast %177 : f32 to vector<64x64xf32>
    %179 = arith.mulf %178, %172 : vector<64x64xf32>
    %180 = arith.addf %166, %179 : vector<64x64xf32>
    %c66 = arith.constant 66 : index
    %181 = memref.load %arg1[%c66] : memref<81xf32, #tpu.memory_space<smem>>
    %182 = vector.broadcast %181 : f32 to vector<64x64xf32>
    %183 = arith.mulf %182, %172 : vector<64x64xf32>
    %184 = arith.addf %170, %183 : vector<64x64xf32>
    %c0_54 = arith.constant 0 : index
    %c1_55 = arith.constant 1 : index
    %c1_56 = arith.constant 1 : index
    %c1_57 = arith.constant 1 : index
    %185 = vector.load %arg5[%c0_54, %c1_55, %c1_56, %c1_57] : memref<1x3x66x66xf32, #tpu.memory_space<vmem>>, vector<1x1x64x64xf32>
    %186 = vector.shape_cast %185 : vector<1x1x64x64xf32> to vector<64x64xf32>
    %c13 = arith.constant 13 : index
    %187 = memref.load %arg1[%c13] : memref<81xf32, #tpu.memory_space<smem>>
    %188 = vector.broadcast %187 : f32 to vector<64x64xf32>
    %189 = arith.mulf %188, %186 : vector<64x64xf32>
    %190 = arith.addf %176, %189 : vector<64x64xf32>
    %c40 = arith.constant 40 : index
    %191 = memref.load %arg1[%c40] : memref<81xf32, #tpu.memory_space<smem>>
    %192 = vector.broadcast %191 : f32 to vector<64x64xf32>
    %193 = arith.mulf %192, %186 : vector<64x64xf32>
    %194 = arith.addf %180, %193 : vector<64x64xf32>
    %c67 = arith.constant 67 : index
    %195 = memref.load %arg1[%c67] : memref<81xf32, #tpu.memory_space<smem>>
    %196 = vector.broadcast %195 : f32 to vector<64x64xf32>
    %197 = arith.mulf %196, %186 : vector<64x64xf32>
    %198 = arith.addf %184, %197 : vector<64x64xf32>
    %c0_58 = arith.constant 0 : index
    %c1_59 = arith.constant 1 : index
    %c1_60 = arith.constant 1 : index
    %c2_61 = arith.constant 2 : index
    %199 = vector.load %arg5[%c0_58, %c1_59, %c1_60, %c2_61] : memref<1x3x66x66xf32, #tpu.memory_space<vmem>>, vector<1x1x64x64xf32>
    %200 = vector.shape_cast %199 : vector<1x1x64x64xf32> to vector<64x64xf32>
    %c14 = arith.constant 14 : index
    %201 = memref.load %arg1[%c14] : memref<81xf32, #tpu.memory_space<smem>>
    %202 = vector.broadcast %201 : f32 to vector<64x64xf32>
    %203 = arith.mulf %202, %200 : vector<64x64xf32>
    %204 = arith.addf %190, %203 : vector<64x64xf32>
    %c41 = arith.constant 41 : index
    %205 = memref.load %arg1[%c41] : memref<81xf32, #tpu.memory_space<smem>>
    %206 = vector.broadcast %205 : f32 to vector<64x64xf32>
    %207 = arith.mulf %206, %200 : vector<64x64xf32>
    %208 = arith.addf %194, %207 : vector<64x64xf32>
    %c68 = arith.constant 68 : index
    %209 = memref.load %arg1[%c68] : memref<81xf32, #tpu.memory_space<smem>>
    %210 = vector.broadcast %209 : f32 to vector<64x64xf32>
    %211 = arith.mulf %210, %200 : vector<64x64xf32>
    %212 = arith.addf %198, %211 : vector<64x64xf32>
    %c0_62 = arith.constant 0 : index
    %c1_63 = arith.constant 1 : index
    %c2_64 = arith.constant 2 : index
    %c0_65 = arith.constant 0 : index
    %213 = vector.load %arg5[%c0_62, %c1_63, %c2_64, %c0_65] : memref<1x3x66x66xf32, #tpu.memory_space<vmem>>, vector<1x1x64x64xf32>
    %214 = vector.shape_cast %213 : vector<1x1x64x64xf32> to vector<64x64xf32>
    %c15 = arith.constant 15 : index
    %215 = memref.load %arg1[%c15] : memref<81xf32, #tpu.memory_space<smem>>
    %216 = vector.broadcast %215 : f32 to vector<64x64xf32>
    %217 = arith.mulf %216, %214 : vector<64x64xf32>
    %218 = arith.addf %204, %217 : vector<64x64xf32>
    %c42 = arith.constant 42 : index
    %219 = memref.load %arg1[%c42] : memref<81xf32, #tpu.memory_space<smem>>
    %220 = vector.broadcast %219 : f32 to vector<64x64xf32>
    %221 = arith.mulf %220, %214 : vector<64x64xf32>
    %222 = arith.addf %208, %221 : vector<64x64xf32>
    %c69 = arith.constant 69 : index
    %223 = memref.load %arg1[%c69] : memref<81xf32, #tpu.memory_space<smem>>
    %224 = vector.broadcast %223 : f32 to vector<64x64xf32>
    %225 = arith.mulf %224, %214 : vector<64x64xf32>
    %226 = arith.addf %212, %225 : vector<64x64xf32>
    %c0_66 = arith.constant 0 : index
    %c1_67 = arith.constant 1 : index
    %c2_68 = arith.constant 2 : index
    %c1_69 = arith.constant 1 : index
    %227 = vector.load %arg5[%c0_66, %c1_67, %c2_68, %c1_69] : memref<1x3x66x66xf32, #tpu.memory_space<vmem>>, vector<1x1x64x64xf32>
    %228 = vector.shape_cast %227 : vector<1x1x64x64xf32> to vector<64x64xf32>
    %c16 = arith.constant 16 : index
    %229 = memref.load %arg1[%c16] : memref<81xf32, #tpu.memory_space<smem>>
    %230 = vector.broadcast %229 : f32 to vector<64x64xf32>
    %231 = arith.mulf %230, %228 : vector<64x64xf32>
    %232 = arith.addf %218, %231 : vector<64x64xf32>
    %c43 = arith.constant 43 : index
    %233 = memref.load %arg1[%c43] : memref<81xf32, #tpu.memory_space<smem>>
    %234 = vector.broadcast %233 : f32 to vector<64x64xf32>
    %235 = arith.mulf %234, %228 : vector<64x64xf32>
    %236 = arith.addf %222, %235 : vector<64x64xf32>
    %c70 = arith.constant 70 : index
    %237 = memref.load %arg1[%c70] : memref<81xf32, #tpu.memory_space<smem>>
    %238 = vector.broadcast %237 : f32 to vector<64x64xf32>
    %239 = arith.mulf %238, %228 : vector<64x64xf32>
    %240 = arith.addf %226, %239 : vector<64x64xf32>
    %c0_70 = arith.constant 0 : index
    %c1_71 = arith.constant 1 : index
    %c2_72 = arith.constant 2 : index
    %c2_73 = arith.constant 2 : index
    %241 = vector.load %arg5[%c0_70, %c1_71, %c2_72, %c2_73] : memref<1x3x66x66xf32, #tpu.memory_space<vmem>>, vector<1x1x64x64xf32>
    %242 = vector.shape_cast %241 : vector<1x1x64x64xf32> to vector<64x64xf32>
    %c17 = arith.constant 17 : index
    %243 = memref.load %arg1[%c17] : memref<81xf32, #tpu.memory_space<smem>>
    %244 = vector.broadcast %243 : f32 to vector<64x64xf32>
    %245 = arith.mulf %244, %242 : vector<64x64xf32>
    %246 = arith.addf %232, %245 : vector<64x64xf32>
    %c44 = arith.constant 44 : index
    %247 = memref.load %arg1[%c44] : memref<81xf32, #tpu.memory_space<smem>>
    %248 = vector.broadcast %247 : f32 to vector<64x64xf32>
    %249 = arith.mulf %248, %242 : vector<64x64xf32>
    %250 = arith.addf %236, %249 : vector<64x64xf32>
    %c71 = arith.constant 71 : index
    %251 = memref.load %arg1[%c71] : memref<81xf32, #tpu.memory_space<smem>>
    %252 = vector.broadcast %251 : f32 to vector<64x64xf32>
    %253 = arith.mulf %252, %242 : vector<64x64xf32>
    %254 = arith.addf %240, %253 : vector<64x64xf32>
    %c0_74 = arith.constant 0 : index
    %c2_75 = arith.constant 2 : index
    %c0_76 = arith.constant 0 : index
    %c0_77 = arith.constant 0 : index
    %255 = vector.load %arg5[%c0_74, %c2_75, %c0_76, %c0_77] : memref<1x3x66x66xf32, #tpu.memory_space<vmem>>, vector<1x1x64x64xf32>
    %256 = vector.shape_cast %255 : vector<1x1x64x64xf32> to vector<64x64xf32>
    %c18 = arith.constant 18 : index
    %257 = memref.load %arg1[%c18] : memref<81xf32, #tpu.memory_space<smem>>
    %258 = vector.broadcast %257 : f32 to vector<64x64xf32>
    %259 = arith.mulf %258, %256 : vector<64x64xf32>
    %260 = arith.addf %246, %259 : vector<64x64xf32>
    %c45 = arith.constant 45 : index
    %261 = memref.load %arg1[%c45] : memref<81xf32, #tpu.memory_space<smem>>
    %262 = vector.broadcast %261 : f32 to vector<64x64xf32>
    %263 = arith.mulf %262, %256 : vector<64x64xf32>
    %264 = arith.addf %250, %263 : vector<64x64xf32>
    %c72 = arith.constant 72 : index
    %265 = memref.load %arg1[%c72] : memref<81xf32, #tpu.memory_space<smem>>
    %266 = vector.broadcast %265 : f32 to vector<64x64xf32>
    %267 = arith.mulf %266, %256 : vector<64x64xf32>
    %268 = arith.addf %254, %267 : vector<64x64xf32>
    %c0_78 = arith.constant 0 : index
    %c2_79 = arith.constant 2 : index
    %c0_80 = arith.constant 0 : index
    %c1_81 = arith.constant 1 : index
    %269 = vector.load %arg5[%c0_78, %c2_79, %c0_80, %c1_81] : memref<1x3x66x66xf32, #tpu.memory_space<vmem>>, vector<1x1x64x64xf32>
    %270 = vector.shape_cast %269 : vector<1x1x64x64xf32> to vector<64x64xf32>
    %c19 = arith.constant 19 : index
    %271 = memref.load %arg1[%c19] : memref<81xf32, #tpu.memory_space<smem>>
    %272 = vector.broadcast %271 : f32 to vector<64x64xf32>
    %273 = arith.mulf %272, %270 : vector<64x64xf32>
    %274 = arith.addf %260, %273 : vector<64x64xf32>
    %c46 = arith.constant 46 : index
    %275 = memref.load %arg1[%c46] : memref<81xf32, #tpu.memory_space<smem>>
    %276 = vector.broadcast %275 : f32 to vector<64x64xf32>
    %277 = arith.mulf %276, %270 : vector<64x64xf32>
    %278 = arith.addf %264, %277 : vector<64x64xf32>
    %c73 = arith.constant 73 : index
    %279 = memref.load %arg1[%c73] : memref<81xf32, #tpu.memory_space<smem>>
    %280 = vector.broadcast %279 : f32 to vector<64x64xf32>
    %281 = arith.mulf %280, %270 : vector<64x64xf32>
    %282 = arith.addf %268, %281 : vector<64x64xf32>
    %c0_82 = arith.constant 0 : index
    %c2_83 = arith.constant 2 : index
    %c0_84 = arith.constant 0 : index
    %c2_85 = arith.constant 2 : index
    %283 = vector.load %arg5[%c0_82, %c2_83, %c0_84, %c2_85] : memref<1x3x66x66xf32, #tpu.memory_space<vmem>>, vector<1x1x64x64xf32>
    %284 = vector.shape_cast %283 : vector<1x1x64x64xf32> to vector<64x64xf32>
    %c20 = arith.constant 20 : index
    %285 = memref.load %arg1[%c20] : memref<81xf32, #tpu.memory_space<smem>>
    %286 = vector.broadcast %285 : f32 to vector<64x64xf32>
    %287 = arith.mulf %286, %284 : vector<64x64xf32>
    %288 = arith.addf %274, %287 : vector<64x64xf32>
    %c47 = arith.constant 47 : index
    %289 = memref.load %arg1[%c47] : memref<81xf32, #tpu.memory_space<smem>>
    %290 = vector.broadcast %289 : f32 to vector<64x64xf32>
    %291 = arith.mulf %290, %284 : vector<64x64xf32>
    %292 = arith.addf %278, %291 : vector<64x64xf32>
    %c74 = arith.constant 74 : index
    %293 = memref.load %arg1[%c74] : memref<81xf32, #tpu.memory_space<smem>>
    %294 = vector.broadcast %293 : f32 to vector<64x64xf32>
    %295 = arith.mulf %294, %284 : vector<64x64xf32>
    %296 = arith.addf %282, %295 : vector<64x64xf32>
    %c0_86 = arith.constant 0 : index
    %c2_87 = arith.constant 2 : index
    %c1_88 = arith.constant 1 : index
    %c0_89 = arith.constant 0 : index
    %297 = vector.load %arg5[%c0_86, %c2_87, %c1_88, %c0_89] : memref<1x3x66x66xf32, #tpu.memory_space<vmem>>, vector<1x1x64x64xf32>
    %298 = vector.shape_cast %297 : vector<1x1x64x64xf32> to vector<64x64xf32>
    %c21 = arith.constant 21 : index
    %299 = memref.load %arg1[%c21] : memref<81xf32, #tpu.memory_space<smem>>
    %300 = vector.broadcast %299 : f32 to vector<64x64xf32>
    %301 = arith.mulf %300, %298 : vector<64x64xf32>
    %302 = arith.addf %288, %301 : vector<64x64xf32>
    %c48 = arith.constant 48 : index
    %303 = memref.load %arg1[%c48] : memref<81xf32, #tpu.memory_space<smem>>
    %304 = vector.broadcast %303 : f32 to vector<64x64xf32>
    %305 = arith.mulf %304, %298 : vector<64x64xf32>
    %306 = arith.addf %292, %305 : vector<64x64xf32>
    %c75 = arith.constant 75 : index
    %307 = memref.load %arg1[%c75] : memref<81xf32, #tpu.memory_space<smem>>
    %308 = vector.broadcast %307 : f32 to vector<64x64xf32>
    %309 = arith.mulf %308, %298 : vector<64x64xf32>
    %310 = arith.addf %296, %309 : vector<64x64xf32>
    %c0_90 = arith.constant 0 : index
    %c2_91 = arith.constant 2 : index
    %c1_92 = arith.constant 1 : index
    %c1_93 = arith.constant 1 : index
    %311 = vector.load %arg5[%c0_90, %c2_91, %c1_92, %c1_93] : memref<1x3x66x66xf32, #tpu.memory_space<vmem>>, vector<1x1x64x64xf32>
    %312 = vector.shape_cast %311 : vector<1x1x64x64xf32> to vector<64x64xf32>
    %c22 = arith.constant 22 : index
    %313 = memref.load %arg1[%c22] : memref<81xf32, #tpu.memory_space<smem>>
    %314 = vector.broadcast %313 : f32 to vector<64x64xf32>
    %315 = arith.mulf %314, %312 : vector<64x64xf32>
    %316 = arith.addf %302, %315 : vector<64x64xf32>
    %c49 = arith.constant 49 : index
    %317 = memref.load %arg1[%c49] : memref<81xf32, #tpu.memory_space<smem>>
    %318 = vector.broadcast %317 : f32 to vector<64x64xf32>
    %319 = arith.mulf %318, %312 : vector<64x64xf32>
    %320 = arith.addf %306, %319 : vector<64x64xf32>
    %c76 = arith.constant 76 : index
    %321 = memref.load %arg1[%c76] : memref<81xf32, #tpu.memory_space<smem>>
    %322 = vector.broadcast %321 : f32 to vector<64x64xf32>
    %323 = arith.mulf %322, %312 : vector<64x64xf32>
    %324 = arith.addf %310, %323 : vector<64x64xf32>
    %c0_94 = arith.constant 0 : index
    %c2_95 = arith.constant 2 : index
    %c1_96 = arith.constant 1 : index
    %c2_97 = arith.constant 2 : index
    %325 = vector.load %arg5[%c0_94, %c2_95, %c1_96, %c2_97] : memref<1x3x66x66xf32, #tpu.memory_space<vmem>>, vector<1x1x64x64xf32>
    %326 = vector.shape_cast %325 : vector<1x1x64x64xf32> to vector<64x64xf32>
    %c23 = arith.constant 23 : index
    %327 = memref.load %arg1[%c23] : memref<81xf32, #tpu.memory_space<smem>>
    %328 = vector.broadcast %327 : f32 to vector<64x64xf32>
    %329 = arith.mulf %328, %326 : vector<64x64xf32>
    %330 = arith.addf %316, %329 : vector<64x64xf32>
    %c50 = arith.constant 50 : index
    %331 = memref.load %arg1[%c50] : memref<81xf32, #tpu.memory_space<smem>>
    %332 = vector.broadcast %331 : f32 to vector<64x64xf32>
    %333 = arith.mulf %332, %326 : vector<64x64xf32>
    %334 = arith.addf %320, %333 : vector<64x64xf32>
    %c77 = arith.constant 77 : index
    %335 = memref.load %arg1[%c77] : memref<81xf32, #tpu.memory_space<smem>>
    %336 = vector.broadcast %335 : f32 to vector<64x64xf32>
    %337 = arith.mulf %336, %326 : vector<64x64xf32>
    %338 = arith.addf %324, %337 : vector<64x64xf32>
    %c0_98 = arith.constant 0 : index
    %c2_99 = arith.constant 2 : index
    %c2_100 = arith.constant 2 : index
    %c0_101 = arith.constant 0 : index
    %339 = vector.load %arg5[%c0_98, %c2_99, %c2_100, %c0_101] : memref<1x3x66x66xf32, #tpu.memory_space<vmem>>, vector<1x1x64x64xf32>
    %340 = vector.shape_cast %339 : vector<1x1x64x64xf32> to vector<64x64xf32>
    %c24 = arith.constant 24 : index
    %341 = memref.load %arg1[%c24] : memref<81xf32, #tpu.memory_space<smem>>
    %342 = vector.broadcast %341 : f32 to vector<64x64xf32>
    %343 = arith.mulf %342, %340 : vector<64x64xf32>
    %344 = arith.addf %330, %343 : vector<64x64xf32>
    %c51 = arith.constant 51 : index
    %345 = memref.load %arg1[%c51] : memref<81xf32, #tpu.memory_space<smem>>
    %346 = vector.broadcast %345 : f32 to vector<64x64xf32>
    %347 = arith.mulf %346, %340 : vector<64x64xf32>
    %348 = arith.addf %334, %347 : vector<64x64xf32>
    %c78 = arith.constant 78 : index
    %349 = memref.load %arg1[%c78] : memref<81xf32, #tpu.memory_space<smem>>
    %350 = vector.broadcast %349 : f32 to vector<64x64xf32>
    %351 = arith.mulf %350, %340 : vector<64x64xf32>
    %352 = arith.addf %338, %351 : vector<64x64xf32>
    %c0_102 = arith.constant 0 : index
    %c2_103 = arith.constant 2 : index
    %c2_104 = arith.constant 2 : index
    %c1_105 = arith.constant 1 : index
    %353 = vector.load %arg5[%c0_102, %c2_103, %c2_104, %c1_105] : memref<1x3x66x66xf32, #tpu.memory_space<vmem>>, vector<1x1x64x64xf32>
    %354 = vector.shape_cast %353 : vector<1x1x64x64xf32> to vector<64x64xf32>
    %c25 = arith.constant 25 : index
    %355 = memref.load %arg1[%c25] : memref<81xf32, #tpu.memory_space<smem>>
    %356 = vector.broadcast %355 : f32 to vector<64x64xf32>
    %357 = arith.mulf %356, %354 : vector<64x64xf32>
    %358 = arith.addf %344, %357 : vector<64x64xf32>
    %c52 = arith.constant 52 : index
    %359 = memref.load %arg1[%c52] : memref<81xf32, #tpu.memory_space<smem>>
    %360 = vector.broadcast %359 : f32 to vector<64x64xf32>
    %361 = arith.mulf %360, %354 : vector<64x64xf32>
    %362 = arith.addf %348, %361 : vector<64x64xf32>
    %c79 = arith.constant 79 : index
    %363 = memref.load %arg1[%c79] : memref<81xf32, #tpu.memory_space<smem>>
    %364 = vector.broadcast %363 : f32 to vector<64x64xf32>
    %365 = arith.mulf %364, %354 : vector<64x64xf32>
    %366 = arith.addf %352, %365 : vector<64x64xf32>
    %c0_106 = arith.constant 0 : index
    %c2_107 = arith.constant 2 : index
    %c2_108 = arith.constant 2 : index
    %c2_109 = arith.constant 2 : index
    %367 = vector.load %arg5[%c0_106, %c2_107, %c2_108, %c2_109] : memref<1x3x66x66xf32, #tpu.memory_space<vmem>>, vector<1x1x64x64xf32>
    %368 = vector.shape_cast %367 : vector<1x1x64x64xf32> to vector<64x64xf32>
    %c26 = arith.constant 26 : index
    %369 = memref.load %arg1[%c26] : memref<81xf32, #tpu.memory_space<smem>>
    %370 = vector.broadcast %369 : f32 to vector<64x64xf32>
    %371 = arith.mulf %370, %368 : vector<64x64xf32>
    %372 = arith.addf %358, %371 : vector<64x64xf32>
    %c53 = arith.constant 53 : index
    %373 = memref.load %arg1[%c53] : memref<81xf32, #tpu.memory_space<smem>>
    %374 = vector.broadcast %373 : f32 to vector<64x64xf32>
    %375 = arith.mulf %374, %368 : vector<64x64xf32>
    %376 = arith.addf %362, %375 : vector<64x64xf32>
    %c80 = arith.constant 80 : index
    %377 = memref.load %arg1[%c80] : memref<81xf32, #tpu.memory_space<smem>>
    %378 = vector.broadcast %377 : f32 to vector<64x64xf32>
    %379 = arith.mulf %378, %368 : vector<64x64xf32>
    %380 = arith.addf %366, %379 : vector<64x64xf32>
    %c0_110 = arith.constant 0 : index
    %381 = memref.load %arg2[%c0_110] : memref<3xf32, #tpu.memory_space<smem>>
    %382 = vector.broadcast %381 : f32 to vector<64x64xf32>
    %383 = arith.addf %372, %382 : vector<64x64xf32>
    %cst_111 = arith.constant 0.000000e+00 : f32
    %384 = vector.broadcast %cst_111 : f32 to vector<64x64xf32>
    %385 = arith.maximumf %383, %384 : vector<64x64xf32>
    %c0_112 = arith.constant 0 : index
    %386 = memref.load %arg3[%c0_112] : memref<9xf32, #tpu.memory_space<smem>>
    %387 = vector.broadcast %386 : f32 to vector<64x64xf32>
    %388 = arith.mulf %387, %385 : vector<64x64xf32>
    %c3_113 = arith.constant 3 : index
    %389 = memref.load %arg3[%c3_113] : memref<9xf32, #tpu.memory_space<smem>>
    %390 = vector.broadcast %389 : f32 to vector<64x64xf32>
    %391 = arith.mulf %390, %385 : vector<64x64xf32>
    %c6_114 = arith.constant 6 : index
    %392 = memref.load %arg3[%c6_114] : memref<9xf32, #tpu.memory_space<smem>>
    %393 = vector.broadcast %392 : f32 to vector<64x64xf32>
    %394 = arith.mulf %393, %385 : vector<64x64xf32>
    %c1_115 = arith.constant 1 : index
    %395 = memref.load %arg2[%c1_115] : memref<3xf32, #tpu.memory_space<smem>>
    %396 = vector.broadcast %395 : f32 to vector<64x64xf32>
    %397 = arith.addf %376, %396 : vector<64x64xf32>
    %cst_116 = arith.constant 0.000000e+00 : f32
    %398 = vector.broadcast %cst_116 : f32 to vector<64x64xf32>
    %399 = arith.maximumf %397, %398 : vector<64x64xf32>
    %c1_117 = arith.constant 1 : index
    %400 = memref.load %arg3[%c1_117] : memref<9xf32, #tpu.memory_space<smem>>
    %401 = vector.broadcast %400 : f32 to vector<64x64xf32>
    %402 = arith.mulf %401, %399 : vector<64x64xf32>
    %403 = arith.addf %388, %402 : vector<64x64xf32>
    %c4_118 = arith.constant 4 : index
    %404 = memref.load %arg3[%c4_118] : memref<9xf32, #tpu.memory_space<smem>>
    %405 = vector.broadcast %404 : f32 to vector<64x64xf32>
    %406 = arith.mulf %405, %399 : vector<64x64xf32>
    %407 = arith.addf %391, %406 : vector<64x64xf32>
    %c7_119 = arith.constant 7 : index
    %408 = memref.load %arg3[%c7_119] : memref<9xf32, #tpu.memory_space<smem>>
    %409 = vector.broadcast %408 : f32 to vector<64x64xf32>
    %410 = arith.mulf %409, %399 : vector<64x64xf32>
    %411 = arith.addf %394, %410 : vector<64x64xf32>
    %c2_120 = arith.constant 2 : index
    %412 = memref.load %arg2[%c2_120] : memref<3xf32, #tpu.memory_space<smem>>
    %413 = vector.broadcast %412 : f32 to vector<64x64xf32>
    %414 = arith.addf %380, %413 : vector<64x64xf32>
    %cst_121 = arith.constant 0.000000e+00 : f32
    %415 = vector.broadcast %cst_121 : f32 to vector<64x64xf32>
    %416 = arith.maximumf %414, %415 : vector<64x64xf32>
    %c2_122 = arith.constant 2 : index
    %417 = memref.load %arg3[%c2_122] : memref<9xf32, #tpu.memory_space<smem>>
    %418 = vector.broadcast %417 : f32 to vector<64x64xf32>
    %419 = arith.mulf %418, %416 : vector<64x64xf32>
    %420 = arith.addf %403, %419 : vector<64x64xf32>
    %c5_123 = arith.constant 5 : index
    %421 = memref.load %arg3[%c5_123] : memref<9xf32, #tpu.memory_space<smem>>
    %422 = vector.broadcast %421 : f32 to vector<64x64xf32>
    %423 = arith.mulf %422, %416 : vector<64x64xf32>
    %424 = arith.addf %407, %423 : vector<64x64xf32>
    %c8_124 = arith.constant 8 : index
    %425 = memref.load %arg3[%c8_124] : memref<9xf32, #tpu.memory_space<smem>>
    %426 = vector.broadcast %425 : f32 to vector<64x64xf32>
    %427 = arith.mulf %426, %416 : vector<64x64xf32>
    %428 = arith.addf %411, %427 : vector<64x64xf32>
    %c0_125 = arith.constant 0 : index
    %429 = memref.load %arg4[%c0_125] : memref<3xf32, #tpu.memory_space<smem>>
    %430 = vector.broadcast %429 : f32 to vector<64x64xf32>
    %431 = arith.addf %420, %430 : vector<64x64xf32>
    %c0_126 = arith.constant 0 : index
    %c0_127 = arith.constant 0 : index
    %c0_128 = arith.constant 0 : index
    %c0_129 = arith.constant 0 : index
    %432 = vector.load %arg6[%c0_126, %c0_127, %c0_128, %c0_129] : memref<1x3x64x64xf32, #tpu.memory_space<vmem>>, vector<1x1x64x64xf32>
    %433 = vector.shape_cast %432 : vector<1x1x64x64xf32> to vector<64x64xf32>
    %434 = vector.shape_cast %431 : vector<64x64xf32> to vector<1x1x64x64xf32>
    tpu.vector_store %arg6[%c0_126, %c0_127, %c0_128, %c0_129], %434 {strides = array<i32>} : memref<1x3x64x64xf32, #tpu.memory_space<vmem>>, vector<1x1x64x64xf32>,
    %c1_130 = arith.constant 1 : index
    %435 = memref.load %arg4[%c1_130] : memref<3xf32, #tpu.memory_space<smem>>
    %436 = vector.broadcast %435 : f32 to vector<64x64xf32>
    %437 = arith.addf %424, %436 : vector<64x64xf32>
    %c0_131 = arith.constant 0 : index
    %c1_132 = arith.constant 1 : index
    %c0_133 = arith.constant 0 : index
    %c0_134 = arith.constant 0 : index
    %438 = vector.load %arg6[%c0_131, %c1_132, %c0_133, %c0_134] : memref<1x3x64x64xf32, #tpu.memory_space<vmem>>, vector<1x1x64x64xf32>
    %439 = vector.shape_cast %438 : vector<1x1x64x64xf32> to vector<64x64xf32>
    %440 = vector.shape_cast %437 : vector<64x64xf32> to vector<1x1x64x64xf32>
    tpu.vector_store %arg6[%c0_131, %c1_132, %c0_133, %c0_134], %440 {strides = array<i32>} : memref<1x3x64x64xf32, #tpu.memory_space<vmem>>, vector<1x1x64x64xf32>,
    %c2_135 = arith.constant 2 : index
    %441 = memref.load %arg4[%c2_135] : memref<3xf32, #tpu.memory_space<smem>>
    %442 = vector.broadcast %441 : f32 to vector<64x64xf32>
    %443 = arith.addf %428, %442 : vector<64x64xf32>
    %c0_136 = arith.constant 0 : index
    %c2_137 = arith.constant 2 : index
    %c0_138 = arith.constant 0 : index
    %c0_139 = arith.constant 0 : index
    %444 = vector.load %arg6[%c0_136, %c2_137, %c0_138, %c0_139] : memref<1x3x64x64xf32, #tpu.memory_space<vmem>>, vector<1x1x64x64xf32>
    %445 = vector.shape_cast %444 : vector<1x1x64x64xf32> to vector<64x64xf32>
    %446 = vector.shape_cast %443 : vector<64x64xf32> to vector<1x1x64x64xf32>
    tpu.vector_store %arg6[%c0_136, %c2_137, %c0_138, %c0_139], %446 {strides = array<i32>} : memref<1x3x64x64xf32, #tpu.memory_space<vmem>>, vector<1x1x64x64xf32>,
    return
  }
  func.func @transform_0(%arg0: i32) -> i32 {
    %c0_i32 = arith.constant 0 : i32
    %c0_i32_0 = arith.constant 0 : i32
    return %c0_i32 : i32
  }
  func.func @transform_1(%arg0: i32) -> i32 {
    %c0_i32 = arith.constant 0 : i32
    %c0_i32_0 = arith.constant 0 : i32
    return %c0_i32 : i32
  }
  func.func @transform_2(%arg0: i32) -> i32 {
    %c0_i32 = arith.constant 0 : i32
    %c0_i32_0 = arith.constant 0 : i32
    return %c0_i32 : i32
  }
  func.func @transform_3(%arg0: i32) -> i32 {
    %c0_i32 = arith.constant 0 : i32
    %c0_i32_0 = arith.constant 0 : i32
    return %c0_i32 : i32
  }
  func.func @transform_4(%arg0: i32) -> (i32, i32, i32, i32) {
    %c0_i32 = arith.constant 0 : i32
    %c0_i32_0 = arith.constant 0 : i32
    %c0_i32_1 = arith.constant 0 : i32
    %c0_i32_2 = arith.constant 0 : i32
    return %arg0, %c0_i32, %c0_i32_0, %c0_i32_1 : i32, i32, i32, i32
  }
  func.func @transform_5(%arg0: i32) -> (i32, i32, i32, i32) {
    %c0_i32 = arith.constant 0 : i32
    %c0_i32_0 = arith.constant 0 : i32
    %c0_i32_1 = arith.constant 0 : i32
    %c0_i32_2 = arith.constant 0 : i32
    return %arg0, %c0_i32, %c0_i32_0, %c0_i32_1 : i32, i32, i32, i32
  }
}

</mosaic_0001>

<llo_original>
// kernel: tpu_custom_call.1
$region0: #{tpu_custom_call.1}
  #allocation0 [shape = 'u32[]', space=smem, size = 0x4, offset = 0x4, fixed_abs, tag = 'smem constant byte address 0x4 - core index']
  #allocation1 [shape = 'u32[72,128]{1,0:T(1,128)}', space=vmem, size = 0x9000, scoped, tag = 'internal scratch']
  %s0 = inlined_call_operand.vmem [shape: f32[81], index: 0, kind: input, shape index: {}]
  %s1 = inlined_call_operand.vmem [shape: f32[3], index: 1, kind: input, shape index: {}]
  %s2 = inlined_call_operand.vmem [shape: f32[9], index: 2, kind: input, shape index: {}]
  %s3 = inlined_call_operand.vmem [shape: f32[3], index: 3, kind: input, shape index: {}]
  %s4 = inlined_call_operand.vmem [shape: f32[1,3,66,66], index: 4, kind: input, shape index: {}]
  %s5 = inlined_call_operand.hbm [shape: f32[1,3,64,64], index: 5, kind: output, shape index: {}]
  %s6 = sld [smem:[#allocation0]]
  $region46: #{tpu_custom_call.1} parent=0
    _
  %s8 = ssub.s32 1, %s6
  %s9 = scalar_select 0, %s8, %s6
  $region1: #{tpu_custom_call.1} parent=0
    #allocation2 [shape = 'u8[512]{0}', space=smem, size = 0x200, scoped, tag = 'input window, operand 0, single buffered']
    #allocation3 [shape = 's32[1]{0}', space=sflag, size = 0x4, scoped, tag = 'scoped memory for tpu_custom_call.1']
    #allocation4 [shape = 's32[1]{0}', space=sflag, size = 0x4, scoped, tag = 'scoped memory for tpu_custom_call.1']
    #allocation5 [shape = 'u8[512]{0}', space=smem, size = 0x200, scoped, tag = 'input window, operand 1, single buffered']
    #allocation6 [shape = 's32[1]{0}', space=sflag, size = 0x4, scoped, tag = 'scoped memory for tpu_custom_call.1']
    #allocation7 [shape = 'u8[512]{0}', space=smem, size = 0x200, scoped, tag = 'input window, operand 2, single buffered']
    #allocation8 [shape = 'u8[512]{0}', space=smem, size = 0x200, scoped, tag = 'input window, operand 3, single buffered']
    #allocation9 [shape = 's32[1]{0}', space=sflag, size = 0x4, scoped, tag = 'scoped memory for tpu_custom_call.1']
    #allocation10 [shape = 'u8[98304]{0}', space=vmem, size = 0x18000, scoped, tag = 'output window, operand 0, single buffered']
    %10 = vsyncpa [#allocation4], 0
    %11 = vsyncpa [#allocation6], 0
    %12 = vsyncpa [#allocation9], 0
    %13 = vsyncpa [#allocation3], 0
    // Predicated region
    $region2: #{tpu_custom_call.1} parent=1 // pred_check
      _
    $region3: #{tpu_custom_call.1} parent=1 // pred_check_branch
      %15 = sbr.rel (0) target = $region5
    $region4: #{tpu_custom_call.1} parent=1 // pred_region
      %17 = vsyncadd [#allocation4], 0
      %s19 = sshll.u32 %s0, 4
      %s20 = int_to_ptr.vmem [resolvable:$true] %s19
      %22 = dma.vmem_to_smem %s20, 16, [#allocation2], [#allocation4]
    $region5: #{tpu_custom_call.1} parent=1 // pred_fallthru
      _
    // Predicated region
    $region6: #{tpu_custom_call.1} parent=1 // pred_check
      _
    $region7: #{tpu_custom_call.1} parent=1 // pred_check_branch
      %24 = sbr.rel (0) target = $region9
    $region8: #{tpu_custom_call.1} parent=1 // pred_region
      %26 = vsyncadd [#allocation6], 0
      %s28 = sshll.u32 %s1, 4
      %s29 = int_to_ptr.vmem [resolvable:$true] %s28
      %31 = dma.vmem_to_smem %s29, 16, [#allocation5], [#allocation6]
    $region9: #{tpu_custom_call.1} parent=1 // pred_fallthru
      _
    // Predicated region
    $region10: #{tpu_custom_call.1} parent=1 // pred_check
      _
    $region11: #{tpu_custom_call.1} parent=1 // pred_check_branch
      %33 = sbr.rel (0) target = $region13
    $region12: #{tpu_custom_call.1} parent=1 // pred_region
      %35 = vsyncadd [#allocation6], 0
      %s37 = sshll.u32 %s2, 4
      %s38 = int_to_ptr.vmem [resolvable:$true] %s37
      %40 = dma.vmem_to_smem %s38, 16, [#allocation7], [#allocation6]
    $region13: #{tpu_custom_call.1} parent=1 // pred_fallthru
      _
    // Predicated region
    $region14: #{tpu_custom_call.1} parent=1 // pred_check
      _
    $region15: #{tpu_custom_call.1} parent=1 // pred_check_branch
      %42 = sbr.rel (0) target = $region17
    $region16: #{tpu_custom_call.1} parent=1 // pred_region
      %44 = vsyncadd [#allocation9], 0
      %s46 = sshll.u32 %s3, 4
      %s47 = int_to_ptr.vmem [resolvable:$true] %s46
      %49 = dma.vmem_to_smem %s47, 16, [#allocation8], [#allocation9]
    $region17: #{tpu_custom_call.1} parent=1 // pred_fallthru
      _
    // Predicated region
    $region18: #{tpu_custom_call.1} parent=1 // pred_check
      _
    $region19: #{tpu_custom_call.1} parent=1 // pred_check_branch
      %51 = sbr.rel (0) target = $region21
    $region20: #{tpu_custom_call.1} parent=1 // pred_region
      _
    $region21: #{tpu_custom_call.1} parent=1 // pred_fallthru
      _
    // Predicated region
    $region22: #{tpu_custom_call.1} parent=1 // pred_check
      _
    $region23: #{tpu_custom_call.1} parent=1 // pred_check_branch
      %53 = sbr.rel (0) target = $region25
    $region24: #{tpu_custom_call.1} parent=1 // pred_region
      %55 = dma.done [#allocation4], 16
    $region25: #{tpu_custom_call.1} parent=1 // pred_fallthru
      _
    // Predicated region
    $region26: #{tpu_custom_call.1} parent=1 // pred_check
      _
    $region27: #{tpu_custom_call.1} parent=1 // pred_check_branch
      %57 = sbr.rel (0) target = $region29
    $region28: #{tpu_custom_call.1} parent=1 // pred_region
      %59 = dma.done [#allocation6], 16
    $region29: #{tpu_custom_call.1} parent=1 // pred_fallthru
      _
    // Predicated region
    $region30: #{tpu_custom_call.1} parent=1 // pred_check
      _
    $region31: #{tpu_custom_call.1} parent=1 // pred_check_branch
      %61 = sbr.rel (0) target = $region33
    $region32: #{tpu_custom_call.1} parent=1 // pred_region
      %63 = dma.done [#allocation6], 16
    $region33: #{tpu_custom_call.1} parent=1 // pred_fallthru
      _
    // Predicated region
    $region34: #{tpu_custom_call.1} parent=1 // pred_check
      _
    $region35: #{tpu_custom_call.1} parent=1 // pred_check_branch
      %65 = sbr.rel (0) target = $region37
    $region36: #{tpu_custom_call.1} parent=1 // pred_region
      %67 = dma.done [#allocation9], 16
    $region37: #{tpu_custom_call.1} parent=1 // pred_fallthru
      _
    %68 = sfence
    %v69 = vld [vmem:[%s4] sm:$0xff]
    %v70 = vld [vmem:[%s4 + $0x8] sm:$0xff]
    %v71 = vld [vmem:[%s4 + $0x10] sm:$0xff]
    %v72 = vld [vmem:[%s4 + $0x18] sm:$0xff]
    %v73 = vld [vmem:[%s4 + $0x20] sm:$0xff]
    %v74 = vld [vmem:[%s4 + $0x28] sm:$0xff]
    %v75 = vld [vmem:[%s4 + $0x30] sm:$0xff]
    %v76 = vld [vmem:[%s4 + $0x38] sm:$0xff]
    %s77 = sld [smem:[#allocation2]]
    %v78 = vstv %s77
    %v79 = vmul.f32 %v78, %v69
    %v80 = vmul.f32 %v78, %v70
    %v81 = vmul.f32 %v78, %v71
    %v82 = vmul.f32 %v78, %v72
    %v83 = vmul.f32 %v78, %v73
    %v84 = vmul.f32 %v78, %v74
    %v85 = vmul.f32 %v78, %v75
    %v86 = vmul.f32 %v78, %v76
    %v87 = vadd.f32 %v79, 0.0
    %v88 = vadd.f32 %v80, 0.0
    %v89 = vadd.f32 %v81, 0.0
    %v90 = vadd.f32 %v82, 0.0
    %v91 = vadd.f32 %v83, 0.0
    %v92 = vadd.f32 %v84, 0.0
    %v93 = vadd.f32 %v85, 0.0
    %v94 = vadd.f32 %v86, 0.0
    %s95 = sld [smem:[#allocation2 + $0x1b]]
    %v96 = vstv %s95
    %v97 = vmul.f32 %v96, %v69
    %v98 = vmul.f32 %v96, %v70
    %v99 = vmul.f32 %v96, %v71
    %v100 = vmul.f32 %v96, %v72
    %v101 = vmul.f32 %v96, %v73
    %v102 = vmul.f32 %v96, %v74
    %v103 = vmul.f32 %v96, %v75
    %v104 = vmul.f32 %v96, %v76
    %v105 = vadd.f32 %v97, 0.0
    %v106 = vadd.f32 %v98, 0.0
    %v107 = vadd.f32 %v99, 0.0
    %v108 = vadd.f32 %v100, 0.0
    %v109 = vadd.f32 %v101, 0.0
    %v110 = vadd.f32 %v102, 0.0
    %v111 = vadd.f32 %v103, 0.0
    %v112 = vadd.f32 %v104, 0.0
    %s113 = sld [smem:[#allocation2 + $0x36]]
    %v114 = vstv %s113
    %v115 = vmul.f32 %v114, %v69
    %v116 = vmul.f32 %v114, %v70
    %v117 = vmul.f32 %v114, %v71
    %v118 = vmul.f32 %v114, %v72
    %v119 = vmul.f32 %v114, %v73
    %v120 = vmul.f32 %v114, %v74
    %v121 = vmul.f32 %v114, %v75
    %v122 = vmul.f32 %v114, %v76
    %v123 = vadd.f32 %v115, 0.0
    %v124 = vadd.f32 %v116, 0.0
    %v125 = vadd.f32 %v117, 0.0
    %v126 = vadd.f32 %v118, 0.0
    %v127 = vadd.f32 %v119, 0.0
    %v128 = vadd.f32 %v120, 0.0
    %v129 = vadd.f32 %v121, 0.0
    %v130 = vadd.f32 %v122, 0.0
    %s131 = sld [smem:[#allocation2 + $0x1]]
    %v132 = vstv %s131
    %v133 = vmul.f32 %v132, %v69
    %v134 = vmul.f32 %v132, %v70
    %v135 = vmul.f32 %v132, %v71
    %v136 = vmul.f32 %v132, %v72
    %v137 = vmul.f32 %v132, %v73
    %v138 = vmul.f32 %v132, %v74
    %v139 = vmul.f32 %v132, %v75
    %v140 = vmul.f32 %v132, %v76
    %149 = vrot.lane.b32.xlu0 %v133, 127
    %v150 = vpop.permute.xlu0 %149
    %151 = vrot.lane.b32.xlu0 %v134, 127
    %v152 = vpop.permute.xlu0 %151
    %153 = vrot.lane.b32.xlu0 %v135, 127
    %v154 = vpop.permute.xlu0 %153
    %155 = vrot.lane.b32.xlu0 %v136, 127
    %v156 = vpop.permute.xlu0 %155
    %157 = vrot.lane.b32.xlu0 %v137, 127
    %v158 = vpop.permute.xlu0 %157
    %159 = vrot.lane.b32.xlu0 %v138, 127
    %v160 = vpop.permute.xlu0 %159
    %161 = vrot.lane.b32.xlu0 %v139, 127
    %v162 = vpop.permute.xlu0 %161
    %163 = vrot.lane.b32.xlu0 %v140, 127
    %v164 = vpop.permute.xlu0 %163
    %v173 = vadd.f32 %v87, %v150
    %v174 = vadd.f32 %v88, %v152
    %v175 = vadd.f32 %v89, %v154
    %v176 = vadd.f32 %v90, %v156
    %v177 = vadd.f32 %v91, %v158
    %v178 = vadd.f32 %v92, %v160
    %v179 = vadd.f32 %v93, %v162
    %v180 = vadd.f32 %v94, %v164
    %s181 = sld [smem:[#allocation2 + $0x1c]]
    %v182 = vstv %s181
    %v183 = vmul.f32 %v182, %v69
    %v184 = vmul.f32 %v182, %v70
    %v185 = vmul.f32 %v182, %v71
    %v186 = vmul.f32 %v182, %v72
    %v187 = vmul.f32 %v182, %v73
    %v188 = vmul.f32 %v182, %v74
    %v189 = vmul.f32 %v182, %v75
    %v190 = vmul.f32 %v182, %v76
    %199 = vrot.lane.b32.xlu0 %v183, 127
    %v200 = vpop.permute.xlu0 %199
    %201 = vrot.lane.b32.xlu0 %v184, 127
    %v202 = vpop.permute.xlu0 %201
    %203 = vrot.lane.b32.xlu0 %v185, 127
    %v204 = vpop.permute.xlu0 %203
    %205 = vrot.lane.b32.xlu0 %v186, 127
    %v206 = vpop.permute.xlu0 %205
    %207 = vrot.lane.b32.xlu0 %v187, 127
    %v208 = vpop.permute.xlu0 %207
    %209 = vrot.lane.b32.xlu0 %v188, 127
    %v210 = vpop.permute.xlu0 %209
    %211 = vrot.lane.b32.xlu0 %v189, 127
    %v212 = vpop.permute.xlu0 %211
    %213 = vrot.lane.b32.xlu0 %v190, 127
    %v214 = vpop.permute.xlu0 %213
    %v223 = vadd.f32 %v105, %v200
    %v224 = vadd.f32 %v106, %v202
    %v225 = vadd.f32 %v107, %v204
    %v226 = vadd.f32 %v108, %v206
    %v227 = vadd.f32 %v109, %v208
    %v228 = vadd.f32 %v110, %v210
    %v229 = vadd.f32 %v111, %v212
    %v230 = vadd.f32 %v112, %v214
    %s231 = sld [smem:[#allocation2 + $0x37]]
    %v232 = vstv %s231
    %v233 = vmul.f32 %v232, %v69
    %v234 = vmul.f32 %v232, %v70
    %v235 = vmul.f32 %v232, %v71
    %v236 = vmul.f32 %v232, %v72
    %v237 = vmul.f32 %v232, %v73
    %v238 = vmul.f32 %v232, %v74
    %v239 = vmul.f32 %v232, %v75
    %v240 = vmul.f32 %v232, %v76
    %249 = vrot.lane.b32.xlu0 %v233, 127
    %v250 = vpop.permute.xlu0 %249
    %251 = vrot.lane.b32.xlu0 %v234, 127
    %v252 = vpop.permute.xlu0 %251
    %253 = vrot.lane.b32.xlu0 %v235, 127
    %v254 = vpop.permute.xlu0 %253
    %255 = vrot.lane.b32.xlu0 %v236, 127
    %v256 = vpop.permute.xlu0 %255
    %257 = vrot.lane.b32.xlu0 %v237, 127
    %v258 = vpop.permute.xlu0 %257
    %259 = vrot.lane.b32.xlu0 %v238, 127
    %v260 = vpop.permute.xlu0 %259
    %261 = vrot.lane.b32.xlu0 %v239, 127
    %v262 = vpop.permute.xlu0 %261
    %263 = vrot.lane.b32.xlu0 %v240, 127
    %v264 = vpop.permute.xlu0 %263
    %v273 = vadd.f32 %v123, %v250
    %v274 = vadd.f32 %v124, %v252
    %v275 = vadd.f32 %v125, %v254
    %v276 = vadd.f32 %v126, %v256
    %v277 = vadd.f32 %v127, %v258
    %v278 = vadd.f32 %v128, %v260
    %v279 = vadd.f32 %v129, %v262
    %v280 = vadd.f32 %v130, %v264
    %s281 = sld [smem:[#allocation2 + $0x2]]
    %v282 = vstv %s281
    %v283 = vmul.f32 %v282, %v69
    %v284 = vmul.f32 %v282, %v70
    %v285 = vmul.f32 %v282, %v71
    %v286 = vmul.f32 %v282, %v72
    %v287 = vmul.f32 %v282, %v73
    %v288 = vmul.f32 %v282, %v74
    %v289 = vmul.f32 %v282, %v75
    %v290 = vmul.f32 %v282, %v76
    %299 = vrot.lane.b32.xlu0 %v283, 126
    %v300 = vpop.permute.xlu0 %299
    %301 = vrot.lane.b32.xlu0 %v284, 126
    %v302 = vpop.permute.xlu0 %301
    %303 = vrot.lane.b32.xlu0 %v285, 126
    %v304 = vpop.permute.xlu0 %303
    %305 = vrot.lane.b32.xlu0 %v286, 126
    %v306 = vpop.permute.xlu0 %305
    %307 = vrot.lane.b32.xlu0 %v287, 126
    %v308 = vpop.permute.xlu0 %307
    %309 = vrot.lane.b32.xlu0 %v288, 126
    %v310 = vpop.permute.xlu0 %309
    %311 = vrot.lane.b32.xlu0 %v289, 126
    %v312 = vpop.permute.xlu0 %311
    %313 = vrot.lane.b32.xlu0 %v290, 126
    %v314 = vpop.permute.xlu0 %313
    %v323 = vadd.f32 %v173, %v300
    %v324 = vadd.f32 %v174, %v302
    %v325 = vadd.f32 %v175, %v304
    %v326 = vadd.f32 %v176, %v306
    %v327 = vadd.f32 %v177, %v308
    %v328 = vadd.f32 %v178, %v310
    %v329 = vadd.f32 %v179, %v312
    %v330 = vadd.f32 %v180, %v314
    %s331 = sld [smem:[#allocation2 + $0x1d]]
    %v332 = vstv %s331
    %v333 = vmul.f32 %v332, %v69
    %v334 = vmul.f32 %v332, %v70
    %v335 = vmul.f32 %v332, %v71
    %v336 = vmul.f32 %v332, %v72
    %v337 = vmul.f32 %v332, %v73
    %v338 = vmul.f32 %v332, %v74
    %v339 = vmul.f32 %v332, %v75
    %v340 = vmul.f32 %v332, %v76
    %349 = vrot.lane.b32.xlu0 %v333, 126
    %v350 = vpop.permute.xlu0 %349
    %351 = vrot.lane.b32.xlu0 %v334, 126
    %v352 = vpop.permute.xlu0 %351
    %353 = vrot.lane.b32.xlu0 %v335, 126
    %v354 = vpop.permute.xlu0 %353
    %355 = vrot.lane.b32.xlu0 %v336, 126
    %v356 = vpop.permute.xlu0 %355
    %357 = vrot.lane.b32.xlu0 %v337, 126
    %v358 = vpop.permute.xlu0 %357
    %359 = vrot.lane.b32.xlu0 %v338, 126
    %v360 = vpop.permute.xlu0 %359
    %361 = vrot.lane.b32.xlu0 %v339, 126
    %v362 = vpop.permute.xlu0 %361
    %363 = vrot.lane.b32.xlu0 %v340, 126
    %v364 = vpop.permute.xlu0 %363
    %v373 = vadd.f32 %v223, %v350
    %v374 = vadd.f32 %v224, %v352
    %v375 = vadd.f32 %v225, %v354
    %v376 = vadd.f32 %v226, %v356
    %v377 = vadd.f32 %v227, %v358
    %v378 = vadd.f32 %v228, %v360
    %v379 = vadd.f32 %v229, %v362
    %v380 = vadd.f32 %v230, %v364
    %s381 = sld [smem:[#allocation2 + $0x38]]
    %v382 = vstv %s381
    %v383 = vmul.f32 %v382, %v69
    %v384 = vmul.f32 %v382, %v70
    %v385 = vmul.f32 %v382, %v71
    %v386 = vmul.f32 %v382, %v72
    %v387 = vmul.f32 %v382, %v73
    %v388 = vmul.f32 %v382, %v74
    %v389 = vmul.f32 %v382, %v75
    %v390 = vmul.f32 %v382, %v76
    %399 = vrot.lane.b32.xlu0 %v383, 126
    %v400 = vpop.permute.xlu0 %399
    %401 = vrot.lane.b32.xlu0 %v384, 126
    %v402 = vpop.permute.xlu0 %401
    %403 = vrot.lane.b32.xlu0 %v385, 126
    %v404 = vpop.permute.xlu0 %403
    %405 = vrot.lane.b32.xlu0 %v386, 126
    %v406 = vpop.permute.xlu0 %405
    %407 = vrot.lane.b32.xlu0 %v387, 126
    %v408 = vpop.permute.xlu0 %407
    %409 = vrot.lane.b32.xlu0 %v388, 126
    %v410 = vpop.permute.xlu0 %409
    %411 = vrot.lane.b32.xlu0 %v389, 126
    %v412 = vpop.permute.xlu0 %411
    %413 = vrot.lane.b32.xlu0 %v390, 126
    %v414 = vpop.permute.xlu0 %413
    %v423 = vadd.f32 %v273, %v400
    %v424 = vadd.f32 %v274, %v402
    %v425 = vadd.f32 %v275, %v404
    %v426 = vadd.f32 %v276, %v406
    %v427 = vadd.f32 %v277, %v408
    %v428 = vadd.f32 %v278, %v410
    %v429 = vadd.f32 %v279, %v412
    %v430 = vadd.f32 %v280, %v414
    %v431 = vld [vmem:[%s4 + $0x1] sm:$0xff]
    %v432 = vld [vmem:[%s4 + $0x9] sm:$0xff]
    %v433 = vld [vmem:[%s4 + $0x11] sm:$0xff]
    %v434 = vld [vmem:[%s4 + $0x19] sm:$0xff]
    %v435 = vld [vmem:[%s4 + $0x21] sm:$0xff]
    %v436 = vld [vmem:[%s4 + $0x29] sm:$0xff]
    %v437 = vld [vmem:[%s4 + $0x31] sm:$0xff]
    %v438 = vld [vmem:[%s4 + $0x39] sm:$0xff]
    %s439 = sld [smem:[#allocation2 + $0x3]]
    %v440 = vstv %s439
    %v441 = vmul.f32 %v440, %v431
    %v442 = vmul.f32 %v440, %v432
    %v443 = vmul.f32 %v440, %v433
    %v444 = vmul.f32 %v440, %v434
    %v445 = vmul.f32 %v440, %v435
    %v446 = vmul.f32 %v440, %v436
    %v447 = vmul.f32 %v440, %v437
    %v448 = vmul.f32 %v440, %v438
    %v449 = vadd.f32 %v323, %v441
    %v450 = vadd.f32 %v324, %v442
    %v451 = vadd.f32 %v325, %v443
    %v452 = vadd.f32 %v326, %v444
    %v453 = vadd.f32 %v327, %v445
    %v454 = vadd.f32 %v328, %v446
    %v455 = vadd.f32 %v329, %v447
    %v456 = vadd.f32 %v330, %v448
    %s457 = sld [smem:[#allocation2 + $0x1e]]
    %v458 = vstv %s457
    %v459 = vmul.f32 %v458, %v431
    %v460 = vmul.f32 %v458, %v432
    %v461 = vmul.f32 %v458, %v433
    %v462 = vmul.f32 %v458, %v434
    %v463 = vmul.f32 %v458, %v435
    %v464 = vmul.f32 %v458, %v436
    %v465 = vmul.f32 %v458, %v437
    %v466 = vmul.f32 %v458, %v438
    %v467 = vadd.f32 %v373, %v459
    %v468 = vadd.f32 %v374, %v460
    %v469 = vadd.f32 %v375, %v461
    %v470 = vadd.f32 %v376, %v462
    %v471 = vadd.f32 %v377, %v463
    %v472 = vadd.f32 %v378, %v464
    %v473 = vadd.f32 %v379, %v465
    %v474 = vadd.f32 %v380, %v466
    %s475 = sld [smem:[#allocation2 + $0x39]]
    %v476 = vstv %s475
    %v477 = vmul.f32 %v476, %v431
    %v478 = vmul.f32 %v476, %v432
    %v479 = vmul.f32 %v476, %v433
    %v480 = vmul.f32 %v476, %v434
    %v481 = vmul.f32 %v476, %v435
    %v482 = vmul.f32 %v476, %v436
    %v483 = vmul.f32 %v476, %v437
    %v484 = vmul.f32 %v476, %v438
    %v485 = vadd.f32 %v423, %v477
    %v486 = vadd.f32 %v424, %v478
    %v487 = vadd.f32 %v425, %v479
    %v488 = vadd.f32 %v426, %v480
    %v489 = vadd.f32 %v427, %v481
    %v490 = vadd.f32 %v428, %v482
    %v491 = vadd.f32 %v429, %v483
    %v492 = vadd.f32 %v430, %v484
    %s493 = sld [smem:[#allocation2 + $0x4]]
    %v494 = vstv %s493
    %v495 = vmul.f32 %v494, %v431
    %v496 = vmul.f32 %v494, %v432
    %v497 = vmul.f32 %v494, %v433
    %v498 = vmul.f32 %v494, %v434
    %v499 = vmul.f32 %v494, %v435
    %v500 = vmul.f32 %v494, %v436
    %v501 = vmul.f32 %v494, %v437
    %v502 = vmul.f32 %v494, %v438
    %511 = vrot.lane.b32.xlu0 %v495, 127
    %v512 = vpop.permute.xlu0 %511
    %513 = vrot.lane.b32.xlu0 %v496, 127
    %v514 = vpop.permute.xlu0 %513
    %515 = vrot.lane.b32.xlu0 %v497, 127
    %v516 = vpop.permute.xlu0 %515
    %517 = vrot.lane.b32.xlu0 %v498, 127
    %v518 = vpop.permute.xlu0 %517
    %519 = vrot.lane.b32.xlu0 %v499, 127
    %v520 = vpop.permute.xlu0 %519
    %521 = vrot.lane.b32.xlu0 %v500, 127
    %v522 = vpop.permute.xlu0 %521
    %523 = vrot.lane.b32.xlu0 %v501, 127
    %v524 = vpop.permute.xlu0 %523
    %525 = vrot.lane.b32.xlu0 %v502, 127
    %v526 = vpop.permute.xlu0 %525
    %v535 = vadd.f32 %v449, %v512
    %v536 = vadd.f32 %v450, %v514
    %v537 = vadd.f32 %v451, %v516
    %v538 = vadd.f32 %v452, %v518
    %v539 = vadd.f32 %v453, %v520
    %v540 = vadd.f32 %v454, %v522
    %v541 = vadd.f32 %v455, %v524
    %v542 = vadd.f32 %v456, %v526
    %s543 = sld [smem:[#allocation2 + $0x1f]]
    %v544 = vstv %s543
    %v545 = vmul.f32 %v544, %v431
    %v546 = vmul.f32 %v544, %v432
    %v547 = vmul.f32 %v544, %v433
    %v548 = vmul.f32 %v544, %v434
    %v549 = vmul.f32 %v544, %v435
    %v550 = vmul.f32 %v544, %v436
    %v551 = vmul.f32 %v544, %v437
    %v552 = vmul.f32 %v544, %v438
    %561 = vrot.lane.b32.xlu0 %v545, 127
    %v562 = vpop.permute.xlu0 %561
    %563 = vrot.lane.b32.xlu0 %v546, 127
    %v564 = vpop.permute.xlu0 %563
    %565 = vrot.lane.b32.xlu0 %v547, 127
    %v566 = vpop.permute.xlu0 %565
    %567 = vrot.lane.b32.xlu0 %v548, 127
    %v568 = vpop.permute.xlu0 %567
    %569 = vrot.lane.b32.xlu0 %v549, 127
    %v570 = vpop.permute.xlu0 %569
    %571 = vrot.lane.b32.xlu0 %v550, 127
    %v572 = vpop.permute.xlu0 %571
    %573 = vrot.lane.b32.xlu0 %v551, 127
    %v574 = vpop.permute.xlu0 %573
    %575 = vrot.lane.b32.xlu0 %v552, 127
    %v576 = vpop.permute.xlu0 %575
    %v585 = vadd.f32 %v467, %v562
    %v586 = vadd.f32 %v468, %v564
    %v587 = vadd.f32 %v469, %v566
    %v588 = vadd.f32 %v470, %v568
    %v589 = vadd.f32 %v471, %v570
    %v590 = vadd.f32 %v472, %v572
    %v591 = vadd.f32 %v473, %v574
    %v592 = vadd.f32 %v474, %v576
    %s593 = sld [smem:[#allocation2 + $0x3a]]
    %v594 = vstv %s593
    %v595 = vmul.f32 %v594, %v431
    %v596 = vmul.f32 %v594, %v432
    %v597 = vmul.f32 %v594, %v433
    %v598 = vmul.f32 %v594, %v434
    %v599 = vmul.f32 %v594, %v435
    %v600 = vmul.f32 %v594, %v436
    %v601 = vmul.f32 %v594, %v437
    %v602 = vmul.f32 %v594, %v438
    %611 = vrot.lane.b32.xlu0 %v595, 127
    %v612 = vpop.permute.xlu0 %611
    %613 = vrot.lane.b32.xlu0 %v596, 127
    %v614 = vpop.permute.xlu0 %613
    %615 = vrot.lane.b32.xlu0 %v597, 127
    %v616 = vpop.permute.xlu0 %615
    %617 = vrot.lane.b32.xlu0 %v598, 127
    %v618 = vpop.permute.xlu0 %617
    %619 = vrot.lane.b32.xlu0 %v599, 127
    %v620 = vpop.permute.xlu0 %619
    %621 = vrot.lane.b32.xlu0 %v600, 127
    %v622 = vpop.permute.xlu0 %621
    %623 = vrot.lane.b32.xlu0 %v601, 127
    %v624 = vpop.permute.xlu0 %623
    %625 = vrot.lane.b32.xlu0 %v602, 127
    %v626 = vpop.permute.xlu0 %625
    %v635 = vadd.f32 %v485, %v612
    %v636 = vadd.f32 %v486, %v614
    %v637 = vadd.f32 %v487, %v616
    %v638 = vadd.f32 %v488, %v618
    %v639 = vadd.f32 %v489, %v620
    %v640 = vadd.f32 %v490, %v622
    %v641 = vadd.f32 %v491, %v624
    %v642 = vadd.f32 %v492, %v626
    %s643 = sld [smem:[#allocation2 + $0x5]]
    %v644 = vstv %s643
    %v645 = vmul.f32 %v644, %v431
    %v646 = vmul.f32 %v644, %v432
    %v647 = vmul.f32 %v644, %v433
    %v648 = vmul.f32 %v644, %v434
    %v649 = vmul.f32 %v644, %v435
    %v650 = vmul.f32 %v644, %v436
    %v651 = vmul.f32 %v644, %v437
    %v652 = vmul.f32 %v644, %v438
    %661 = vrot.lane.b32.xlu0 %v645, 126
    %v662 = vpop.permute.xlu0 %661
    %663 = vrot.lane.b32.xlu0 %v646, 126
    %v664 = vpop.permute.xlu0 %663
    %665 = vrot.lane.b32.xlu0 %v647, 126
    %v666 = vpop.permute.xlu0 %665
    %667 = vrot.lane.b32.xlu0 %v648, 126
    %v668 = vpop.permute.xlu0 %667
    %669 = vrot.lane.b32.xlu0 %v649, 126
    %v670 = vpop.permute.xlu0 %669
    %671 = vrot.lane.b32.xlu0 %v650, 126
    %v672 = vpop.permute.xlu0 %671
    %673 = vrot.lane.b32.xlu0 %v651, 126
    %v674 = vpop.permute.xlu0 %673
    %675 = vrot.lane.b32.xlu0 %v652, 126
    %v676 = vpop.permute.xlu0 %675
    %v685 = vadd.f32 %v535, %v662
    %v686 = vadd.f32 %v536, %v664
    %v687 = vadd.f32 %v537, %v666
    %v688 = vadd.f32 %v538, %v668
    %v689 = vadd.f32 %v539, %v670
    %v690 = vadd.f32 %v540, %v672
    %v691 = vadd.f32 %v541, %v674
    %v692 = vadd.f32 %v542, %v676
    %s693 = sld [smem:[#allocation2 + $0x20]]
    %v694 = vstv %s693
    %v695 = vmul.f32 %v694, %v431
    %v696 = vmul.f32 %v694, %v432
    %v697 = vmul.f32 %v694, %v433
    %v698 = vmul.f32 %v694, %v434
    %v699 = vmul.f32 %v694, %v435
    %v700 = vmul.f32 %v694, %v436
    %v701 = vmul.f32 %v694, %v437
    %v702 = vmul.f32 %v694, %v438
    %711 = vrot.lane.b32.xlu0 %v695, 126
    %v712 = vpop.permute.xlu0 %711
    %713 = vrot.lane.b32.xlu0 %v696, 126
    %v714 = vpop.permute.xlu0 %713
    %715 = vrot.lane.b32.xlu0 %v697, 126
    %v716 = vpop.permute.xlu0 %715
    %717 = vrot.lane.b32.xlu0 %v698, 126
    %v718 = vpop.permute.xlu0 %717
    %719 = vrot.lane.b32.xlu0 %v699, 126
    %v720 = vpop.permute.xlu0 %719
    %721 = vrot.lane.b32.xlu0 %v700, 126
    %v722 = vpop.permute.xlu0 %721
    %723 = vrot.lane.b32.xlu0 %v701, 126
    %v724 = vpop.permute.xlu0 %723
    %725 = vrot.lane.b32.xlu0 %v702, 126
    %v726 = vpop.permute.xlu0 %725
    %v735 = vadd.f32 %v585, %v712
    %v736 = vadd.f32 %v586, %v714
    %v737 = vadd.f32 %v587, %v716
    %v738 = vadd.f32 %v588, %v718
    %v739 = vadd.f32 %v589, %v720
    %v740 = vadd.f32 %v590, %v722
    %v741 = vadd.f32 %v591, %v724
    %v742 = vadd.f32 %v592, %v726
    %s743 = sld [smem:[#allocation2 + $0x3b]]
    %v744 = vstv %s743
    %v745 = vmul.f32 %v744, %v431
    %v746 = vmul.f32 %v744, %v432
    %v747 = vmul.f32 %v744, %v433
    %v748 = vmul.f32 %v744, %v434
    %v749 = vmul.f32 %v744, %v435
    %v750 = vmul.f32 %v744, %v436
    %v751 = vmul.f32 %v744, %v437
    %v752 = vmul.f32 %v744, %v438
    %761 = vrot.lane.b32.xlu0 %v745, 126
    %v762 = vpop.permute.xlu0 %761
    %763 = vrot.lane.b32.xlu0 %v746, 126
    %v764 = vpop.permute.xlu0 %763
    %765 = vrot.lane.b32.xlu0 %v747, 126
    %v766 = vpop.permute.xlu0 %765
    %767 = vrot.lane.b32.xlu0 %v748, 126
    %v768 = vpop.permute.xlu0 %767
    %769 = vrot.lane.b32.xlu0 %v749, 126
    %v770 = vpop.permute.xlu0 %769
    %771 = vrot.lane.b32.xlu0 %v750, 126
    %v772 = vpop.permute.xlu0 %771
    %773 = vrot.lane.b32.xlu0 %v751, 126
    %v774 = vpop.permute.xlu0 %773
    %775 = vrot.lane.b32.xlu0 %v752, 126
    %v776 = vpop.permute.xlu0 %775
    %v785 = vadd.f32 %v635, %v762
    %v786 = vadd.f32 %v636, %v764
    %v787 = vadd.f32 %v637, %v766
    %v788 = vadd.f32 %v638, %v768
    %v789 = vadd.f32 %v639, %v770
    %v790 = vadd.f32 %v640, %v772
    %v791 = vadd.f32 %v641, %v774
    %v792 = vadd.f32 %v642, %v776
    %v793 = vld [vmem:[%s4 + $0x2] sm:$0xff]
    %v794 = vld [vmem:[%s4 + $0xa] sm:$0xff]
    %v795 = vld [vmem:[%s4 + $0x12] sm:$0xff]
    %v796 = vld [vmem:[%s4 + $0x1a] sm:$0xff]
    %v797 = vld [vmem:[%s4 + $0x22] sm:$0xff]
    %v798 = vld [vmem:[%s4 + $0x2a] sm:$0xff]
    %v799 = vld [vmem:[%s4 + $0x32] sm:$0xff]
    %v800 = vld [vmem:[%s4 + $0x3a] sm:$0xff]
    %s801 = sld [smem:[#allocation2 + $0x6]]
    %v802 = vstv %s801
    %v803 = vmul.f32 %v802, %v793
    %v804 = vmul.f32 %v802, %v794
    %v805 = vmul.f32 %v802, %v795
    %v806 = vmul.f32 %v802, %v796
    %v807 = vmul.f32 %v802, %v797
    %v808 = vmul.f32 %v802, %v798
    %v809 = vmul.f32 %v802, %v799
    %v810 = vmul.f32 %v802, %v800
    %v811 = vadd.f32 %v685, %v803
    %v812 = vadd.f32 %v686, %v804
    %v813 = vadd.f32 %v687, %v805
    %v814 = vadd.f32 %v688, %v806
    %v815 = vadd.f32 %v689, %v807
    %v816 = vadd.f32 %v690, %v808
    %v817 = vadd.f32 %v691, %v809
    %v818 = vadd.f32 %v692, %v810
    %s819 = sld [smem:[#allocation2 + $0x21]]
    %v820 = vstv %s819
    %v821 = vmul.f32 %v820, %v793
    %v822 = vmul.f32 %v820, %v794
    %v823 = vmul.f32 %v820, %v795
    %v824 = vmul.f32 %v820, %v796
    %v825 = vmul.f32 %v820, %v797
    %v826 = vmul.f32 %v820, %v798
    %v827 = vmul.f32 %v820, %v799
    %v828 = vmul.f32 %v820, %v800
    %v829 = vadd.f32 %v735, %v821
    %v830 = vadd.f32 %v736, %v822
    %v831 = vadd.f32 %v737, %v823
    %v832 = vadd.f32 %v738, %v824
    %v833 = vadd.f32 %v739, %v825
    %v834 = vadd.f32 %v740, %v826
    %v835 = vadd.f32 %v741, %v827
    %v836 = vadd.f32 %v742, %v828
    %s837 = sld [smem:[#allocation2 + $0x3c]]
    %v838 = vstv %s837
    %v839 = vmul.f32 %v838, %v793
    %v840 = vmul.f32 %v838, %v794
    %v841 = vmul.f32 %v838, %v795
    %v842 = vmul.f32 %v838, %v796
    %v843 = vmul.f32 %v838, %v797
    %v844 = vmul.f32 %v838, %v798
    %v845 = vmul.f32 %v838, %v799
    %v846 = vmul.f32 %v838, %v800
    %v847 = vadd.f32 %v785, %v839
    %v848 = vadd.f32 %v786, %v840
    %v849 = vadd.f32 %v787, %v841
    %v850 = vadd.f32 %v788, %v842
    %v851 = vadd.f32 %v789, %v843
    %v852 = vadd.f32 %v790, %v844
    %v853 = vadd.f32 %v791, %v845
    %v854 = vadd.f32 %v792, %v846
    %s855 = sld [smem:[#allocation2 + $0x7]]
    %v856 = vstv %s855
    %v857 = vmul.f32 %v856, %v793
    %v858 = vmul.f32 %v856, %v794
    %v859 = vmul.f32 %v856, %v795
    %v860 = vmul.f32 %v856, %v796
    %v861 = vmul.f32 %v856, %v797
    %v862 = vmul.f32 %v856, %v798
    %v863 = vmul.f32 %v856, %v799
    %v864 = vmul.f32 %v856, %v800
    %873 = vrot.lane.b32.xlu0 %v857, 127
    %v874 = vpop.permute.xlu0 %873
    %875 = vrot.lane.b32.xlu0 %v858, 127
    %v876 = vpop.permute.xlu0 %875
    %877 = vrot.lane.b32.xlu0 %v859, 127
    %v878 = vpop.permute.xlu0 %877
    %879 = vrot.lane.b32.xlu0 %v860, 127
    %v880 = vpop.permute.xlu0 %879
    %881 = vrot.lane.b32.xlu0 %v861, 127
    %v882 = vpop.permute.xlu0 %881
    %883 = vrot.lane.b32.xlu0 %v862, 127
    %v884 = vpop.permute.xlu0 %883
    %885 = vrot.lane.b32.xlu0 %v863, 127
    %v886 = vpop.permute.xlu0 %885
    %887 = vrot.lane.b32.xlu0 %v864, 127
    %v888 = vpop.permute.xlu0 %887
    %v897 = vadd.f32 %v811, %v874
    %v898 = vadd.f32 %v812, %v876
    %v899 = vadd.f32 %v813, %v878
    %v900 = vadd.f32 %v814, %v880
    %v901 = vadd.f32 %v815, %v882
    %v902 = vadd.f32 %v816, %v884
    %v903 = vadd.f32 %v817, %v886
    %v904 = vadd.f32 %v818, %v888
    %s905 = sld [smem:[#allocation2 + $0x22]]
    %v906 = vstv %s905
    %v907 = vmul.f32 %v906, %v793
    %v908 = vmul.f32 %v906, %v794
    %v909 = vmul.f32 %v906, %v795
    %v910 = vmul.f32 %v906, %v796
    %v911 = vmul.f32 %v906, %v797
    %v912 = vmul.f32 %v906, %v798
    %v913 = vmul.f32 %v906, %v799
    %v914 = vmul.f32 %v906, %v800
    %923 = vrot.lane.b32.xlu0 %v907, 127
    %v924 = vpop.permute.xlu0 %923
    %925 = vrot.lane.b32.xlu0 %v908, 127
    %v926 = vpop.permute.xlu0 %925
    %927 = vrot.lane.b32.xlu0 %v909, 127
    %v928 = vpop.permute.xlu0 %927
    %929 = vrot.lane.b32.xlu0 %v910, 127
    %v930 = vpop.permute.xlu0 %929
    %931 = vrot.lane.b32.xlu0 %v911, 127
    %v932 = vpop.permute.xlu0 %931
    %933 = vrot.lane.b32.xlu0 %v912, 127
    %v934 = vpop.permute.xlu0 %933
    %935 = vrot.lane.b32.xlu0 %v913, 127
    %v936 = vpop.permute.xlu0 %935
    %937 = vrot.lane.b32.xlu0 %v914, 127
    %v938 = vpop.permute.xlu0 %937
    %v947 = vadd.f32 %v829, %v924
    %v948 = vadd.f32 %v830, %v926
    %v949 = vadd.f32 %v831, %v928
    %v950 = vadd.f32 %v832, %v930
    %v951 = vadd.f32 %v833, %v932
    %v952 = vadd.f32 %v834, %v934
    %v953 = vadd.f32 %v835, %v936
    %v954 = vadd.f32 %v836, %v938
    %s955 = sld [smem:[#allocation2 + $0x3d]]
    %v956 = vstv %s955
    %v957 = vmul.f32 %v956, %v793
    %v958 = vmul.f32 %v956, %v794
    %v959 = vmul.f32 %v956, %v795
    %v960 = vmul.f32 %v956, %v796
    %v961 = vmul.f32 %v956, %v797
    %v962 = vmul.f32 %v956, %v798
    %v963 = vmul.f32 %v956, %v799
    %v964 = vmul.f32 %v956, %v800
    %973 = vrot.lane.b32.xlu0 %v957, 127
    %v974 = vpop.permute.xlu0 %973
    %975 = vrot.lane.b32.xlu0 %v958, 127
    %v976 = vpop.permute.xlu0 %975
    %977 = vrot.lane.b32.xlu0 %v959, 127
    %v978 = vpop.permute.xlu0 %977
    %979 = vrot.lane.b32.xlu0 %v960, 127
    %v980 = vpop.permute.xlu0 %979
    %981 = vrot.lane.b32.xlu0 %v961, 127
    %v982 = vpop.permute.xlu0 %981
    %983 = vrot.lane.b32.xlu0 %v962, 127
    %v984 = vpop.permute.xlu0 %983
    %985 = vrot.lane.b32.xlu0 %v963, 127
    %v986 = vpop.permute.xlu0 %985
    %987 = vrot.lane.b32.xlu0 %v964, 127
    %v988 = vpop.permute.xlu0 %987
    %v997 = vadd.f32 %v847, %v974
    %v998 = vadd.f32 %v848, %v976
    %v999 = vadd.f32 %v849, %v978
    %v1000 = vadd.f32 %v850, %v980
    %v1001 = vadd.f32 %v851, %v982
    %v1002 = vadd.f32 %v852, %v984
    %v1003 = vadd.f32 %v853, %v986
    %v1004 = vadd.f32 %v854, %v988
    %s1005 = sld [smem:[#allocation2 + $0x8]]
    %v1006 = vstv %s1005
    %v1007 = vmul.f32 %v1006, %v793
    %v1008 = vmul.f32 %v1006, %v794
    %v1009 = vmul.f32 %v1006, %v795
    %v1010 = vmul.f32 %v1006, %v796
    %v1011 = vmul.f32 %v1006, %v797
    %v1012 = vmul.f32 %v1006, %v798
    %v1013 = vmul.f32 %v1006, %v799
    %v1014 = vmul.f32 %v1006, %v800
    %1023 = vrot.lane.b32.xlu0 %v1007, 126
    %v1024 = vpop.permute.xlu0 %1023
    %1025 = vrot.lane.b32.xlu0 %v1008, 126
    %v1026 = vpop.permute.xlu0 %1025
    %1027 = vrot.lane.b32.xlu0 %v1009, 126
    %v1028 = vpop.permute.xlu0 %1027
    %1029 = vrot.lane.b32.xlu0 %v1010, 126
    %v1030 = vpop.permute.xlu0 %1029
    %1031 = vrot.lane.b32.xlu0 %v1011, 126
    %v1032 = vpop.permute.xlu0 %1031
    %1033 = vrot.lane.b32.xlu0 %v1012, 126
    %v1034 = vpop.permute.xlu0 %1033
    %1035 = vrot.lane.b32.xlu0 %v1013, 126
    %v1036 = vpop.permute.xlu0 %1035
    %1037 = vrot.lane.b32.xlu0 %v1014, 126
    %v1038 = vpop.permute.xlu0 %1037
    %v1047 = vadd.f32 %v897, %v1024
    %v1048 = vadd.f32 %v898, %v1026
    %v1049 = vadd.f32 %v899, %v1028
    %v1050 = vadd.f32 %v900, %v1030
    %v1051 = vadd.f32 %v901, %v1032
    %v1052 = vadd.f32 %v902, %v1034
    %v1053 = vadd.f32 %v903, %v1036
    %v1054 = vadd.f32 %v904, %v1038
    %s1055 = sld [smem:[#allocation2 + $0x23]]
    %v1056 = vstv %s1055
    %v1057 = vmul.f32 %v1056, %v793
    %v1058 = vmul.f32 %v1056, %v794
    %v1059 = vmul.f32 %v1056, %v795
    %v1060 = vmul.f32 %v1056, %v796
    %v1061 = vmul.f32 %v1056, %v797
    %v1062 = vmul.f32 %v1056, %v798
    %v1063 = vmul.f32 %v1056, %v799
    %v1064 = vmul.f32 %v1056, %v800
    %1073 = vrot.lane.b32.xlu0 %v1057, 126
    %v1074 = vpop.permute.xlu0 %1073
    %1075 = vrot.lane.b32.xlu0 %v1058, 126
    %v1076 = vpop.permute.xlu0 %1075
    %1077 = vrot.lane.b32.xlu0 %v1059, 126
    %v1078 = vpop.permute.xlu0 %1077
    %1079 = vrot.lane.b32.xlu0 %v1060, 126
    %v1080 = vpop.permute.xlu0 %1079
    %1081 = vrot.lane.b32.xlu0 %v1061, 126
    %v1082 = vpop.permute.xlu0 %1081
    %1083 = vrot.lane.b32.xlu0 %v1062, 126
    %v1084 = vpop.permute.xlu0 %1083
    %1085 = vrot.lane.b32.xlu0 %v1063, 126
    %v1086 = vpop.permute.xlu0 %1085
    %1087 = vrot.lane.b32.xlu0 %v1064, 126
    %v1088 = vpop.permute.xlu0 %1087
    %v1097 = vadd.f32 %v947, %v1074
    %v1098 = vadd.f32 %v948, %v1076
    %v1099 = vadd.f32 %v949, %v1078
    %v1100 = vadd.f32 %v950, %v1080
    %v1101 = vadd.f32 %v951, %v1082
    %v1102 = vadd.f32 %v952, %v1084
    %v1103 = vadd.f32 %v953, %v1086
    %v1104 = vadd.f32 %v954, %v1088
    %s1105 = sld [smem:[#allocation2 + $0x3e]]
    %v1106 = vstv %s1105
    %v1107 = vmul.f32 %v1106, %v793
    %v1108 = vmul.f32 %v1106, %v794
    %v1109 = vmul.f32 %v1106, %v795
    %v1110 = vmul.f32 %v1106, %v796
    %v1111 = vmul.f32 %v1106, %v797
    %v1112 = vmul.f32 %v1106, %v798
    %v1113 = vmul.f32 %v1106, %v799
    %v1114 = vmul.f32 %v1106, %v800
    %1123 = vrot.lane.b32.xlu0 %v1107, 126
    %v1124 = vpop.permute.xlu0 %1123
    %1125 = vrot.lane.b32.xlu0 %v1108, 126
    %v1126 = vpop.permute.xlu0 %1125
    %1127 = vrot.lane.b32.xlu0 %v1109, 126
    %v1128 = vpop.permute.xlu0 %1127
    %1129 = vrot.lane.b32.xlu0 %v1110, 126
    %v1130 = vpop.permute.xlu0 %1129
    %1131 = vrot.lane.b32.xlu0 %v1111, 126
    %v1132 = vpop.permute.xlu0 %1131
    %1133 = vrot.lane.b32.xlu0 %v1112, 126
    %v1134 = vpop.permute.xlu0 %1133
    %1135 = vrot.lane.b32.xlu0 %v1113, 126
    %v1136 = vpop.permute.xlu0 %1135
    %1137 = vrot.lane.b32.xlu0 %v1114, 126
    %v1138 = vpop.permute.xlu0 %1137
    %v1147 = vadd.f32 %v997, %v1124
    %v1148 = vadd.f32 %v998, %v1126
    %v1149 = vadd.f32 %v999, %v1128
    %v1150 = vadd.f32 %v1000, %v1130
    %v1151 = vadd.f32 %v1001, %v1132
    %v1152 = vadd.f32 %v1002, %v1134
    %v1153 = vadd.f32 %v1003, %v1136
    %v1154 = vadd.f32 %v1004, %v1138
    %s1155 = scalar_lea.vmem %s4, 72
    %v1156 = vld [vmem:[%s1155] sm:$0xff]
    %v1157 = vld [vmem:[%s1155 + $0x8] sm:$0xff]
    %v1158 = vld [vmem:[%s1155 + $0x10] sm:$0xff]
    %v1159 = vld [vmem:[%s1155 + $0x18] sm:$0xff]
    %v1160 = vld [vmem:[%s1155 + $0x20] sm:$0xff]
    %v1161 = vld [vmem:[%s1155 + $0x28] sm:$0xff]
    %v1162 = vld [vmem:[%s1155 + $0x30] sm:$0xff]
    %v1163 = vld [vmem:[%s1155 + $0x38] sm:$0xff]
    %s1164 = sld [smem:[#allocation2 + $0x9]]
    %v1165 = vstv %s1164
    %v1166 = vmul.f32 %v1165, %v1156
    %v1167 = vmul.f32 %v1165, %v1157
    %v1168 = vmul.f32 %v1165, %v1158
    %v1169 = vmul.f32 %v1165, %v1159
    %v1170 = vmul.f32 %v1165, %v1160
    %v1171 = vmul.f32 %v1165, %v1161
    %v1172 = vmul.f32 %v1165, %v1162
    %v1173 = vmul.f32 %v1165, %v1163
    %v1174 = vadd.f32 %v1047, %v1166
    %v1175 = vadd.f32 %v1048, %v1167
    %v1176 = vadd.f32 %v1049, %v1168
    %v1177 = vadd.f32 %v1050, %v1169
    %v1178 = vadd.f32 %v1051, %v1170
    %v1179 = vadd.f32 %v1052, %v1171
    %v1180 = vadd.f32 %v1053, %v1172
    %v1181 = vadd.f32 %v1054, %v1173
    %s1182 = sld [smem:[#allocation2 + $0x24]]
    %v1183 = vstv %s1182
    %v1184 = vmul.f32 %v1183, %v1156
    %v1185 = vmul.f32 %v1183, %v1157
    %v1186 = vmul.f32 %v1183, %v1158
    %v1187 = vmul.f32 %v1183, %v1159
    %v1188 = vmul.f32 %v1183, %v1160
    %v1189 = vmul.f32 %v1183, %v1161
    %v1190 = vmul.f32 %v1183, %v1162
    %v1191 = vmul.f32 %v1183, %v1163
    %v1192 = vadd.f32 %v1097, %v1184
    %v1193 = vadd.f32 %v1098, %v1185
    %v1194 = vadd.f32 %v1099, %v1186
    %v1195 = vadd.f32 %v1100, %v1187
    %v1196 = vadd.f32 %v1101, %v1188
    %v1197 = vadd.f32 %v1102, %v1189
    %v1198 = vadd.f32 %v1103, %v1190
    %v1199 = vadd.f32 %v1104, %v1191
    %s1200 = sld [smem:[#allocation2 + $0x3f]]
    %v1201 = vstv %s1200
    %v1202 = vmul.f32 %v1201, %v1156
    %v1203 = vmul.f32 %v1201, %v1157
    %v1204 = vmul.f32 %v1201, %v1158
    %v1205 = vmul.f32 %v1201, %v1159
    %v1206 = vmul.f32 %v1201, %v1160
    %v1207 = vmul.f32 %v1201, %v1161
    %v1208 = vmul.f32 %v1201, %v1162
    %v1209 = vmul.f32 %v1201, %v1163
    %v1210 = vadd.f32 %v1147, %v1202
    %v1211 = vadd.f32 %v1148, %v1203
    %v1212 = vadd.f32 %v1149, %v1204
    %v1213 = vadd.f32 %v1150, %v1205
    %v1214 = vadd.f32 %v1151, %v1206
    %v1215 = vadd.f32 %v1152, %v1207
    %v1216 = vadd.f32 %v1153, %v1208
    %v1217 = vadd.f32 %v1154, %v1209
    %s1218 = sld [smem:[#allocation2 + $0xa]]
    %v1219 = vstv %s1218
    %v1220 = vmul.f32 %v1219, %v1156
    %v1221 = vmul.f32 %v1219, %v1157
    %v1222 = vmul.f32 %v1219, %v1158
    %v1223 = vmul.f32 %v1219, %v1159
    %v1224 = vmul.f32 %v1219, %v1160
    %v1225 = vmul.f32 %v1219, %v1161
    %v1226 = vmul.f32 %v1219, %v1162
    %v1227 = vmul.f32 %v1219, %v1163
    %1236 = vrot.lane.b32.xlu0 %v1220, 127
    %v1237 = vpop.permute.xlu0 %1236
    %1238 = vrot.lane.b32.xlu0 %v1221, 127
    %v1239 = vpop.permute.xlu0 %1238
    %1240 = vrot.lane.b32.xlu0 %v1222, 127
    %v1241 = vpop.permute.xlu0 %1240
    %1242 = vrot.lane.b32.xlu0 %v1223, 127
    %v1243 = vpop.permute.xlu0 %1242
    %1244 = vrot.lane.b32.xlu0 %v1224, 127
    %v1245 = vpop.permute.xlu0 %1244
    %1246 = vrot.lane.b32.xlu0 %v1225, 127
    %v1247 = vpop.permute.xlu0 %1246
    %1248 = vrot.lane.b32.xlu0 %v1226, 127
    %v1249 = vpop.permute.xlu0 %1248
    %1250 = vrot.lane.b32.xlu0 %v1227, 127
    %v1251 = vpop.permute.xlu0 %1250
    %v1260 = vadd.f32 %v1174, %v1237
    %v1261 = vadd.f32 %v1175, %v1239
    %v1262 = vadd.f32 %v1176, %v1241
    %v1263 = vadd.f32 %v1177, %v1243
    %v1264 = vadd.f32 %v1178, %v1245
    %v1265 = vadd.f32 %v1179, %v1247
    %v1266 = vadd.f32 %v1180, %v1249
    %v1267 = vadd.f32 %v1181, %v1251
    %s1268 = sld [smem:[#allocation2 + $0x25]]
    %v1269 = vstv %s1268
    %v1270 = vmul.f32 %v1269, %v1156
    %v1271 = vmul.f32 %v1269, %v1157
    %v1272 = vmul.f32 %v1269, %v1158
    %v1273 = vmul.f32 %v1269, %v1159
    %v1274 = vmul.f32 %v1269, %v1160
    %v1275 = vmul.f32 %v1269, %v1161
    %v1276 = vmul.f32 %v1269, %v1162
    %v1277 = vmul.f32 %v1269, %v1163
    %1286 = vrot.lane.b32.xlu0 %v1270, 127
    %v1287 = vpop.permute.xlu0 %1286
    %1288 = vrot.lane.b32.xlu0 %v1271, 127
    %v1289 = vpop.permute.xlu0 %1288
    %1290 = vrot.lane.b32.xlu0 %v1272, 127
    %v1291 = vpop.permute.xlu0 %1290
    %1292 = vrot.lane.b32.xlu0 %v1273, 127
    %v1293 = vpop.permute.xlu0 %1292
    %1294 = vrot.lane.b32.xlu0 %v1274, 127
    %v1295 = vpop.permute.xlu0 %1294
    %1296 = vrot.lane.b32.xlu0 %v1275, 127
    %v1297 = vpop.permute.xlu0 %1296
    %1298 = vrot.lane.b32.xlu0 %v1276, 127
    %v1299 = vpop.permute.xlu0 %1298
    %1300 = vrot.lane.b32.xlu0 %v1277, 127
    %v1301 = vpop.permute.xlu0 %1300
    %v1310 = vadd.f32 %v1192, %v1287
    %v1311 = vadd.f32 %v1193, %v1289
    %v1312 = vadd.f32 %v1194, %v1291
    %v1313 = vadd.f32 %v1195, %v1293
    %v1314 = vadd.f32 %v1196, %v1295
    %v1315 = vadd.f32 %v1197, %v1297
    %v1316 = vadd.f32 %v1198, %v1299
    %v1317 = vadd.f32 %v1199, %v1301
    %s1318 = sld [smem:[#allocation2 + $0x40]]
    %v1319 = vstv %s1318
    %v1320 = vmul.f32 %v1319, %v1156
    %v1321 = vmul.f32 %v1319, %v1157
    %v1322 = vmul.f32 %v1319, %v1158
    %v1323 = vmul.f32 %v1319, %v1159
    %v1324 = vmul.f32 %v1319, %v1160
    %v1325 = vmul.f32 %v1319, %v1161
    %v1326 = vmul.f32 %v1319, %v1162
    %v1327 = vmul.f32 %v1319, %v1163
    %1336 = vrot.lane.b32.xlu0 %v1320, 127
    %v1337 = vpop.permute.xlu0 %1336
    %1338 = vrot.lane.b32.xlu0 %v1321, 127
    %v1339 = vpop.permute.xlu0 %1338
    %1340 = vrot.lane.b32.xlu0 %v1322, 127
    %v1341 = vpop.permute.xlu0 %1340
    %1342 = vrot.lane.b32.xlu0 %v1323, 127
    %v1343 = vpop.permute.xlu0 %1342
    %1344 = vrot.lane.b32.xlu0 %v1324, 127
    %v1345 = vpop.permute.xlu0 %1344
    %1346 = vrot.lane.b32.xlu0 %v1325, 127
    %v1347 = vpop.permute.xlu0 %1346
    %1348 = vrot.lane.b32.xlu0 %v1326, 127
    %v1349 = vpop.permute.xlu0 %1348
    %1350 = vrot.lane.b32.xlu0 %v1327, 127
    %v1351 = vpop.permute.xlu0 %1350
    %v1360 = vadd.f32 %v1210, %v1337
    %v1361 = vadd.f32 %v1211, %v1339
    %v1362 = vadd.f32 %v1212, %v1341
    %v1363 = vadd.f32 %v1213, %v1343
    %v1364 = vadd.f32 %v1214, %v1345
    %v1365 = vadd.f32 %v1215, %v1347
    %v1366 = vadd.f32 %v1216, %v1349
    %v1367 = vadd.f32 %v1217, %v1351
    %s1368 = sld [smem:[#allocation2 + $0xb]]
    %v1369 = vstv %s1368
    %v1370 = vmul.f32 %v1369, %v1156
    %v1371 = vmul.f32 %v1369, %v1157
    %v1372 = vmul.f32 %v1369, %v1158
    %v1373 = vmul.f32 %v1369, %v1159
    %v1374 = vmul.f32 %v1369, %v1160
    %v1375 = vmul.f32 %v1369, %v1161
    %v1376 = vmul.f32 %v1369, %v1162
    %v1377 = vmul.f32 %v1369, %v1163
    %1386 = vrot.lane.b32.xlu0 %v1370, 126
    %v1387 = vpop.permute.xlu0 %1386
    %1388 = vrot.lane.b32.xlu0 %v1371, 126
    %v1389 = vpop.permute.xlu0 %1388
    %1390 = vrot.lane.b32.xlu0 %v1372, 126
    %v1391 = vpop.permute.xlu0 %1390
    %1392 = vrot.lane.b32.xlu0 %v1373, 126
    %v1393 = vpop.permute.xlu0 %1392
    %1394 = vrot.lane.b32.xlu0 %v1374, 126
    %v1395 = vpop.permute.xlu0 %1394
    %1396 = vrot.lane.b32.xlu0 %v1375, 126
    %v1397 = vpop.permute.xlu0 %1396
    %1398 = vrot.lane.b32.xlu0 %v1376, 126
    %v1399 = vpop.permute.xlu0 %1398
    %1400 = vrot.lane.b32.xlu0 %v1377, 126
    %v1401 = vpop.permute.xlu0 %1400
    %v1410 = vadd.f32 %v1260, %v1387
    %v1411 = vadd.f32 %v1261, %v1389
    %v1412 = vadd.f32 %v1262, %v1391
    %v1413 = vadd.f32 %v1263, %v1393
    %v1414 = vadd.f32 %v1264, %v1395
    %v1415 = vadd.f32 %v1265, %v1397
    %v1416 = vadd.f32 %v1266, %v1399
    %v1417 = vadd.f32 %v1267, %v1401
    %s1418 = sld [smem:[#allocation2 + $0x26]]
    %v1419 = vstv %s1418
    %v1420 = vmul.f32 %v1419, %v1156
    %v1421 = vmul.f32 %v1419, %v1157
    %v1422 = vmul.f32 %v1419, %v1158
    %v1423 = vmul.f32 %v1419, %v1159
    %v1424 = vmul.f32 %v1419, %v1160
    %v1425 = vmul.f32 %v1419, %v1161
    %v1426 = vmul.f32 %v1419, %v1162
    %v1427 = vmul.f32 %v1419, %v1163
    %1436 = vrot.lane.b32.xlu0 %v1420, 126
    %v1437 = vpop.permute.xlu0 %1436
    %1438 = vrot.lane.b32.xlu0 %v1421, 126
    %v1439 = vpop.permute.xlu0 %1438
    %1440 = vrot.lane.b32.xlu0 %v1422, 126
    %v1441 = vpop.permute.xlu0 %1440
    %1442 = vrot.lane.b32.xlu0 %v1423, 126
    %v1443 = vpop.permute.xlu0 %1442
    %1444 = vrot.lane.b32.xlu0 %v1424, 126
    %v1445 = vpop.permute.xlu0 %1444
    %1446 = vrot.lane.b32.xlu0 %v1425, 126
    %v1447 = vpop.permute.xlu0 %1446
    %1448 = vrot.lane.b32.xlu0 %v1426, 126
    %v1449 = vpop.permute.xlu0 %1448
    %1450 = vrot.lane.b32.xlu0 %v1427, 126
    %v1451 = vpop.permute.xlu0 %1450
    %v1460 = vadd.f32 %v1310, %v1437
    %v1461 = vadd.f32 %v1311, %v1439
    %v1462 = vadd.f32 %v1312, %v1441
    %v1463 = vadd.f32 %v1313, %v1443
    %v1464 = vadd.f32 %v1314, %v1445
    %v1465 = vadd.f32 %v1315, %v1447
    %v1466 = vadd.f32 %v1316, %v1449
    %v1467 = vadd.f32 %v1317, %v1451
    %s1468 = sld [smem:[#allocation2 + $0x41]]
    %v1469 = vstv %s1468
    %v1470 = vmul.f32 %v1469, %v1156
    %v1471 = vmul.f32 %v1469, %v1157
    %v1472 = vmul.f32 %v1469, %v1158
    %v1473 = vmul.f32 %v1469, %v1159
    %v1474 = vmul.f32 %v1469, %v1160
    %v1475 = vmul.f32 %v1469, %v1161
    %v1476 = vmul.f32 %v1469, %v1162
    %v1477 = vmul.f32 %v1469, %v1163
    %1486 = vrot.lane.b32.xlu0 %v1470, 126
    %v1487 = vpop.permute.xlu0 %1486
    %1488 = vrot.lane.b32.xlu0 %v1471, 126
    %v1489 = vpop.permute.xlu0 %1488
    %1490 = vrot.lane.b32.xlu0 %v1472, 126
    %v1491 = vpop.permute.xlu0 %1490
    %1492 = vrot.lane.b32.xlu0 %v1473, 126
    %v1493 = vpop.permute.xlu0 %1492
    %1494 = vrot.lane.b32.xlu0 %v1474, 126
    %v1495 = vpop.permute.xlu0 %1494
    %1496 = vrot.lane.b32.xlu0 %v1475, 126
    %v1497 = vpop.permute.xlu0 %1496
    %1498 = vrot.lane.b32.xlu0 %v1476, 126
    %v1499 = vpop.permute.xlu0 %1498
    %1500 = vrot.lane.b32.xlu0 %v1477, 126
    %v1501 = vpop.permute.xlu0 %1500
    %v1510 = vadd.f32 %v1360, %v1487
    %v1511 = vadd.f32 %v1361, %v1489
    %v1512 = vadd.f32 %v1362, %v1491
    %v1513 = vadd.f32 %v1363, %v1493
    %v1514 = vadd.f32 %v1364, %v1495
    %v1515 = vadd.f32 %v1365, %v1497
    %v1516 = vadd.f32 %v1366, %v1499
    %v1517 = vadd.f32 %v1367, %v1501
    %v1518 = vld [vmem:[%s1155 + $0x1] sm:$0xff]
    %v1519 = vld [vmem:[%s1155 + $0x9] sm:$0xff]
    %v1520 = vld [vmem:[%s1155 + $0x11] sm:$0xff]
    %v1521 = vld [vmem:[%s1155 + $0x19] sm:$0xff]
    %v1522 = vld [vmem:[%s1155 + $0x21] sm:$0xff]
    %v1523 = vld [vmem:[%s1155 + $0x29] sm:$0xff]
    %v1524 = vld [vmem:[%s1155 + $0x31] sm:$0xff]
    %v1525 = vld [vmem:[%s1155 + $0x39] sm:$0xff]
    %s1526 = sld [smem:[#allocation2 + $0xc]]
    %v1527 = vstv %s1526
    %v1528 = vmul.f32 %v1527, %v1518
    %v1529 = vmul.f32 %v1527, %v1519
    %v1530 = vmul.f32 %v1527, %v1520
    %v1531 = vmul.f32 %v1527, %v1521
    %v1532 = vmul.f32 %v1527, %v1522
    %v1533 = vmul.f32 %v1527, %v1523
    %v1534 = vmul.f32 %v1527, %v1524
    %v1535 = vmul.f32 %v1527, %v1525
    %v1536 = vadd.f32 %v1410, %v1528
    %v1537 = vadd.f32 %v1411, %v1529
    %v1538 = vadd.f32 %v1412, %v1530
    %v1539 = vadd.f32 %v1413, %v1531
    %v1540 = vadd.f32 %v1414, %v1532
    %v1541 = vadd.f32 %v1415, %v1533
    %v1542 = vadd.f32 %v1416, %v1534
    %v1543 = vadd.f32 %v1417, %v1535
    %s1544 = sld [smem:[#allocation2 + $0x27]]
    %v1545 = vstv %s1544
    %v1546 = vmul.f32 %v1545, %v1518
    %v1547 = vmul.f32 %v1545, %v1519
    %v1548 = vmul.f32 %v1545, %v1520
    %v1549 = vmul.f32 %v1545, %v1521
    %v1550 = vmul.f32 %v1545, %v1522
    %v1551 = vmul.f32 %v1545, %v1523
    %v1552 = vmul.f32 %v1545, %v1524
    %v1553 = vmul.f32 %v1545, %v1525
    %v1554 = vadd.f32 %v1460, %v1546
    %v1555 = vadd.f32 %v1461, %v1547
    %v1556 = vadd.f32 %v1462, %v1548
    %v1557 = vadd.f32 %v1463, %v1549
    %v1558 = vadd.f32 %v1464, %v1550
    %v1559 = vadd.f32 %v1465, %v1551
    %v1560 = vadd.f32 %v1466, %v1552
    %v1561 = vadd.f32 %v1467, %v1553
    %s1562 = sld [smem:[#allocation2 + $0x42]]
    %v1563 = vstv %s1562
    %v1564 = vmul.f32 %v1563, %v1518
    %v1565 = vmul.f32 %v1563, %v1519
    %v1566 = vmul.f32 %v1563, %v1520
    %v1567 = vmul.f32 %v1563, %v1521
    %v1568 = vmul.f32 %v1563, %v1522
    %v1569 = vmul.f32 %v1563, %v1523
    %v1570 = vmul.f32 %v1563, %v1524
    %v1571 = vmul.f32 %v1563, %v1525
    %v1572 = vadd.f32 %v1510, %v1564
    %v1573 = vadd.f32 %v1511, %v1565
    %v1574 = vadd.f32 %v1512, %v1566
    %v1575 = vadd.f32 %v1513, %v1567
    %v1576 = vadd.f32 %v1514, %v1568
    %v1577 = vadd.f32 %v1515, %v1569
    %v1578 = vadd.f32 %v1516, %v1570
    %v1579 = vadd.f32 %v1517, %v1571
    %s1580 = sld [smem:[#allocation2 + $0xd]]
    %v1581 = vstv %s1580
    %v1582 = vmul.f32 %v1581, %v1518
    %v1583 = vmul.f32 %v1581, %v1519
    %v1584 = vmul.f32 %v1581, %v1520
    %v1585 = vmul.f32 %v1581, %v1521
    %v1586 = vmul.f32 %v1581, %v1522
    %v1587 = vmul.f32 %v1581, %v1523
    %v1588 = vmul.f32 %v1581, %v1524
    %v1589 = vmul.f32 %v1581, %v1525
    %1598 = vrot.lane.b32.xlu0 %v1582, 127
    %v1599 = vpop.permute.xlu0 %1598
    %1600 = vrot.lane.b32.xlu0 %v1583, 127
    %v1601 = vpop.permute.xlu0 %1600
    %1602 = vrot.lane.b32.xlu0 %v1584, 127
    %v1603 = vpop.permute.xlu0 %1602
    %1604 = vrot.lane.b32.xlu0 %v1585, 127
    %v1605 = vpop.permute.xlu0 %1604
    %1606 = vrot.lane.b32.xlu0 %v1586, 127
    %v1607 = vpop.permute.xlu0 %1606
    %1608 = vrot.lane.b32.xlu0 %v1587, 127
    %v1609 = vpop.permute.xlu0 %1608
    %1610 = vrot.lane.b32.xlu0 %v1588, 127
    %v1611 = vpop.permute.xlu0 %1610
    %1612 = vrot.lane.b32.xlu0 %v1589, 127
    %v1613 = vpop.permute.xlu0 %1612
    %v1622 = vadd.f32 %v1536, %v1599
    %v1623 = vadd.f32 %v1537, %v1601
    %v1624 = vadd.f32 %v1538, %v1603
    %v1625 = vadd.f32 %v1539, %v1605
    %v1626 = vadd.f32 %v1540, %v1607
    %v1627 = vadd.f32 %v1541, %v1609
    %v1628 = vadd.f32 %v1542, %v1611
    %v1629 = vadd.f32 %v1543, %v1613
    %s1630 = sld [smem:[#allocation2 + $0x28]]
    %v1631 = vstv %s1630
    %v1632 = vmul.f32 %v1631, %v1518
    %v1633 = vmul.f32 %v1631, %v1519
    %v1634 = vmul.f32 %v1631, %v1520
    %v1635 = vmul.f32 %v1631, %v1521
    %v1636 = vmul.f32 %v1631, %v1522
    %v1637 = vmul.f32 %v1631, %v1523
    %v1638 = vmul.f32 %v1631, %v1524
    %v1639 = vmul.f32 %v1631, %v1525
    %1648 = vrot.lane.b32.xlu0 %v1632, 127
    %v1649 = vpop.permute.xlu0 %1648
    %1650 = vrot.lane.b32.xlu0 %v1633, 127
    %v1651 = vpop.permute.xlu0 %1650
    %1652 = vrot.lane.b32.xlu0 %v1634, 127
    %v1653 = vpop.permute.xlu0 %1652
    %1654 = vrot.lane.b32.xlu0 %v1635, 127
    %v1655 = vpop.permute.xlu0 %1654
    %1656 = vrot.lane.b32.xlu0 %v1636, 127
    %v1657 = vpop.permute.xlu0 %1656
    %1658 = vrot.lane.b32.xlu0 %v1637, 127
    %v1659 = vpop.permute.xlu0 %1658
    %1660 = vrot.lane.b32.xlu0 %v1638, 127
    %v1661 = vpop.permute.xlu0 %1660
    %1662 = vrot.lane.b32.xlu0 %v1639, 127
    %v1663 = vpop.permute.xlu0 %1662
    %v1672 = vadd.f32 %v1554, %v1649
    %v1673 = vadd.f32 %v1555, %v1651
    %v1674 = vadd.f32 %v1556, %v1653
    %v1675 = vadd.f32 %v1557, %v1655
    %v1676 = vadd.f32 %v1558, %v1657
    %v1677 = vadd.f32 %v1559, %v1659
    %v1678 = vadd.f32 %v1560, %v1661
    %v1679 = vadd.f32 %v1561, %v1663
    %s1680 = sld [smem:[#allocation2 + $0x43]]
    %v1681 = vstv %s1680
    %v1682 = vmul.f32 %v1681, %v1518
    %v1683 = vmul.f32 %v1681, %v1519
    %v1684 = vmul.f32 %v1681, %v1520
    %v1685 = vmul.f32 %v1681, %v1521
    %v1686 = vmul.f32 %v1681, %v1522
    %v1687 = vmul.f32 %v1681, %v1523
    %v1688 = vmul.f32 %v1681, %v1524
    %v1689 = vmul.f32 %v1681, %v1525
    %1698 = vrot.lane.b32.xlu0 %v1682, 127
    %v1699 = vpop.permute.xlu0 %1698
    %1700 = vrot.lane.b32.xlu0 %v1683, 127
    %v1701 = vpop.permute.xlu0 %1700
    %1702 = vrot.lane.b32.xlu0 %v1684, 127
    %v1703 = vpop.permute.xlu0 %1702
    %1704 = vrot.lane.b32.xlu0 %v1685, 127
    %v1705 = vpop.permute.xlu0 %1704
    %1706 = vrot.lane.b32.xlu0 %v1686, 127
    %v1707 = vpop.permute.xlu0 %1706
    %1708 = vrot.lane.b32.xlu0 %v1687, 127
    %v1709 = vpop.permute.xlu0 %1708
    %1710 = vrot.lane.b32.xlu0 %v1688, 127
    %v1711 = vpop.permute.xlu0 %1710
    %1712 = vrot.lane.b32.xlu0 %v1689, 127
    %v1713 = vpop.permute.xlu0 %1712
    %v1722 = vadd.f32 %v1572, %v1699
    %v1723 = vadd.f32 %v1573, %v1701
    %v1724 = vadd.f32 %v1574, %v1703
    %v1725 = vadd.f32 %v1575, %v1705
    %v1726 = vadd.f32 %v1576, %v1707
    %v1727 = vadd.f32 %v1577, %v1709
    %v1728 = vadd.f32 %v1578, %v1711
    %v1729 = vadd.f32 %v1579, %v1713
    %s1730 = sld [smem:[#allocation2 + $0xe]]
    %v1731 = vstv %s1730
    %v1732 = vmul.f32 %v1731, %v1518
    %v1733 = vmul.f32 %v1731, %v1519
    %v1734 = vmul.f32 %v1731, %v1520
    %v1735 = vmul.f32 %v1731, %v1521
    %v1736 = vmul.f32 %v1731, %v1522
    %v1737 = vmul.f32 %v1731, %v1523
    %v1738 = vmul.f32 %v1731, %v1524
    %v1739 = vmul.f32 %v1731, %v1525
    %1748 = vrot.lane.b32.xlu0 %v1732, 126
    %v1749 = vpop.permute.xlu0 %1748
    %1750 = vrot.lane.b32.xlu0 %v1733, 126
    %v1751 = vpop.permute.xlu0 %1750
    %1752 = vrot.lane.b32.xlu0 %v1734, 126
    %v1753 = vpop.permute.xlu0 %1752
    %1754 = vrot.lane.b32.xlu0 %v1735, 126
    %v1755 = vpop.permute.xlu0 %1754
    %1756 = vrot.lane.b32.xlu0 %v1736, 126
    %v1757 = vpop.permute.xlu0 %1756
    %1758 = vrot.lane.b32.xlu0 %v1737, 126
    %v1759 = vpop.permute.xlu0 %1758
    %1760 = vrot.lane.b32.xlu0 %v1738, 126
    %v1761 = vpop.permute.xlu0 %1760
    %1762 = vrot.lane.b32.xlu0 %v1739, 126
    %v1763 = vpop.permute.xlu0 %1762
    %v1772 = vadd.f32 %v1622, %v1749
    %v1773 = vadd.f32 %v1623, %v1751
    %v1774 = vadd.f32 %v1624, %v1753
    %v1775 = vadd.f32 %v1625, %v1755
    %v1776 = vadd.f32 %v1626, %v1757
    %v1777 = vadd.f32 %v1627, %v1759
    %v1778 = vadd.f32 %v1628, %v1761
    %v1779 = vadd.f32 %v1629, %v1763
    %s1780 = sld [smem:[#allocation2 + $0x29]]
    %v1781 = vstv %s1780
    %v1782 = vmul.f32 %v1781, %v1518
    %v1783 = vmul.f32 %v1781, %v1519
    %v1784 = vmul.f32 %v1781, %v1520
    %v1785 = vmul.f32 %v1781, %v1521
    %v1786 = vmul.f32 %v1781, %v1522
    %v1787 = vmul.f32 %v1781, %v1523
    %v1788 = vmul.f32 %v1781, %v1524
    %v1789 = vmul.f32 %v1781, %v1525
    %1798 = vrot.lane.b32.xlu0 %v1782, 126
    %v1799 = vpop.permute.xlu0 %1798
    %1800 = vrot.lane.b32.xlu0 %v1783, 126
    %v1801 = vpop.permute.xlu0 %1800
    %1802 = vrot.lane.b32.xlu0 %v1784, 126
    %v1803 = vpop.permute.xlu0 %1802
    %1804 = vrot.lane.b32.xlu0 %v1785, 126
    %v1805 = vpop.permute.xlu0 %1804
    %1806 = vrot.lane.b32.xlu0 %v1786, 126
    %v1807 = vpop.permute.xlu0 %1806
    %1808 = vrot.lane.b32.xlu0 %v1787, 126
    %v1809 = vpop.permute.xlu0 %1808
    %1810 = vrot.lane.b32.xlu0 %v1788, 126
    %v1811 = vpop.permute.xlu0 %1810
    %1812 = vrot.lane.b32.xlu0 %v1789, 126
    %v1813 = vpop.permute.xlu0 %1812
    %v1822 = vadd.f32 %v1672, %v1799
    %v1823 = vadd.f32 %v1673, %v1801
    %v1824 = vadd.f32 %v1674, %v1803
    %v1825 = vadd.f32 %v1675, %v1805
    %v1826 = vadd.f32 %v1676, %v1807
    %v1827 = vadd.f32 %v1677, %v1809
    %v1828 = vadd.f32 %v1678, %v1811
    %v1829 = vadd.f32 %v1679, %v1813
    %s1830 = sld [smem:[#allocation2 + $0x44]]
    %v1831 = vstv %s1830
    %v1832 = vmul.f32 %v1831, %v1518
    %v1833 = vmul.f32 %v1831, %v1519
    %v1834 = vmul.f32 %v1831, %v1520
    %v1835 = vmul.f32 %v1831, %v1521
    %v1836 = vmul.f32 %v1831, %v1522
    %v1837 = vmul.f32 %v1831, %v1523
    %v1838 = vmul.f32 %v1831, %v1524
    %v1839 = vmul.f32 %v1831, %v1525
    %1848 = vrot.lane.b32.xlu0 %v1832, 126
    %v1849 = vpop.permute.xlu0 %1848
    %1850 = vrot.lane.b32.xlu0 %v1833, 126
    %v1851 = vpop.permute.xlu0 %1850
    %1852 = vrot.lane.b32.xlu0 %v1834, 126
    %v1853 = vpop.permute.xlu0 %1852
    %1854 = vrot.lane.b32.xlu0 %v1835, 126
    %v1855 = vpop.permute.xlu0 %1854
    %1856 = vrot.lane.b32.xlu0 %v1836, 126
    %v1857 = vpop.permute.xlu0 %1856
    %1858 = vrot.lane.b32.xlu0 %v1837, 126
    %v1859 = vpop.permute.xlu0 %1858
    %1860 = vrot.lane.b32.xlu0 %v1838, 126
    %v1861 = vpop.permute.xlu0 %1860
    %1862 = vrot.lane.b32.xlu0 %v1839, 126
    %v1863 = vpop.permute.xlu0 %1862
    %v1872 = vadd.f32 %v1722, %v1849
    %v1873 = vadd.f32 %v1723, %v1851
    %v1874 = vadd.f32 %v1724, %v1853
    %v1875 = vadd.f32 %v1725, %v1855
    %v1876 = vadd.f32 %v1726, %v1857
    %v1877 = vadd.f32 %v1727, %v1859
    %v1878 = vadd.f32 %v1728, %v1861
    %v1879 = vadd.f32 %v1729, %v1863
    %v1880 = vld [vmem:[%s1155 + $0x2] sm:$0xff]
    %v1881 = vld [vmem:[%s1155 + $0xa] sm:$0xff]
    %v1882 = vld [vmem:[%s1155 + $0x12] sm:$0xff]
    %v1883 = vld [vmem:[%s1155 + $0x1a] sm:$0xff]
    %v1884 = vld [vmem:[%s1155 + $0x22] sm:$0xff]
    %v1885 = vld [vmem:[%s1155 + $0x2a] sm:$0xff]
    %v1886 = vld [vmem:[%s1155 + $0x32] sm:$0xff]
    %v1887 = vld [vmem:[%s1155 + $0x3a] sm:$0xff]
    %s1888 = sld [smem:[#allocation2 + $0xf]]
    %v1889 = vstv %s1888
    %v1890 = vmul.f32 %v1889, %v1880
    %v1891 = vmul.f32 %v1889, %v1881
    %v1892 = vmul.f32 %v1889, %v1882
    %v1893 = vmul.f32 %v1889, %v1883
    %v1894 = vmul.f32 %v1889, %v1884
    %v1895 = vmul.f32 %v1889, %v1885
    %v1896 = vmul.f32 %v1889, %v1886
    %v1897 = vmul.f32 %v1889, %v1887
    %v1898 = vadd.f32 %v1772, %v1890
    %v1899 = vadd.f32 %v1773, %v1891
    %v1900 = vadd.f32 %v1774, %v1892
    %v1901 = vadd.f32 %v1775, %v1893
    %v1902 = vadd.f32 %v1776, %v1894
    %v1903 = vadd.f32 %v1777, %v1895
    %v1904 = vadd.f32 %v1778, %v1896
    %v1905 = vadd.f32 %v1779, %v1897
    %s1906 = sld [smem:[#allocation2 + $0x2a]]
    %v1907 = vstv %s1906
    %v1908 = vmul.f32 %v1907, %v1880
    %v1909 = vmul.f32 %v1907, %v1881
    %v1910 = vmul.f32 %v1907, %v1882
    %v1911 = vmul.f32 %v1907, %v1883
    %v1912 = vmul.f32 %v1907, %v1884
    %v1913 = vmul.f32 %v1907, %v1885
    %v1914 = vmul.f32 %v1907, %v1886
    %v1915 = vmul.f32 %v1907, %v1887
    %v1916 = vadd.f32 %v1822, %v1908
    %v1917 = vadd.f32 %v1823, %v1909
    %v1918 = vadd.f32 %v1824, %v1910
    %v1919 = vadd.f32 %v1825, %v1911
    %v1920 = vadd.f32 %v1826, %v1912
    %v1921 = vadd.f32 %v1827, %v1913
    %v1922 = vadd.f32 %v1828, %v1914
    %v1923 = vadd.f32 %v1829, %v1915
    %s1924 = sld [smem:[#allocation2 + $0x45]]
    %v1925 = vstv %s1924
    %v1926 = vmul.f32 %v1925, %v1880
    %v1927 = vmul.f32 %v1925, %v1881
    %v1928 = vmul.f32 %v1925, %v1882
    %v1929 = vmul.f32 %v1925, %v1883
    %v1930 = vmul.f32 %v1925, %v1884
    %v1931 = vmul.f32 %v1925, %v1885
    %v1932 = vmul.f32 %v1925, %v1886
    %v1933 = vmul.f32 %v1925, %v1887
    %v1934 = vadd.f32 %v1872, %v1926
    %v1935 = vadd.f32 %v1873, %v1927
    %v1936 = vadd.f32 %v1874, %v1928
    %v1937 = vadd.f32 %v1875, %v1929
    %v1938 = vadd.f32 %v1876, %v1930
    %v1939 = vadd.f32 %v1877, %v1931
    %v1940 = vadd.f32 %v1878, %v1932
    %v1941 = vadd.f32 %v1879, %v1933
    %s1942 = sld [smem:[#allocation2 + $0x10]]
    %v1943 = vstv %s1942
    %v1944 = vmul.f32 %v1943, %v1880
    %v1945 = vmul.f32 %v1943, %v1881
    %v1946 = vmul.f32 %v1943, %v1882
    %v1947 = vmul.f32 %v1943, %v1883
    %v1948 = vmul.f32 %v1943, %v1884
    %v1949 = vmul.f32 %v1943, %v1885
    %v1950 = vmul.f32 %v1943, %v1886
    %v1951 = vmul.f32 %v1943, %v1887
    %1960 = vrot.lane.b32.xlu0 %v1944, 127
    %v1961 = vpop.permute.xlu0 %1960
    %1962 = vrot.lane.b32.xlu0 %v1945, 127
    %v1963 = vpop.permute.xlu0 %1962
    %1964 = vrot.lane.b32.xlu0 %v1946, 127
    %v1965 = vpop.permute.xlu0 %1964
    %1966 = vrot.lane.b32.xlu0 %v1947, 127
    %v1967 = vpop.permute.xlu0 %1966
    %1968 = vrot.lane.b32.xlu0 %v1948, 127
    %v1969 = vpop.permute.xlu0 %1968
    %1970 = vrot.lane.b32.xlu0 %v1949, 127
    %v1971 = vpop.permute.xlu0 %1970
    %1972 = vrot.lane.b32.xlu0 %v1950, 127
    %v1973 = vpop.permute.xlu0 %1972
    %1974 = vrot.lane.b32.xlu0 %v1951, 127
    %v1975 = vpop.permute.xlu0 %1974
    %v1984 = vadd.f32 %v1898, %v1961
    %v1985 = vadd.f32 %v1899, %v1963
    %v1986 = vadd.f32 %v1900, %v1965
    %v1987 = vadd.f32 %v1901, %v1967
    %v1988 = vadd.f32 %v1902, %v1969
    %v1989 = vadd.f32 %v1903, %v1971
    %v1990 = vadd.f32 %v1904, %v1973
    %v1991 = vadd.f32 %v1905, %v1975
    %s1992 = sld [smem:[#allocation2 + $0x2b]]
    %v1993 = vstv %s1992
    %v1994 = vmul.f32 %v1993, %v1880
    %v1995 = vmul.f32 %v1993, %v1881
    %v1996 = vmul.f32 %v1993, %v1882
    %v1997 = vmul.f32 %v1993, %v1883
    %v1998 = vmul.f32 %v1993, %v1884
    %v1999 = vmul.f32 %v1993, %v1885
    %v2000 = vmul.f32 %v1993, %v1886
    %v2001 = vmul.f32 %v1993, %v1887
    %2010 = vrot.lane.b32.xlu0 %v1994, 127
    %v2011 = vpop.permute.xlu0 %2010
    %2012 = vrot.lane.b32.xlu0 %v1995, 127
    %v2013 = vpop.permute.xlu0 %2012
    %2014 = vrot.lane.b32.xlu0 %v1996, 127
    %v2015 = vpop.permute.xlu0 %2014
    %2016 = vrot.lane.b32.xlu0 %v1997, 127
    %v2017 = vpop.permute.xlu0 %2016
    %2018 = vrot.lane.b32.xlu0 %v1998, 127
    %v2019 = vpop.permute.xlu0 %2018
    %2020 = vrot.lane.b32.xlu0 %v1999, 127
    %v2021 = vpop.permute.xlu0 %2020
    %2022 = vrot.lane.b32.xlu0 %v2000, 127
    %v2023 = vpop.permute.xlu0 %2022
    %2024 = vrot.lane.b32.xlu0 %v2001, 127
    %v2025 = vpop.permute.xlu0 %2024
    %v2034 = vadd.f32 %v1916, %v2011
    %v2035 = vadd.f32 %v1917, %v2013
    %v2036 = vadd.f32 %v1918, %v2015
    %v2037 = vadd.f32 %v1919, %v2017
    %v2038 = vadd.f32 %v1920, %v2019
    %v2039 = vadd.f32 %v1921, %v2021
    %v2040 = vadd.f32 %v1922, %v2023
    %v2041 = vadd.f32 %v1923, %v2025
    %s2042 = sld [smem:[#allocation2 + $0x46]]
    %v2043 = vstv %s2042
    %v2044 = vmul.f32 %v2043, %v1880
    %v2045 = vmul.f32 %v2043, %v1881
    %v2046 = vmul.f32 %v2043, %v1882
    %v2047 = vmul.f32 %v2043, %v1883
    %v2048 = vmul.f32 %v2043, %v1884
    %v2049 = vmul.f32 %v2043, %v1885
    %v2050 = vmul.f32 %v2043, %v1886
    %v2051 = vmul.f32 %v2043, %v1887
    %2060 = vrot.lane.b32.xlu0 %v2044, 127
    %v2061 = vpop.permute.xlu0 %2060
    %2062 = vrot.lane.b32.xlu0 %v2045, 127
    %v2063 = vpop.permute.xlu0 %2062
    %2064 = vrot.lane.b32.xlu0 %v2046, 127
    %v2065 = vpop.permute.xlu0 %2064
    %2066 = vrot.lane.b32.xlu0 %v2047, 127
    %v2067 = vpop.permute.xlu0 %2066
    %2068 = vrot.lane.b32.xlu0 %v2048, 127
    %v2069 = vpop.permute.xlu0 %2068
    %2070 = vrot.lane.b32.xlu0 %v2049, 127
    %v2071 = vpop.permute.xlu0 %2070
    %2072 = vrot.lane.b32.xlu0 %v2050, 127
    %v2073 = vpop.permute.xlu0 %2072
    %2074 = vrot.lane.b32.xlu0 %v2051, 127
    %v2075 = vpop.permute.xlu0 %2074
    %v2084 = vadd.f32 %v1934, %v2061
    %v2085 = vadd.f32 %v1935, %v2063
    %v2086 = vadd.f32 %v1936, %v2065
    %v2087 = vadd.f32 %v1937, %v2067
    %v2088 = vadd.f32 %v1938, %v2069
    %v2089 = vadd.f32 %v1939, %v2071
    %v2090 = vadd.f32 %v1940, %v2073
    %v2091 = vadd.f32 %v1941, %v2075
    %s2092 = sld [smem:[#allocation2 + $0x11]]
    %v2093 = vstv %s2092
    %v2094 = vmul.f32 %v2093, %v1880
    %v2095 = vmul.f32 %v2093, %v1881
    %v2096 = vmul.f32 %v2093, %v1882
    %v2097 = vmul.f32 %v2093, %v1883
    %v2098 = vmul.f32 %v2093, %v1884
    %v2099 = vmul.f32 %v2093, %v1885
    %v2100 = vmul.f32 %v2093, %v1886
    %v2101 = vmul.f32 %v2093, %v1887
    %2110 = vrot.lane.b32.xlu0 %v2094, 126
    %v2111 = vpop.permute.xlu0 %2110
    %2112 = vrot.lane.b32.xlu0 %v2095, 126
    %v2113 = vpop.permute.xlu0 %2112
    %2114 = vrot.lane.b32.xlu0 %v2096, 126
    %v2115 = vpop.permute.xlu0 %2114
    %2116 = vrot.lane.b32.xlu0 %v2097, 126
    %v2117 = vpop.permute.xlu0 %2116
    %2118 = vrot.lane.b32.xlu0 %v2098, 126
    %v2119 = vpop.permute.xlu0 %2118
    %2120 = vrot.lane.b32.xlu0 %v2099, 126
    %v2121 = vpop.permute.xlu0 %2120
    %2122 = vrot.lane.b32.xlu0 %v2100, 126
    %v2123 = vpop.permute.xlu0 %2122
    %2124 = vrot.lane.b32.xlu0 %v2101, 126
    %v2125 = vpop.permute.xlu0 %2124
    %v2134 = vadd.f32 %v1984, %v2111
    %v2135 = vadd.f32 %v1985, %v2113
    %v2136 = vadd.f32 %v1986, %v2115
    %v2137 = vadd.f32 %v1987, %v2117
    %v2138 = vadd.f32 %v1988, %v2119
    %v2139 = vadd.f32 %v1989, %v2121
    %v2140 = vadd.f32 %v1990, %v2123
    %v2141 = vadd.f32 %v1991, %v2125
    %s2142 = sld [smem:[#allocation2 + $0x2c]]
    %v2143 = vstv %s2142
    %v2144 = vmul.f32 %v2143, %v1880
    %v2145 = vmul.f32 %v2143, %v1881
    %v2146 = vmul.f32 %v2143, %v1882
    %v2147 = vmul.f32 %v2143, %v1883
    %v2148 = vmul.f32 %v2143, %v1884
    %v2149 = vmul.f32 %v2143, %v1885
    %v2150 = vmul.f32 %v2143, %v1886
    %v2151 = vmul.f32 %v2143, %v1887
    %2160 = vrot.lane.b32.xlu0 %v2144, 126
    %v2161 = vpop.permute.xlu0 %2160
    %2162 = vrot.lane.b32.xlu0 %v2145, 126
    %v2163 = vpop.permute.xlu0 %2162
    %2164 = vrot.lane.b32.xlu0 %v2146, 126
    %v2165 = vpop.permute.xlu0 %2164
    %2166 = vrot.lane.b32.xlu0 %v2147, 126
    %v2167 = vpop.permute.xlu0 %2166
    %2168 = vrot.lane.b32.xlu0 %v2148, 126
    %v2169 = vpop.permute.xlu0 %2168
    %2170 = vrot.lane.b32.xlu0 %v2149, 126
    %v2171 = vpop.permute.xlu0 %2170
    %2172 = vrot.lane.b32.xlu0 %v2150, 126
    %v2173 = vpop.permute.xlu0 %2172
    %2174 = vrot.lane.b32.xlu0 %v2151, 126
    %v2175 = vpop.permute.xlu0 %2174
    %v2184 = vadd.f32 %v2034, %v2161
    %v2185 = vadd.f32 %v2035, %v2163
    %v2186 = vadd.f32 %v2036, %v2165
    %v2187 = vadd.f32 %v2037, %v2167
    %v2188 = vadd.f32 %v2038, %v2169
    %v2189 = vadd.f32 %v2039, %v2171
    %v2190 = vadd.f32 %v2040, %v2173
    %v2191 = vadd.f32 %v2041, %v2175
    %s2192 = sld [smem:[#allocation2 + $0x47]]
    %v2193 = vstv %s2192
    %v2194 = vmul.f32 %v2193, %v1880
    %v2195 = vmul.f32 %v2193, %v1881
    %v2196 = vmul.f32 %v2193, %v1882
    %v2197 = vmul.f32 %v2193, %v1883
    %v2198 = vmul.f32 %v2193, %v1884
    %v2199 = vmul.f32 %v2193, %v1885
    %v2200 = vmul.f32 %v2193, %v1886
    %v2201 = vmul.f32 %v2193, %v1887
    %2210 = vrot.lane.b32.xlu0 %v2194, 126
    %v2211 = vpop.permute.xlu0 %2210
    %2212 = vrot.lane.b32.xlu0 %v2195, 126
    %v2213 = vpop.permute.xlu0 %2212
    %2214 = vrot.lane.b32.xlu0 %v2196, 126
    %v2215 = vpop.permute.xlu0 %2214
    %2216 = vrot.lane.b32.xlu0 %v2197, 126
    %v2217 = vpop.permute.xlu0 %2216
    %2218 = vrot.lane.b32.xlu0 %v2198, 126
    %v2219 = vpop.permute.xlu0 %2218
    %2220 = vrot.lane.b32.xlu0 %v2199, 126
    %v2221 = vpop.permute.xlu0 %2220
    %2222 = vrot.lane.b32.xlu0 %v2200, 126
    %v2223 = vpop.permute.xlu0 %2222
    %2224 = vrot.lane.b32.xlu0 %v2201, 126
    %v2225 = vpop.permute.xlu0 %2224
    %v2234 = vadd.f32 %v2084, %v2211
    %v2235 = vadd.f32 %v2085, %v2213
    %v2236 = vadd.f32 %v2086, %v2215
    %v2237 = vadd.f32 %v2087, %v2217
    %v2238 = vadd.f32 %v2088, %v2219
    %v2239 = vadd.f32 %v2089, %v2221
    %v2240 = vadd.f32 %v2090, %v2223
    %v2241 = vadd.f32 %v2091, %v2225
    %s2242 = scalar_lea.vmem %s4, 144
    %v2243 = vld [vmem:[%s2242] sm:$0xff]
    %v2244 = vld [vmem:[%s2242 + $0x8] sm:$0xff]
    %v2245 = vld [vmem:[%s2242 + $0x10] sm:$0xff]
    %v2246 = vld [vmem:[%s2242 + $0x18] sm:$0xff]
    %v2247 = vld [vmem:[%s2242 + $0x20] sm:$0xff]
    %v2248 = vld [vmem:[%s2242 + $0x28] sm:$0xff]
    %v2249 = vld [vmem:[%s2242 + $0x30] sm:$0xff]
    %v2250 = vld [vmem:[%s2242 + $0x38] sm:$0xff]
    %s2251 = sld [smem:[#allocation2 + $0x12]]
    %v2252 = vstv %s2251
    %v2253 = vmul.f32 %v2252, %v2243
    %v2254 = vmul.f32 %v2252, %v2244
    %v2255 = vmul.f32 %v2252, %v2245
    %v2256 = vmul.f32 %v2252, %v2246
    %v2257 = vmul.f32 %v2252, %v2247
    %v2258 = vmul.f32 %v2252, %v2248
    %v2259 = vmul.f32 %v2252, %v2249
    %v2260 = vmul.f32 %v2252, %v2250
    %v2261 = vadd.f32 %v2134, %v2253
    %v2262 = vadd.f32 %v2135, %v2254
    %v2263 = vadd.f32 %v2136, %v2255
    %v2264 = vadd.f32 %v2137, %v2256
    %v2265 = vadd.f32 %v2138, %v2257
    %v2266 = vadd.f32 %v2139, %v2258
    %v2267 = vadd.f32 %v2140, %v2259
    %v2268 = vadd.f32 %v2141, %v2260
    %s2269 = sld [smem:[#allocation2 + $0x2d]]
    %v2270 = vstv %s2269
    %v2271 = vmul.f32 %v2270, %v2243
    %v2272 = vmul.f32 %v2270, %v2244
    %v2273 = vmul.f32 %v2270, %v2245
    %v2274 = vmul.f32 %v2270, %v2246
    %v2275 = vmul.f32 %v2270, %v2247
    %v2276 = vmul.f32 %v2270, %v2248
    %v2277 = vmul.f32 %v2270, %v2249
    %v2278 = vmul.f32 %v2270, %v2250
    %v2279 = vadd.f32 %v2184, %v2271
    %v2280 = vadd.f32 %v2185, %v2272
    %v2281 = vadd.f32 %v2186, %v2273
    %v2282 = vadd.f32 %v2187, %v2274
    %v2283 = vadd.f32 %v2188, %v2275
    %v2284 = vadd.f32 %v2189, %v2276
    %v2285 = vadd.f32 %v2190, %v2277
    %v2286 = vadd.f32 %v2191, %v2278
    %s2287 = sld [smem:[#allocation2 + $0x48]]
    %v2288 = vstv %s2287
    %v2289 = vmul.f32 %v2288, %v2243
    %v2290 = vmul.f32 %v2288, %v2244
    %v2291 = vmul.f32 %v2288, %v2245
    %v2292 = vmul.f32 %v2288, %v2246
    %v2293 = vmul.f32 %v2288, %v2247
    %v2294 = vmul.f32 %v2288, %v2248
    %v2295 = vmul.f32 %v2288, %v2249
    %v2296 = vmul.f32 %v2288, %v2250
    %v2297 = vadd.f32 %v2234, %v2289
    %v2298 = vadd.f32 %v2235, %v2290
    %v2299 = vadd.f32 %v2236, %v2291
    %v2300 = vadd.f32 %v2237, %v2292
    %v2301 = vadd.f32 %v2238, %v2293
    %v2302 = vadd.f32 %v2239, %v2294
    %v2303 = vadd.f32 %v2240, %v2295
    %v2304 = vadd.f32 %v2241, %v2296
    %s2305 = sld [smem:[#allocation2 + $0x13]]
    %v2306 = vstv %s2305
    %v2307 = vmul.f32 %v2306, %v2243
    %v2308 = vmul.f32 %v2306, %v2244
    %v2309 = vmul.f32 %v2306, %v2245
    %v2310 = vmul.f32 %v2306, %v2246
    %v2311 = vmul.f32 %v2306, %v2247
    %v2312 = vmul.f32 %v2306, %v2248
    %v2313 = vmul.f32 %v2306, %v2249
    %v2314 = vmul.f32 %v2306, %v2250
    %2323 = vrot.lane.b32.xlu0 %v2307, 127
    %v2324 = vpop.permute.xlu0 %2323
    %2325 = vrot.lane.b32.xlu0 %v2308, 127
    %v2326 = vpop.permute.xlu0 %2325
    %2327 = vrot.lane.b32.xlu0 %v2309, 127
    %v2328 = vpop.permute.xlu0 %2327
    %2329 = vrot.lane.b32.xlu0 %v2310, 127
    %v2330 = vpop.permute.xlu0 %2329
    %2331 = vrot.lane.b32.xlu0 %v2311, 127
    %v2332 = vpop.permute.xlu0 %2331
    %2333 = vrot.lane.b32.xlu0 %v2312, 127
    %v2334 = vpop.permute.xlu0 %2333
    %2335 = vrot.lane.b32.xlu0 %v2313, 127
    %v2336 = vpop.permute.xlu0 %2335
    %2337 = vrot.lane.b32.xlu0 %v2314, 127
    %v2338 = vpop.permute.xlu0 %2337
    %v2347 = vadd.f32 %v2261, %v2324
    %v2348 = vadd.f32 %v2262, %v2326
    %v2349 = vadd.f32 %v2263, %v2328
    %v2350 = vadd.f32 %v2264, %v2330
    %v2351 = vadd.f32 %v2265, %v2332
    %v2352 = vadd.f32 %v2266, %v2334
    %v2353 = vadd.f32 %v2267, %v2336
    %v2354 = vadd.f32 %v2268, %v2338
    %s2355 = sld [smem:[#allocation2 + $0x2e]]
    %v2356 = vstv %s2355
    %v2357 = vmul.f32 %v2356, %v2243
    %v2358 = vmul.f32 %v2356, %v2244
    %v2359 = vmul.f32 %v2356, %v2245
    %v2360 = vmul.f32 %v2356, %v2246
    %v2361 = vmul.f32 %v2356, %v2247
    %v2362 = vmul.f32 %v2356, %v2248
    %v2363 = vmul.f32 %v2356, %v2249
    %v2364 = vmul.f32 %v2356, %v2250
    %2373 = vrot.lane.b32.xlu0 %v2357, 127
    %v2374 = vpop.permute.xlu0 %2373
    %2375 = vrot.lane.b32.xlu0 %v2358, 127
    %v2376 = vpop.permute.xlu0 %2375
    %2377 = vrot.lane.b32.xlu0 %v2359, 127
    %v2378 = vpop.permute.xlu0 %2377
    %2379 = vrot.lane.b32.xlu0 %v2360, 127
    %v2380 = vpop.permute.xlu0 %2379
    %2381 = vrot.lane.b32.xlu0 %v2361, 127
    %v2382 = vpop.permute.xlu0 %2381
    %2383 = vrot.lane.b32.xlu0 %v2362, 127
    %v2384 = vpop.permute.xlu0 %2383
    %2385 = vrot.lane.b32.xlu0 %v2363, 127
    %v2386 = vpop.permute.xlu0 %2385
    %2387 = vrot.lane.b32.xlu0 %v2364, 127
    %v2388 = vpop.permute.xlu0 %2387
    %v2397 = vadd.f32 %v2279, %v2374
    %v2398 = vadd.f32 %v2280, %v2376
    %v2399 = vadd.f32 %v2281, %v2378
    %v2400 = vadd.f32 %v2282, %v2380
    %v2401 = vadd.f32 %v2283, %v2382
    %v2402 = vadd.f32 %v2284, %v2384
    %v2403 = vadd.f32 %v2285, %v2386
    %v2404 = vadd.f32 %v2286, %v2388
    %s2405 = sld [smem:[#allocation2 + $0x49]]
    %v2406 = vstv %s2405
    %v2407 = vmul.f32 %v2406, %v2243
    %v2408 = vmul.f32 %v2406, %v2244
    %v2409 = vmul.f32 %v2406, %v2245
    %v2410 = vmul.f32 %v2406, %v2246
    %v2411 = vmul.f32 %v2406, %v2247
    %v2412 = vmul.f32 %v2406, %v2248
    %v2413 = vmul.f32 %v2406, %v2249
    %v2414 = vmul.f32 %v2406, %v2250
    %2423 = vrot.lane.b32.xlu0 %v2407, 127
    %v2424 = vpop.permute.xlu0 %2423
    %2425 = vrot.lane.b32.xlu0 %v2408, 127
    %v2426 = vpop.permute.xlu0 %2425
    %2427 = vrot.lane.b32.xlu0 %v2409, 127
    %v2428 = vpop.permute.xlu0 %2427
    %2429 = vrot.lane.b32.xlu0 %v2410, 127
    %v2430 = vpop.permute.xlu0 %2429
    %2431 = vrot.lane.b32.xlu0 %v2411, 127
    %v2432 = vpop.permute.xlu0 %2431
    %2433 = vrot.lane.b32.xlu0 %v2412, 127
    %v2434 = vpop.permute.xlu0 %2433
    %2435 = vrot.lane.b32.xlu0 %v2413, 127
    %v2436 = vpop.permute.xlu0 %2435
    %2437 = vrot.lane.b32.xlu0 %v2414, 127
    %v2438 = vpop.permute.xlu0 %2437
    %v2447 = vadd.f32 %v2297, %v2424
    %v2448 = vadd.f32 %v2298, %v2426
    %v2449 = vadd.f32 %v2299, %v2428
    %v2450 = vadd.f32 %v2300, %v2430
    %v2451 = vadd.f32 %v2301, %v2432
    %v2452 = vadd.f32 %v2302, %v2434
    %v2453 = vadd.f32 %v2303, %v2436
    %v2454 = vadd.f32 %v2304, %v2438
    %s2455 = sld [smem:[#allocation2 + $0x14]]
    %v2456 = vstv %s2455
    %v2457 = vmul.f32 %v2456, %v2243
    %v2458 = vmul.f32 %v2456, %v2244
    %v2459 = vmul.f32 %v2456, %v2245
    %v2460 = vmul.f32 %v2456, %v2246
    %v2461 = vmul.f32 %v2456, %v2247
    %v2462 = vmul.f32 %v2456, %v2248
    %v2463 = vmul.f32 %v2456, %v2249
    %v2464 = vmul.f32 %v2456, %v2250
    %2473 = vrot.lane.b32.xlu0 %v2457, 126
    %v2474 = vpop.permute.xlu0 %2473
    %2475 = vrot.lane.b32.xlu0 %v2458, 126
    %v2476 = vpop.permute.xlu0 %2475
    %2477 = vrot.lane.b32.xlu0 %v2459, 126
    %v2478 = vpop.permute.xlu0 %2477
    %2479 = vrot.lane.b32.xlu0 %v2460, 126
    %v2480 = vpop.permute.xlu0 %2479
    %2481 = vrot.lane.b32.xlu0 %v2461, 126
    %v2482 = vpop.permute.xlu0 %2481
    %2483 = vrot.lane.b32.xlu0 %v2462, 126
    %v2484 = vpop.permute.xlu0 %2483
    %2485 = vrot.lane.b32.xlu0 %v2463, 126
    %v2486 = vpop.permute.xlu0 %2485
    %2487 = vrot.lane.b32.xlu0 %v2464, 126
    %v2488 = vpop.permute.xlu0 %2487
    %v2497 = vadd.f32 %v2347, %v2474
    %v2498 = vadd.f32 %v2348, %v2476
    %v2499 = vadd.f32 %v2349, %v2478
    %v2500 = vadd.f32 %v2350, %v2480
    %v2501 = vadd.f32 %v2351, %v2482
    %v2502 = vadd.f32 %v2352, %v2484
    %v2503 = vadd.f32 %v2353, %v2486
    %v2504 = vadd.f32 %v2354, %v2488
    %s2505 = sld [smem:[#allocation2 + $0x2f]]
    %v2506 = vstv %s2505
    %v2507 = vmul.f32 %v2506, %v2243
    %v2508 = vmul.f32 %v2506, %v2244
    %v2509 = vmul.f32 %v2506, %v2245
    %v2510 = vmul.f32 %v2506, %v2246
    %v2511 = vmul.f32 %v2506, %v2247
    %v2512 = vmul.f32 %v2506, %v2248
    %v2513 = vmul.f32 %v2506, %v2249
    %v2514 = vmul.f32 %v2506, %v2250
    %2523 = vrot.lane.b32.xlu0 %v2507, 126
    %v2524 = vpop.permute.xlu0 %2523
    %2525 = vrot.lane.b32.xlu0 %v2508, 126
    %v2526 = vpop.permute.xlu0 %2525
    %2527 = vrot.lane.b32.xlu0 %v2509, 126
    %v2528 = vpop.permute.xlu0 %2527
    %2529 = vrot.lane.b32.xlu0 %v2510, 126
    %v2530 = vpop.permute.xlu0 %2529
    %2531 = vrot.lane.b32.xlu0 %v2511, 126
    %v2532 = vpop.permute.xlu0 %2531
    %2533 = vrot.lane.b32.xlu0 %v2512, 126
    %v2534 = vpop.permute.xlu0 %2533
    %2535 = vrot.lane.b32.xlu0 %v2513, 126
    %v2536 = vpop.permute.xlu0 %2535
    %2537 = vrot.lane.b32.xlu0 %v2514, 126
    %v2538 = vpop.permute.xlu0 %2537
    %v2547 = vadd.f32 %v2397, %v2524
    %v2548 = vadd.f32 %v2398, %v2526
    %v2549 = vadd.f32 %v2399, %v2528
    %v2550 = vadd.f32 %v2400, %v2530
    %v2551 = vadd.f32 %v2401, %v2532
    %v2552 = vadd.f32 %v2402, %v2534
    %v2553 = vadd.f32 %v2403, %v2536
    %v2554 = vadd.f32 %v2404, %v2538
    %s2555 = sld [smem:[#allocation2 + $0x4a]]
    %v2556 = vstv %s2555
    %v2557 = vmul.f32 %v2556, %v2243
    %v2558 = vmul.f32 %v2556, %v2244
    %v2559 = vmul.f32 %v2556, %v2245
    %v2560 = vmul.f32 %v2556, %v2246
    %v2561 = vmul.f32 %v2556, %v2247
    %v2562 = vmul.f32 %v2556, %v2248
    %v2563 = vmul.f32 %v2556, %v2249
    %v2564 = vmul.f32 %v2556, %v2250
    %2573 = vrot.lane.b32.xlu0 %v2557, 126
    %v2574 = vpop.permute.xlu0 %2573
    %2575 = vrot.lane.b32.xlu0 %v2558, 126
    %v2576 = vpop.permute.xlu0 %2575
    %2577 = vrot.lane.b32.xlu0 %v2559, 126
    %v2578 = vpop.permute.xlu0 %2577
    %2579 = vrot.lane.b32.xlu0 %v2560, 126
    %v2580 = vpop.permute.xlu0 %2579
    %2581 = vrot.lane.b32.xlu0 %v2561, 126
    %v2582 = vpop.permute.xlu0 %2581
    %2583 = vrot.lane.b32.xlu0 %v2562, 126
    %v2584 = vpop.permute.xlu0 %2583
    %2585 = vrot.lane.b32.xlu0 %v2563, 126
    %v2586 = vpop.permute.xlu0 %2585
    %2587 = vrot.lane.b32.xlu0 %v2564, 126
    %v2588 = vpop.permute.xlu0 %2587
    %v2597 = vadd.f32 %v2447, %v2574
    %v2598 = vadd.f32 %v2448, %v2576
    %v2599 = vadd.f32 %v2449, %v2578
    %v2600 = vadd.f32 %v2450, %v2580
    %v2601 = vadd.f32 %v2451, %v2582
    %v2602 = vadd.f32 %v2452, %v2584
    %v2603 = vadd.f32 %v2453, %v2586
    %v2604 = vadd.f32 %v2454, %v2588
    %v2605 = vld [vmem:[%s2242 + $0x1] sm:$0xff]
    %v2606 = vld [vmem:[%s2242 + $0x9] sm:$0xff]
    %v2607 = vld [vmem:[%s2242 + $0x11] sm:$0xff]
    %v2608 = vld [vmem:[%s2242 + $0x19] sm:$0xff]
    %v2609 = vld [vmem:[%s2242 + $0x21] sm:$0xff]
    %v2610 = vld [vmem:[%s2242 + $0x29] sm:$0xff]
    %v2611 = vld [vmem:[%s2242 + $0x31] sm:$0xff]
    %v2612 = vld [vmem:[%s2242 + $0x39] sm:$0xff]
    %s2613 = sld [smem:[#allocation2 + $0x15]]
    %v2614 = vstv %s2613
    %v2615 = vmul.f32 %v2614, %v2605
    %v2616 = vmul.f32 %v2614, %v2606
    %v2617 = vmul.f32 %v2614, %v2607
    %v2618 = vmul.f32 %v2614, %v2608
    %v2619 = vmul.f32 %v2614, %v2609
    %v2620 = vmul.f32 %v2614, %v2610
    %v2621 = vmul.f32 %v2614, %v2611
    %v2622 = vmul.f32 %v2614, %v2612
    %v2623 = vadd.f32 %v2497, %v2615
    %v2624 = vadd.f32 %v2498, %v2616
    %v2625 = vadd.f32 %v2499, %v2617
    %v2626 = vadd.f32 %v2500, %v2618
    %v2627 = vadd.f32 %v2501, %v2619
    %v2628 = vadd.f32 %v2502, %v2620
    %v2629 = vadd.f32 %v2503, %v2621
    %v2630 = vadd.f32 %v2504, %v2622
    %s2631 = sld [smem:[#allocation2 + $0x30]]
    %v2632 = vstv %s2631
    %v2633 = vmul.f32 %v2632, %v2605
    %v2634 = vmul.f32 %v2632, %v2606
    %v2635 = vmul.f32 %v2632, %v2607
    %v2636 = vmul.f32 %v2632, %v2608
    %v2637 = vmul.f32 %v2632, %v2609
    %v2638 = vmul.f32 %v2632, %v2610
    %v2639 = vmul.f32 %v2632, %v2611
    %v2640 = vmul.f32 %v2632, %v2612
    %v2641 = vadd.f32 %v2547, %v2633
    %v2642 = vadd.f32 %v2548, %v2634
    %v2643 = vadd.f32 %v2549, %v2635
    %v2644 = vadd.f32 %v2550, %v2636
    %v2645 = vadd.f32 %v2551, %v2637
    %v2646 = vadd.f32 %v2552, %v2638
    %v2647 = vadd.f32 %v2553, %v2639
    %v2648 = vadd.f32 %v2554, %v2640
    %s2649 = sld [smem:[#allocation2 + $0x4b]]
    %v2650 = vstv %s2649
    %v2651 = vmul.f32 %v2650, %v2605
    %v2652 = vmul.f32 %v2650, %v2606
    %v2653 = vmul.f32 %v2650, %v2607
    %v2654 = vmul.f32 %v2650, %v2608
    %v2655 = vmul.f32 %v2650, %v2609
    %v2656 = vmul.f32 %v2650, %v2610
    %v2657 = vmul.f32 %v2650, %v2611
    %v2658 = vmul.f32 %v2650, %v2612
    %v2659 = vadd.f32 %v2597, %v2651
    %v2660 = vadd.f32 %v2598, %v2652
    %v2661 = vadd.f32 %v2599, %v2653
    %v2662 = vadd.f32 %v2600, %v2654
    %v2663 = vadd.f32 %v2601, %v2655
    %v2664 = vadd.f32 %v2602, %v2656
    %v2665 = vadd.f32 %v2603, %v2657
    %v2666 = vadd.f32 %v2604, %v2658
    %s2667 = sld [smem:[#allocation2 + $0x16]]
    %v2668 = vstv %s2667
    %v2669 = vmul.f32 %v2668, %v2605
    %v2670 = vmul.f32 %v2668, %v2606
    %v2671 = vmul.f32 %v2668, %v2607
    %v2672 = vmul.f32 %v2668, %v2608
    %v2673 = vmul.f32 %v2668, %v2609
    %v2674 = vmul.f32 %v2668, %v2610
    %v2675 = vmul.f32 %v2668, %v2611
    %v2676 = vmul.f32 %v2668, %v2612
    %2685 = vrot.lane.b32.xlu0 %v2669, 127
    %v2686 = vpop.permute.xlu0 %2685
    %2687 = vrot.lane.b32.xlu0 %v2670, 127
    %v2688 = vpop.permute.xlu0 %2687
    %2689 = vrot.lane.b32.xlu0 %v2671, 127
    %v2690 = vpop.permute.xlu0 %2689
    %2691 = vrot.lane.b32.xlu0 %v2672, 127
    %v2692 = vpop.permute.xlu0 %2691
    %2693 = vrot.lane.b32.xlu0 %v2673, 127
    %v2694 = vpop.permute.xlu0 %2693
    %2695 = vrot.lane.b32.xlu0 %v2674, 127
    %v2696 = vpop.permute.xlu0 %2695
    %2697 = vrot.lane.b32.xlu0 %v2675, 127
    %v2698 = vpop.permute.xlu0 %2697
    %2699 = vrot.lane.b32.xlu0 %v2676, 127
    %v2700 = vpop.permute.xlu0 %2699
    %v2709 = vadd.f32 %v2623, %v2686
    %v2710 = vadd.f32 %v2624, %v2688
    %v2711 = vadd.f32 %v2625, %v2690
    %v2712 = vadd.f32 %v2626, %v2692
    %v2713 = vadd.f32 %v2627, %v2694
    %v2714 = vadd.f32 %v2628, %v2696
    %v2715 = vadd.f32 %v2629, %v2698
    %v2716 = vadd.f32 %v2630, %v2700
    %s2717 = sld [smem:[#allocation2 + $0x31]]
    %v2718 = vstv %s2717
    %v2719 = vmul.f32 %v2718, %v2605
    %v2720 = vmul.f32 %v2718, %v2606
    %v2721 = vmul.f32 %v2718, %v2607
    %v2722 = vmul.f32 %v2718, %v2608
    %v2723 = vmul.f32 %v2718, %v2609
    %v2724 = vmul.f32 %v2718, %v2610
    %v2725 = vmul.f32 %v2718, %v2611
    %v2726 = vmul.f32 %v2718, %v2612
    %2735 = vrot.lane.b32.xlu0 %v2719, 127
    %v2736 = vpop.permute.xlu0 %2735
    %2737 = vrot.lane.b32.xlu0 %v2720, 127
    %v2738 = vpop.permute.xlu0 %2737
    %2739 = vrot.lane.b32.xlu0 %v2721, 127
    %v2740 = vpop.permute.xlu0 %2739
    %2741 = vrot.lane.b32.xlu0 %v2722, 127
    %v2742 = vpop.permute.xlu0 %2741
    %2743 = vrot.lane.b32.xlu0 %v2723, 127
    %v2744 = vpop.permute.xlu0 %2743
    %2745 = vrot.lane.b32.xlu0 %v2724, 127
    %v2746 = vpop.permute.xlu0 %2745
    %2747 = vrot.lane.b32.xlu0 %v2725, 127
    %v2748 = vpop.permute.xlu0 %2747
    %2749 = vrot.lane.b32.xlu0 %v2726, 127
    %v2750 = vpop.permute.xlu0 %2749
    %v2759 = vadd.f32 %v2641, %v2736
    %v2760 = vadd.f32 %v2642, %v2738
    %v2761 = vadd.f32 %v2643, %v2740
    %v2762 = vadd.f32 %v2644, %v2742
    %v2763 = vadd.f32 %v2645, %v2744
    %v2764 = vadd.f32 %v2646, %v2746
    %v2765 = vadd.f32 %v2647, %v2748
    %v2766 = vadd.f32 %v2648, %v2750
    %s2767 = sld [smem:[#allocation2 + $0x4c]]
    %v2768 = vstv %s2767
    %v2769 = vmul.f32 %v2768, %v2605
    %v2770 = vmul.f32 %v2768, %v2606
    %v2771 = vmul.f32 %v2768, %v2607
    %v2772 = vmul.f32 %v2768, %v2608
    %v2773 = vmul.f32 %v2768, %v2609
    %v2774 = vmul.f32 %v2768, %v2610
    %v2775 = vmul.f32 %v2768, %v2611
    %v2776 = vmul.f32 %v2768, %v2612
    %2785 = vrot.lane.b32.xlu0 %v2769, 127
    %v2786 = vpop.permute.xlu0 %2785
    %2787 = vrot.lane.b32.xlu0 %v2770, 127
    %v2788 = vpop.permute.xlu0 %2787
    %2789 = vrot.lane.b32.xlu0 %v2771, 127
    %v2790 = vpop.permute.xlu0 %2789
    %2791 = vrot.lane.b32.xlu0 %v2772, 127
    %v2792 = vpop.permute.xlu0 %2791
    %2793 = vrot.lane.b32.xlu0 %v2773, 127
    %v2794 = vpop.permute.xlu0 %2793
    %2795 = vrot.lane.b32.xlu0 %v2774, 127
    %v2796 = vpop.permute.xlu0 %2795
    %2797 = vrot.lane.b32.xlu0 %v2775, 127
    %v2798 = vpop.permute.xlu0 %2797
    %2799 = vrot.lane.b32.xlu0 %v2776, 127
    %v2800 = vpop.permute.xlu0 %2799
    %v2809 = vadd.f32 %v2659, %v2786
    %v2810 = vadd.f32 %v2660, %v2788
    %v2811 = vadd.f32 %v2661, %v2790
    %v2812 = vadd.f32 %v2662, %v2792
    %v2813 = vadd.f32 %v2663, %v2794
    %v2814 = vadd.f32 %v2664, %v2796
    %v2815 = vadd.f32 %v2665, %v2798
    %v2816 = vadd.f32 %v2666, %v2800
    %s2817 = sld [smem:[#allocation2 + $0x17]]
    %v2818 = vstv %s2817
    %v2819 = vmul.f32 %v2818, %v2605
    %v2820 = vmul.f32 %v2818, %v2606
    %v2821 = vmul.f32 %v2818, %v2607
    %v2822 = vmul.f32 %v2818, %v2608
    %v2823 = vmul.f32 %v2818, %v2609
    %v2824 = vmul.f32 %v2818, %v2610
    %v2825 = vmul.f32 %v2818, %v2611
    %v2826 = vmul.f32 %v2818, %v2612
    %2835 = vrot.lane.b32.xlu0 %v2819, 126
    %v2836 = vpop.permute.xlu0 %2835
    %2837 = vrot.lane.b32.xlu0 %v2820, 126
    %v2838 = vpop.permute.xlu0 %2837
    %2839 = vrot.lane.b32.xlu0 %v2821, 126
    %v2840 = vpop.permute.xlu0 %2839
    %2841 = vrot.lane.b32.xlu0 %v2822, 126
    %v2842 = vpop.permute.xlu0 %2841
    %2843 = vrot.lane.b32.xlu0 %v2823, 126
    %v2844 = vpop.permute.xlu0 %2843
    %2845 = vrot.lane.b32.xlu0 %v2824, 126
    %v2846 = vpop.permute.xlu0 %2845
    %2847 = vrot.lane.b32.xlu0 %v2825, 126
    %v2848 = vpop.permute.xlu0 %2847
    %2849 = vrot.lane.b32.xlu0 %v2826, 126
    %v2850 = vpop.permute.xlu0 %2849
    %v2859 = vadd.f32 %v2709, %v2836
    %v2860 = vadd.f32 %v2710, %v2838
    %v2861 = vadd.f32 %v2711, %v2840
    %v2862 = vadd.f32 %v2712, %v2842
    %v2863 = vadd.f32 %v2713, %v2844
    %v2864 = vadd.f32 %v2714, %v2846
    %v2865 = vadd.f32 %v2715, %v2848
    %v2866 = vadd.f32 %v2716, %v2850
    %s2867 = sld [smem:[#allocation2 + $0x32]]
    %v2868 = vstv %s2867
    %v2869 = vmul.f32 %v2868, %v2605
    %v2870 = vmul.f32 %v2868, %v2606
    %v2871 = vmul.f32 %v2868, %v2607
    %v2872 = vmul.f32 %v2868, %v2608
    %v2873 = vmul.f32 %v2868, %v2609
    %v2874 = vmul.f32 %v2868, %v2610
    %v2875 = vmul.f32 %v2868, %v2611
    %v2876 = vmul.f32 %v2868, %v2612
    %2885 = vrot.lane.b32.xlu0 %v2869, 126
    %v2886 = vpop.permute.xlu0 %2885
    %2887 = vrot.lane.b32.xlu0 %v2870, 126
    %v2888 = vpop.permute.xlu0 %2887
    %2889 = vrot.lane.b32.xlu0 %v2871, 126
    %v2890 = vpop.permute.xlu0 %2889
    %2891 = vrot.lane.b32.xlu0 %v2872, 126
    %v2892 = vpop.permute.xlu0 %2891
    %2893 = vrot.lane.b32.xlu0 %v2873, 126
    %v2894 = vpop.permute.xlu0 %2893
    %2895 = vrot.lane.b32.xlu0 %v2874, 126
    %v2896 = vpop.permute.xlu0 %2895
    %2897 = vrot.lane.b32.xlu0 %v2875, 126
    %v2898 = vpop.permute.xlu0 %2897
    %2899 = vrot.lane.b32.xlu0 %v2876, 126
    %v2900 = vpop.permute.xlu0 %2899
    %v2909 = vadd.f32 %v2759, %v2886
    %v2910 = vadd.f32 %v2760, %v2888
    %v2911 = vadd.f32 %v2761, %v2890
    %v2912 = vadd.f32 %v2762, %v2892
    %v2913 = vadd.f32 %v2763, %v2894
    %v2914 = vadd.f32 %v2764, %v2896
    %v2915 = vadd.f32 %v2765, %v2898
    %v2916 = vadd.f32 %v2766, %v2900
    %s2917 = sld [smem:[#allocation2 + $0x4d]]
    %v2918 = vstv %s2917
    %v2919 = vmul.f32 %v2918, %v2605
    %v2920 = vmul.f32 %v2918, %v2606
    %v2921 = vmul.f32 %v2918, %v2607
    %v2922 = vmul.f32 %v2918, %v2608
    %v2923 = vmul.f32 %v2918, %v2609
    %v2924 = vmul.f32 %v2918, %v2610
    %v2925 = vmul.f32 %v2918, %v2611
    %v2926 = vmul.f32 %v2918, %v2612
    %2935 = vrot.lane.b32.xlu0 %v2919, 126
    %v2936 = vpop.permute.xlu0 %2935
    %2937 = vrot.lane.b32.xlu0 %v2920, 126
    %v2938 = vpop.permute.xlu0 %2937
    %2939 = vrot.lane.b32.xlu0 %v2921, 126
    %v2940 = vpop.permute.xlu0 %2939
    %2941 = vrot.lane.b32.xlu0 %v2922, 126
    %v2942 = vpop.permute.xlu0 %2941
    %2943 = vrot.lane.b32.xlu0 %v2923, 126
    %v2944 = vpop.permute.xlu0 %2943
    %2945 = vrot.lane.b32.xlu0 %v2924, 126
    %v2946 = vpop.permute.xlu0 %2945
    %2947 = vrot.lane.b32.xlu0 %v2925, 126
    %v2948 = vpop.permute.xlu0 %2947
    %2949 = vrot.lane.b32.xlu0 %v2926, 126
    %v2950 = vpop.permute.xlu0 %2949
    %v2959 = vadd.f32 %v2809, %v2936
    %v2960 = vadd.f32 %v2810, %v2938
    %v2961 = vadd.f32 %v2811, %v2940
    %v2962 = vadd.f32 %v2812, %v2942
    %v2963 = vadd.f32 %v2813, %v2944
    %v2964 = vadd.f32 %v2814, %v2946
    %v2965 = vadd.f32 %v2815, %v2948
    %v2966 = vadd.f32 %v2816, %v2950
    %v2967 = vld [vmem:[%s2242 + $0x2] sm:$0xff]
    %v2968 = vld [vmem:[%s2242 + $0xa] sm:$0xff]
    %v2969 = vld [vmem:[%s2242 + $0x12] sm:$0xff]
    %v2970 = vld [vmem:[%s2242 + $0x1a] sm:$0xff]
    %v2971 = vld [vmem:[%s2242 + $0x22] sm:$0xff]
    %v2972 = vld [vmem:[%s2242 + $0x2a] sm:$0xff]
    %v2973 = vld [vmem:[%s2242 + $0x32] sm:$0xff]
    %v2974 = vld [vmem:[%s2242 + $0x3a] sm:$0xff]
    %s2975 = sld [smem:[#allocation2 + $0x18]]
    %v2976 = vstv %s2975
    %v2977 = vmul.f32 %v2976, %v2967
    %v2978 = vmul.f32 %v2976, %v2968
    %v2979 = vmul.f32 %v2976, %v2969
    %v2980 = vmul.f32 %v2976, %v2970
    %v2981 = vmul.f32 %v2976, %v2971
    %v2982 = vmul.f32 %v2976, %v2972
    %v2983 = vmul.f32 %v2976, %v2973
    %v2984 = vmul.f32 %v2976, %v2974
    %v2985 = vadd.f32 %v2859, %v2977
    %v2986 = vadd.f32 %v2860, %v2978
    %v2987 = vadd.f32 %v2861, %v2979
    %v2988 = vadd.f32 %v2862, %v2980
    %v2989 = vadd.f32 %v2863, %v2981
    %v2990 = vadd.f32 %v2864, %v2982
    %v2991 = vadd.f32 %v2865, %v2983
    %v2992 = vadd.f32 %v2866, %v2984
    %s2993 = sld [smem:[#allocation2 + $0x33]]
    %v2994 = vstv %s2993
    %v2995 = vmul.f32 %v2994, %v2967
    %v2996 = vmul.f32 %v2994, %v2968
    %v2997 = vmul.f32 %v2994, %v2969
    %v2998 = vmul.f32 %v2994, %v2970
    %v2999 = vmul.f32 %v2994, %v2971
    %v3000 = vmul.f32 %v2994, %v2972
    %v3001 = vmul.f32 %v2994, %v2973
    %v3002 = vmul.f32 %v2994, %v2974
    %v3003 = vadd.f32 %v2909, %v2995
    %v3004 = vadd.f32 %v2910, %v2996
    %v3005 = vadd.f32 %v2911, %v2997
    %v3006 = vadd.f32 %v2912, %v2998
    %v3007 = vadd.f32 %v2913, %v2999
    %v3008 = vadd.f32 %v2914, %v3000
    %v3009 = vadd.f32 %v2915, %v3001
    %v3010 = vadd.f32 %v2916, %v3002
    %s3011 = sld [smem:[#allocation2 + $0x4e]]
    %v3012 = vstv %s3011
    %v3013 = vmul.f32 %v3012, %v2967
    %v3014 = vmul.f32 %v3012, %v2968
    %v3015 = vmul.f32 %v3012, %v2969
    %v3016 = vmul.f32 %v3012, %v2970
    %v3017 = vmul.f32 %v3012, %v2971
    %v3018 = vmul.f32 %v3012, %v2972
    %v3019 = vmul.f32 %v3012, %v2973
    %v3020 = vmul.f32 %v3012, %v2974
    %v3021 = vadd.f32 %v2959, %v3013
    %v3022 = vadd.f32 %v2960, %v3014
    %v3023 = vadd.f32 %v2961, %v3015
    %v3024 = vadd.f32 %v2962, %v3016
    %v3025 = vadd.f32 %v2963, %v3017
    %v3026 = vadd.f32 %v2964, %v3018
    %v3027 = vadd.f32 %v2965, %v3019
    %v3028 = vadd.f32 %v2966, %v3020
    %s3029 = sld [smem:[#allocation2 + $0x19]]
    %v3030 = vstv %s3029
    %v3031 = vmul.f32 %v3030, %v2967
    %v3032 = vmul.f32 %v3030, %v2968
    %v3033 = vmul.f32 %v3030, %v2969
    %v3034 = vmul.f32 %v3030, %v2970
    %v3035 = vmul.f32 %v3030, %v2971
    %v3036 = vmul.f32 %v3030, %v2972
    %v3037 = vmul.f32 %v3030, %v2973
    %v3038 = vmul.f32 %v3030, %v2974
    %3047 = vrot.lane.b32.xlu0 %v3031, 127
    %v3048 = vpop.permute.xlu0 %3047
    %3049 = vrot.lane.b32.xlu0 %v3032, 127
    %v3050 = vpop.permute.xlu0 %3049
    %3051 = vrot.lane.b32.xlu0 %v3033, 127
    %v3052 = vpop.permute.xlu0 %3051
    %3053 = vrot.lane.b32.xlu0 %v3034, 127
    %v3054 = vpop.permute.xlu0 %3053
    %3055 = vrot.lane.b32.xlu0 %v3035, 127
    %v3056 = vpop.permute.xlu0 %3055
    %3057 = vrot.lane.b32.xlu0 %v3036, 127
    %v3058 = vpop.permute.xlu0 %3057
    %3059 = vrot.lane.b32.xlu0 %v3037, 127
    %v3060 = vpop.permute.xlu0 %3059
    %3061 = vrot.lane.b32.xlu0 %v3038, 127
    %v3062 = vpop.permute.xlu0 %3061
    %v3071 = vadd.f32 %v2985, %v3048
    %v3072 = vadd.f32 %v2986, %v3050
    %v3073 = vadd.f32 %v2987, %v3052
    %v3074 = vadd.f32 %v2988, %v3054
    %v3075 = vadd.f32 %v2989, %v3056
    %v3076 = vadd.f32 %v2990, %v3058
    %v3077 = vadd.f32 %v2991, %v3060
    %v3078 = vadd.f32 %v2992, %v3062
    %s3079 = sld [smem:[#allocation2 + $0x34]]
    %v3080 = vstv %s3079
    %v3081 = vmul.f32 %v3080, %v2967
    %v3082 = vmul.f32 %v3080, %v2968
    %v3083 = vmul.f32 %v3080, %v2969
    %v3084 = vmul.f32 %v3080, %v2970
    %v3085 = vmul.f32 %v3080, %v2971
    %v3086 = vmul.f32 %v3080, %v2972
    %v3087 = vmul.f32 %v3080, %v2973
    %v3088 = vmul.f32 %v3080, %v2974
    %3097 = vrot.lane.b32.xlu0 %v3081, 127
    %v3098 = vpop.permute.xlu0 %3097
    %3099 = vrot.lane.b32.xlu0 %v3082, 127
    %v3100 = vpop.permute.xlu0 %3099
    %3101 = vrot.lane.b32.xlu0 %v3083, 127
    %v3102 = vpop.permute.xlu0 %3101
    %3103 = vrot.lane.b32.xlu0 %v3084, 127
    %v3104 = vpop.permute.xlu0 %3103
    %3105 = vrot.lane.b32.xlu0 %v3085, 127
    %v3106 = vpop.permute.xlu0 %3105
    %3107 = vrot.lane.b32.xlu0 %v3086, 127
    %v3108 = vpop.permute.xlu0 %3107
    %3109 = vrot.lane.b32.xlu0 %v3087, 127
    %v3110 = vpop.permute.xlu0 %3109
    %3111 = vrot.lane.b32.xlu0 %v3088, 127
    %v3112 = vpop.permute.xlu0 %3111
    %v3121 = vadd.f32 %v3003, %v3098
    %v3122 = vadd.f32 %v3004, %v3100
    %v3123 = vadd.f32 %v3005, %v3102
    %v3124 = vadd.f32 %v3006, %v3104
    %v3125 = vadd.f32 %v3007, %v3106
    %v3126 = vadd.f32 %v3008, %v3108
    %v3127 = vadd.f32 %v3009, %v3110
    %v3128 = vadd.f32 %v3010, %v3112
    %s3129 = sld [smem:[#allocation2 + $0x4f]]
    %v3130 = vstv %s3129
    %v3131 = vmul.f32 %v3130, %v2967
    %v3132 = vmul.f32 %v3130, %v2968
    %v3133 = vmul.f32 %v3130, %v2969
    %v3134 = vmul.f32 %v3130, %v2970
    %v3135 = vmul.f32 %v3130, %v2971
    %v3136 = vmul.f32 %v3130, %v2972
    %v3137 = vmul.f32 %v3130, %v2973
    %v3138 = vmul.f32 %v3130, %v2974
    %3147 = vrot.lane.b32.xlu0 %v3131, 127
    %v3148 = vpop.permute.xlu0 %3147
    %3149 = vrot.lane.b32.xlu0 %v3132, 127
    %v3150 = vpop.permute.xlu0 %3149
    %3151 = vrot.lane.b32.xlu0 %v3133, 127
    %v3152 = vpop.permute.xlu0 %3151
    %3153 = vrot.lane.b32.xlu0 %v3134, 127
    %v3154 = vpop.permute.xlu0 %3153
    %3155 = vrot.lane.b32.xlu0 %v3135, 127
    %v3156 = vpop.permute.xlu0 %3155
    %3157 = vrot.lane.b32.xlu0 %v3136, 127
    %v3158 = vpop.permute.xlu0 %3157
    %3159 = vrot.lane.b32.xlu0 %v3137, 127
    %v3160 = vpop.permute.xlu0 %3159
    %3161 = vrot.lane.b32.xlu0 %v3138, 127
    %v3162 = vpop.permute.xlu0 %3161
    %v3171 = vadd.f32 %v3021, %v3148
    %v3172 = vadd.f32 %v3022, %v3150
    %v3173 = vadd.f32 %v3023, %v3152
    %v3174 = vadd.f32 %v3024, %v3154
    %v3175 = vadd.f32 %v3025, %v3156
    %v3176 = vadd.f32 %v3026, %v3158
    %v3177 = vadd.f32 %v3027, %v3160
    %v3178 = vadd.f32 %v3028, %v3162
    %s3179 = sld [smem:[#allocation2 + $0x1a]]
    %v3180 = vstv %s3179
    %v3181 = vmul.f32 %v3180, %v2967
    %v3182 = vmul.f32 %v3180, %v2968
    %v3183 = vmul.f32 %v3180, %v2969
    %v3184 = vmul.f32 %v3180, %v2970
    %v3185 = vmul.f32 %v3180, %v2971
    %v3186 = vmul.f32 %v3180, %v2972
    %v3187 = vmul.f32 %v3180, %v2973
    %v3188 = vmul.f32 %v3180, %v2974
    %3197 = vrot.lane.b32.xlu0 %v3181, 126
    %v3198 = vpop.permute.xlu0 %3197
    %3199 = vrot.lane.b32.xlu0 %v3182, 126
    %v3200 = vpop.permute.xlu0 %3199
    %3201 = vrot.lane.b32.xlu0 %v3183, 126
    %v3202 = vpop.permute.xlu0 %3201
    %3203 = vrot.lane.b32.xlu0 %v3184, 126
    %v3204 = vpop.permute.xlu0 %3203
    %3205 = vrot.lane.b32.xlu0 %v3185, 126
    %v3206 = vpop.permute.xlu0 %3205
    %3207 = vrot.lane.b32.xlu0 %v3186, 126
    %v3208 = vpop.permute.xlu0 %3207
    %3209 = vrot.lane.b32.xlu0 %v3187, 126
    %v3210 = vpop.permute.xlu0 %3209
    %3211 = vrot.lane.b32.xlu0 %v3188, 126
    %v3212 = vpop.permute.xlu0 %3211
    %v3221 = vadd.f32 %v3071, %v3198
    %v3222 = vadd.f32 %v3072, %v3200
    %v3223 = vadd.f32 %v3073, %v3202
    %v3224 = vadd.f32 %v3074, %v3204
    %v3225 = vadd.f32 %v3075, %v3206
    %v3226 = vadd.f32 %v3076, %v3208
    %v3227 = vadd.f32 %v3077, %v3210
    %v3228 = vadd.f32 %v3078, %v3212
    %s3229 = sld [smem:[#allocation2 + $0x35]]
    %v3230 = vstv %s3229
    %v3231 = vmul.f32 %v3230, %v2967
    %v3232 = vmul.f32 %v3230, %v2968
    %v3233 = vmul.f32 %v3230, %v2969
    %v3234 = vmul.f32 %v3230, %v2970
    %v3235 = vmul.f32 %v3230, %v2971
    %v3236 = vmul.f32 %v3230, %v2972
    %v3237 = vmul.f32 %v3230, %v2973
    %v3238 = vmul.f32 %v3230, %v2974
    %3247 = vrot.lane.b32.xlu0 %v3231, 126
    %v3248 = vpop.permute.xlu0 %3247
    %3249 = vrot.lane.b32.xlu0 %v3232, 126
    %v3250 = vpop.permute.xlu0 %3249
    %3251 = vrot.lane.b32.xlu0 %v3233, 126
    %v3252 = vpop.permute.xlu0 %3251
    %3253 = vrot.lane.b32.xlu0 %v3234, 126
    %v3254 = vpop.permute.xlu0 %3253
    %3255 = vrot.lane.b32.xlu0 %v3235, 126
    %v3256 = vpop.permute.xlu0 %3255
    %3257 = vrot.lane.b32.xlu0 %v3236, 126
    %v3258 = vpop.permute.xlu0 %3257
    %3259 = vrot.lane.b32.xlu0 %v3237, 126
    %v3260 = vpop.permute.xlu0 %3259
    %3261 = vrot.lane.b32.xlu0 %v3238, 126
    %v3262 = vpop.permute.xlu0 %3261
    %v3271 = vadd.f32 %v3121, %v3248
    %v3272 = vadd.f32 %v3122, %v3250
    %v3273 = vadd.f32 %v3123, %v3252
    %v3274 = vadd.f32 %v3124, %v3254
    %v3275 = vadd.f32 %v3125, %v3256
    %v3276 = vadd.f32 %v3126, %v3258
    %v3277 = vadd.f32 %v3127, %v3260
    %v3278 = vadd.f32 %v3128, %v3262
    %s3279 = sld [smem:[#allocation2 + $0x50]]
    %v3280 = vstv %s3279
    %v3281 = vmul.f32 %v3280, %v2967
    %v3282 = vmul.f32 %v3280, %v2968
    %v3283 = vmul.f32 %v3280, %v2969
    %v3284 = vmul.f32 %v3280, %v2970
    %v3285 = vmul.f32 %v3280, %v2971
    %v3286 = vmul.f32 %v3280, %v2972
    %v3287 = vmul.f32 %v3280, %v2973
    %v3288 = vmul.f32 %v3280, %v2974
    %3297 = vrot.lane.b32.xlu0 %v3281, 126
    %v3298 = vpop.permute.xlu0 %3297
    %3299 = vrot.lane.b32.xlu0 %v3282, 126
    %v3300 = vpop.permute.xlu0 %3299
    %3301 = vrot.lane.b32.xlu0 %v3283, 126
    %v3302 = vpop.permute.xlu0 %3301
    %3303 = vrot.lane.b32.xlu0 %v3284, 126
    %v3304 = vpop.permute.xlu0 %3303
    %3305 = vrot.lane.b32.xlu0 %v3285, 126
    %v3306 = vpop.permute.xlu0 %3305
    %3307 = vrot.lane.b32.xlu0 %v3286, 126
    %v3308 = vpop.permute.xlu0 %3307
    %3309 = vrot.lane.b32.xlu0 %v3287, 126
    %v3310 = vpop.permute.xlu0 %3309
    %3311 = vrot.lane.b32.xlu0 %v3288, 126
    %v3312 = vpop.permute.xlu0 %3311
    %v3321 = vadd.f32 %v3171, %v3298
    %v3322 = vadd.f32 %v3172, %v3300
    %v3323 = vadd.f32 %v3173, %v3302
    %v3324 = vadd.f32 %v3174, %v3304
    %v3325 = vadd.f32 %v3175, %v3306
    %v3326 = vadd.f32 %v3176, %v3308
    %v3327 = vadd.f32 %v3177, %v3310
    %v3328 = vadd.f32 %v3178, %v3312
    %s3329 = sld [smem:[#allocation5]]
    %v3330 = vstv %s3329
    %v3331 = vadd.f32 %v3221, %v3330
    %v3332 = vadd.f32 %v3222, %v3330
    %v3333 = vadd.f32 %v3223, %v3330
    %v3334 = vadd.f32 %v3224, %v3330
    %v3335 = vadd.f32 %v3225, %v3330
    %v3336 = vadd.f32 %v3226, %v3330
    %v3337 = vadd.f32 %v3227, %v3330
    %v3338 = vadd.f32 %v3228, %v3330
    %v3339 = vmax.f32 %v3331, 0.0
    %v3340 = vmax.f32 %v3332, 0.0
    %v3341 = vmax.f32 %v3333, 0.0
    %v3342 = vmax.f32 %v3334, 0.0
    %v3343 = vmax.f32 %v3335, 0.0
    %v3344 = vmax.f32 %v3336, 0.0
    %v3345 = vmax.f32 %v3337, 0.0
    %v3346 = vmax.f32 %v3338, 0.0
    %s3347 = sld [smem:[#allocation7]]
    %v3348 = vstv %s3347
    %v3349 = vmul.f32 %v3348, %v3339
    %v3350 = vmul.f32 %v3348, %v3340
    %v3351 = vmul.f32 %v3348, %v3341
    %v3352 = vmul.f32 %v3348, %v3342
    %v3353 = vmul.f32 %v3348, %v3343
    %v3354 = vmul.f32 %v3348, %v3344
    %v3355 = vmul.f32 %v3348, %v3345
    %v3356 = vmul.f32 %v3348, %v3346
    %s3357 = sld [smem:[#allocation7 + $0x3]]
    %v3358 = vstv %s3357
    %v3359 = vmul.f32 %v3358, %v3339
    %v3360 = vmul.f32 %v3358, %v3340
    %v3361 = vmul.f32 %v3358, %v3341
    %v3362 = vmul.f32 %v3358, %v3342
    %v3363 = vmul.f32 %v3358, %v3343
    %v3364 = vmul.f32 %v3358, %v3344
    %v3365 = vmul.f32 %v3358, %v3345
    %v3366 = vmul.f32 %v3358, %v3346
    %s3367 = sld [smem:[#allocation7 + $0x6]]
    %v3368 = vstv %s3367
    %v3369 = vmul.f32 %v3368, %v3339
    %v3370 = vmul.f32 %v3368, %v3340
    %v3371 = vmul.f32 %v3368, %v3341
    %v3372 = vmul.f32 %v3368, %v3342
    %v3373 = vmul.f32 %v3368, %v3343
    %v3374 = vmul.f32 %v3368, %v3344
    %v3375 = vmul.f32 %v3368, %v3345
    %v3376 = vmul.f32 %v3368, %v3346
    %s3377 = sld [smem:[#allocation5 + $0x1]]
    %v3378 = vstv %s3377
    %v3379 = vadd.f32 %v3271, %v3378
    %v3380 = vadd.f32 %v3272, %v3378
    %v3381 = vadd.f32 %v3273, %v3378
    %v3382 = vadd.f32 %v3274, %v3378
    %v3383 = vadd.f32 %v3275, %v3378
    %v3384 = vadd.f32 %v3276, %v3378
    %v3385 = vadd.f32 %v3277, %v3378
    %v3386 = vadd.f32 %v3278, %v3378
    %v3387 = vmax.f32 %v3379, 0.0
    %v3388 = vmax.f32 %v3380, 0.0
    %v3389 = vmax.f32 %v3381, 0.0
    %v3390 = vmax.f32 %v3382, 0.0
    %v3391 = vmax.f32 %v3383, 0.0
    %v3392 = vmax.f32 %v3384, 0.0
    %v3393 = vmax.f32 %v3385, 0.0
    %v3394 = vmax.f32 %v3386, 0.0
    %s3395 = sld [smem:[#allocation7 + $0x1]]
    %v3396 = vstv %s3395
    %v3397 = vmul.f32 %v3396, %v3387
    %v3398 = vmul.f32 %v3396, %v3388
    %v3399 = vmul.f32 %v3396, %v3389
    %v3400 = vmul.f32 %v3396, %v3390
    %v3401 = vmul.f32 %v3396, %v3391
    %v3402 = vmul.f32 %v3396, %v3392
    %v3403 = vmul.f32 %v3396, %v3393
    %v3404 = vmul.f32 %v3396, %v3394
    %v3405 = vadd.f32 %v3349, %v3397
    %v3406 = vadd.f32 %v3350, %v3398
    %v3407 = vadd.f32 %v3351, %v3399
    %v3408 = vadd.f32 %v3352, %v3400
    %v3409 = vadd.f32 %v3353, %v3401
    %v3410 = vadd.f32 %v3354, %v3402
    %v3411 = vadd.f32 %v3355, %v3403
    %v3412 = vadd.f32 %v3356, %v3404
    %s3413 = sld [smem:[#allocation7 + $0x4]]
    %v3414 = vstv %s3413
    %v3415 = vmul.f32 %v3414, %v3387
    %v3416 = vmul.f32 %v3414, %v3388
    %v3417 = vmul.f32 %v3414, %v3389
    %v3418 = vmul.f32 %v3414, %v3390
    %v3419 = vmul.f32 %v3414, %v3391
    %v3420 = vmul.f32 %v3414, %v3392
    %v3421 = vmul.f32 %v3414, %v3393
    %v3422 = vmul.f32 %v3414, %v3394
    %v3423 = vadd.f32 %v3359, %v3415
    %v3424 = vadd.f32 %v3360, %v3416
    %v3425 = vadd.f32 %v3361, %v3417
    %v3426 = vadd.f32 %v3362, %v3418
    %v3427 = vadd.f32 %v3363, %v3419
    %v3428 = vadd.f32 %v3364, %v3420
    %v3429 = vadd.f32 %v3365, %v3421
    %v3430 = vadd.f32 %v3366, %v3422
    %s3431 = sld [smem:[#allocation7 + $0x7]]
    %v3432 = vstv %s3431
    %v3433 = vmul.f32 %v3432, %v3387
    %v3434 = vmul.f32 %v3432, %v3388
    %v3435 = vmul.f32 %v3432, %v3389
    %v3436 = vmul.f32 %v3432, %v3390
    %v3437 = vmul.f32 %v3432, %v3391
    %v3438 = vmul.f32 %v3432, %v3392
    %v3439 = vmul.f32 %v3432, %v3393
    %v3440 = vmul.f32 %v3432, %v3394
    %v3441 = vadd.f32 %v3369, %v3433
    %v3442 = vadd.f32 %v3370, %v3434
    %v3443 = vadd.f32 %v3371, %v3435
    %v3444 = vadd.f32 %v3372, %v3436
    %v3445 = vadd.f32 %v3373, %v3437
    %v3446 = vadd.f32 %v3374, %v3438
    %v3447 = vadd.f32 %v3375, %v3439
    %v3448 = vadd.f32 %v3376, %v3440
    %s3449 = sld [smem:[#allocation5 + $0x2]]
    %v3450 = vstv %s3449
    %v3451 = vadd.f32 %v3321, %v3450
    %v3452 = vadd.f32 %v3322, %v3450
    %v3453 = vadd.f32 %v3323, %v3450
    %v3454 = vadd.f32 %v3324, %v3450
    %v3455 = vadd.f32 %v3325, %v3450
    %v3456 = vadd.f32 %v3326, %v3450
    %v3457 = vadd.f32 %v3327, %v3450
    %v3458 = vadd.f32 %v3328, %v3450
    %v3459 = vmax.f32 %v3451, 0.0
    %v3460 = vmax.f32 %v3452, 0.0
    %v3461 = vmax.f32 %v3453, 0.0
    %v3462 = vmax.f32 %v3454, 0.0
    %v3463 = vmax.f32 %v3455, 0.0
    %v3464 = vmax.f32 %v3456, 0.0
    %v3465 = vmax.f32 %v3457, 0.0
    %v3466 = vmax.f32 %v3458, 0.0
    %s3467 = sld [smem:[#allocation7 + $0x2]]
    %v3468 = vstv %s3467
    %v3469 = vmul.f32 %v3468, %v3459
    %v3470 = vmul.f32 %v3468, %v3460
    %v3471 = vmul.f32 %v3468, %v3461
    %v3472 = vmul.f32 %v3468, %v3462
    %v3473 = vmul.f32 %v3468, %v3463
    %v3474 = vmul.f32 %v3468, %v3464
    %v3475 = vmul.f32 %v3468, %v3465
    %v3476 = vmul.f32 %v3468, %v3466
    %v3477 = vadd.f32 %v3405, %v3469
    %v3478 = vadd.f32 %v3406, %v3470
    %v3479 = vadd.f32 %v3407, %v3471
    %v3480 = vadd.f32 %v3408, %v3472
    %v3481 = vadd.f32 %v3409, %v3473
    %v3482 = vadd.f32 %v3410, %v3474
    %v3483 = vadd.f32 %v3411, %v3475
    %v3484 = vadd.f32 %v3412, %v3476
    %s3485 = sld [smem:[#allocation7 + $0x5]]
    %v3486 = vstv %s3485
    %v3487 = vmul.f32 %v3486, %v3459
    %v3488 = vmul.f32 %v3486, %v3460
    %v3489 = vmul.f32 %v3486, %v3461
    %v3490 = vmul.f32 %v3486, %v3462
    %v3491 = vmul.f32 %v3486, %v3463
    %v3492 = vmul.f32 %v3486, %v3464
    %v3493 = vmul.f32 %v3486, %v3465
    %v3494 = vmul.f32 %v3486, %v3466
    %v3495 = vadd.f32 %v3423, %v3487
    %v3496 = vadd.f32 %v3424, %v3488
    %v3497 = vadd.f32 %v3425, %v3489
    %v3498 = vadd.f32 %v3426, %v3490
    %v3499 = vadd.f32 %v3427, %v3491
    %v3500 = vadd.f32 %v3428, %v3492
    %v3501 = vadd.f32 %v3429, %v3493
    %v3502 = vadd.f32 %v3430, %v3494
    %s3503 = sld [smem:[#allocation7 + $0x8]]
    %v3504 = vstv %s3503
    %v3505 = vmul.f32 %v3504, %v3459
    %v3506 = vmul.f32 %v3504, %v3460
    %v3507 = vmul.f32 %v3504, %v3461
    %v3508 = vmul.f32 %v3504, %v3462
    %v3509 = vmul.f32 %v3504, %v3463
    %v3510 = vmul.f32 %v3504, %v3464
    %v3511 = vmul.f32 %v3504, %v3465
    %v3512 = vmul.f32 %v3504, %v3466
    %v3513 = vadd.f32 %v3441, %v3505
    %v3514 = vadd.f32 %v3442, %v3506
    %v3515 = vadd.f32 %v3443, %v3507
    %v3516 = vadd.f32 %v3444, %v3508
    %v3517 = vadd.f32 %v3445, %v3509
    %v3518 = vadd.f32 %v3446, %v3510
    %v3519 = vadd.f32 %v3447, %v3511
    %v3520 = vadd.f32 %v3448, %v3512
    %s3521 = sld [smem:[#allocation8]]
    %v3522 = vstv %s3521
    %v3523 = vadd.f32 %v3477, %v3522
    %v3524 = vadd.f32 %v3478, %v3522
    %v3525 = vadd.f32 %v3479, %v3522
    %v3526 = vadd.f32 %v3480, %v3522
    %v3527 = vadd.f32 %v3481, %v3522
    %v3528 = vadd.f32 %v3482, %v3522
    %v3529 = vadd.f32 %v3483, %v3522
    %v3530 = vadd.f32 %v3484, %v3522
    %vm3531 = vcmask 523264
    %3532 = vst.msk [vmem:[#allocation10] sm:$0xff] %vm3531, %v3523
    %3533 = vst.msk [vmem:[#allocation10 + $0x8] sm:$0xff] %vm3531, %v3524
    %3534 = vst.msk [vmem:[#allocation10 + $0x10] sm:$0xff] %vm3531, %v3525
    %3535 = vst.msk [vmem:[#allocation10 + $0x18] sm:$0xff] %vm3531, %v3526
    %3536 = vst.msk [vmem:[#allocation10 + $0x20] sm:$0xff] %vm3531, %v3527
    %3537 = vst.msk [vmem:[#allocation10 + $0x28] sm:$0xff] %vm3531, %v3528
    %3538 = vst.msk [vmem:[#allocation10 + $0x30] sm:$0xff] %vm3531, %v3529
    %3539 = vst.msk [vmem:[#allocation10 + $0x38] sm:$0xff] %vm3531, %v3530
    %s3540 = sld [smem:[#allocation8 + $0x1]]
    %v3541 = vstv %s3540
    %v3542 = vadd.f32 %v3495, %v3541
    %v3543 = vadd.f32 %v3496, %v3541
    %v3544 = vadd.f32 %v3497, %v3541
    %v3545 = vadd.f32 %v3498, %v3541
    %v3546 = vadd.f32 %v3499, %v3541
    %v3547 = vadd.f32 %v3500, %v3541
    %v3548 = vadd.f32 %v3501, %v3541
    %v3549 = vadd.f32 %v3502, %v3541
    %s3550 = scalar_lea.vmem [#allocation10], 64
    %3551 = vst.msk [vmem:[%s3550] sm:$0xff] %vm3531, %v3542
    %3552 = vst.msk [vmem:[%s3550 + $0x8] sm:$0xff] %vm3531, %v3543
    %3553 = vst.msk [vmem:[%s3550 + $0x10] sm:$0xff] %vm3531, %v3544
    %3554 = vst.msk [vmem:[%s3550 + $0x18] sm:$0xff] %vm3531, %v3545
    %3555 = vst.msk [vmem:[%s3550 + $0x20] sm:$0xff] %vm3531, %v3546
    %3556 = vst.msk [vmem:[%s3550 + $0x28] sm:$0xff] %vm3531, %v3547
    %3557 = vst.msk [vmem:[%s3550 + $0x30] sm:$0xff] %vm3531, %v3548
    %3558 = vst.msk [vmem:[%s3550 + $0x38] sm:$0xff] %vm3531, %v3549
    %s3559 = sld [smem:[#allocation8 + $0x2]]
    %v3560 = vstv %s3559
    %v3561 = vadd.f32 %v3513, %v3560
    %v3562 = vadd.f32 %v3514, %v3560
    %v3563 = vadd.f32 %v3515, %v3560
    %v3564 = vadd.f32 %v3516, %v3560
    %v3565 = vadd.f32 %v3517, %v3560
    %v3566 = vadd.f32 %v3518, %v3560
    %v3567 = vadd.f32 %v3519, %v3560
    %v3568 = vadd.f32 %v3520, %v3560
    %s3569 = scalar_lea.vmem [#allocation10], 128
    %3570 = vst.msk [vmem:[%s3569] sm:$0xff] %vm3531, %v3561
    %3571 = vst.msk [vmem:[%s3569 + $0x8] sm:$0xff] %vm3531, %v3562
    %3572 = vst.msk [vmem:[%s3569 + $0x10] sm:$0xff] %vm3531, %v3563
    %3573 = vst.msk [vmem:[%s3569 + $0x18] sm:$0xff] %vm3531, %v3564
    %3574 = vst.msk [vmem:[%s3569 + $0x20] sm:$0xff] %vm3531, %v3565
    %3575 = vst.msk [vmem:[%s3569 + $0x28] sm:$0xff] %vm3531, %v3566
    %3576 = vst.msk [vmem:[%s3569 + $0x30] sm:$0xff] %vm3531, %v3567
    %3577 = vst.msk [vmem:[%s3569 + $0x38] sm:$0xff] %vm3531, %v3568
    // Predicated region
    $region38: #{tpu_custom_call.1} parent=1 // pred_check
      _
    $region39: #{tpu_custom_call.1} parent=1 // pred_check_branch
      %3579 = sbr.rel (0) target = $region41
    $region40: #{tpu_custom_call.1} parent=1 // pred_region
      %3581 = vsyncadd [#allocation3], 0
      %s3582 = sshll.u32 [#allocation10], 4
      %s3583 = int_to_ptr.vmem [resolvable:$true] %s3582
      %s3584 = sshll.u32 %s5, 4
      %s3585 = int_to_ptr.hbm [resolvable:$true] %s3584
      %3590 = dma.vmem_to_hbm [thread:$0]  %s3583, 3072, %s3585, [#allocation3], 128, 128, 8
    $region41: #{tpu_custom_call.1} parent=1 // pred_fallthru
      _
    // Predicated region
    $region42: #{tpu_custom_call.1} parent=1 // pred_check
      _
    $region43: #{tpu_custom_call.1} parent=1 // pred_check_branch
      %3592 = sbr.rel (0) target = $region45
    $region44: #{tpu_custom_call.1} parent=1 // pred_region
      %3594 = dma.done [#allocation3], 3072
    $region45: #{tpu_custom_call.1} parent=1 // pred_fallthru
      _
    %3595 = vsyncpa [#allocation3], 1
    %3596 = vsyncpa [#allocation4], 1
    %3597 = vsyncpa [#allocation6], 1
    %3598 = vsyncpa [#allocation9], 1

</llo_original>
